<compile_context>
chip_gen: v7x
topology: tpu7x:2x2x1
jax: 0.10.0
libtpu: 0.0.40
codegen_flags: <defaults>
</compile_context>

<pallas_src>
import functools

import jax
import jax.numpy as jnp
from jax.experimental import pallas as pl
from jax.experimental.pallas import tpu as pltpu

LANE = 128


def _round_up(x, m):
    return (x + m - 1) // m * m


# ----------------------------------------------------------------------------
# Fused whole-network kernel (single invocation, no grid):
#   conv (1 matmul) + ReLU -> n x [LN -> MHSA -> +res ; LN -> FFN -> +res]
#   -> mean-pool over time -> mlp Linear.
# All weights are VMEM-resident; the activation h lives in registers/VMEM values.
# ----------------------------------------------------------------------------
def _network_kernel(
    x_ref, cw_ref, cb_ref,
    ln1_ref, wqkv_ref, bqkv_ref, wo_ref, bo_ref,
    ln2_ref, w1_ref, b1_ref, w2_ref, b2_ref,
    mlpw_ref, mlpb_ref,
    emb_ref, out_ref,
    *, B, T, heads, D, n_layers, eps,
):
    BT = B * T
    DP = cw_ref.shape[1]           # padded residual width (multiple of 128)
    HP = LANE                      # per-head lane slot = one full vreg width
    HPT = heads * HP               # total Q (or K or V) width
    Dh = D // heads                # real per-head width
    inv_d = 1.0 / float(D)
    scale = 1.0 / float(Dh) ** 0.5

    def b16(t):
        return t.astype(jnp.bfloat16)

    def mm(a, w):                  # activation cast once; weight already bf16; f32 accum
        return jnp.dot(b16(a), w, preferred_element_type=jnp.float32)

    # Real-lane mask for padding-aware LayerNorm statistics (pad lanes of h are zero by
    # construction of the padded weights/biases; gamma/beta pads are zero so pads stay 0).
    lane_mask = (jax.lax.broadcasted_iota(jnp.int32, (1, DP), 1) < D).astype(jnp.float32)

    def layernorm(x, gb):
        gamma = gb[0:1, :]
        beta = gb[1:2, :]
        mean = jnp.sum(x, axis=-1, keepdims=True) * inv_d
        xc = x - mean
        var = jnp.sum(xc * xc * lane_mask, axis=-1, keepdims=True) * inv_d
        return xc * jax.lax.rsqrt(var + eps) * gamma + beta

    # ---- Conv1d('same') frontend as ONE matmul on the pre-built bf16 im2col slab ----
    h = jnp.maximum(
        jnp.dot(x_ref[...], cw_ref[...], preferred_element_type=jnp.float32) + cb_ref[...],
        0.0)                                                    # (BT, DP) f32

    # ---- Transformer layers: static unroll, all weights resident in VMEM ----
    for l in range(n_layers):
        # MHSA sublayer
        hn = layernorm(h, ln1_ref[l])
        qkv = mm(hn, wqkv_ref[l]) + bqkv_ref[l]                 # (BT, 3*HPT)
        q = qkv[:, 0:HPT]
        k = qkv[:, HPT:2 * HPT]
        v = qkv[:, 2 * HPT:3 * HPT]

        head_outs = []
        for hd in range(heads):                                 # whole-vreg head slots
            sl = slice(hd * HP, (hd + 1) * HP)
            qh = q[:, sl].reshape(B, T, HP)
            kh = k[:, sl].reshape(B, T, HP)
            vh = v[:, sl].reshape(B, T, HP)
            s = jnp.einsum("bqd,bkd->bqk", b16(qh), b16(kh),
                           preferred_element_type=jnp.float32) * scale
            p = jnp.exp(s - jnp.max(s, axis=-1, keepdims=True))
            p = p / jnp.sum(p, axis=-1, keepdims=True)          # exact softmax
            head_outs.append(
                jnp.einsum("bqk,bkd->bqd", b16(p), b16(vh),
                           preferred_element_type=jnp.float32).reshape(BT, HP))
        attn = jnp.concatenate(head_outs, axis=-1)              # 128-aligned lane concat
        h = h + mm(attn, wo_ref[l]) + bo_ref[l]                 # residual (dropout = id)

        # FFN sublayer
        hn = layernorm(h, ln2_ref[l])
        ff = jnp.maximum(mm(hn, w1_ref[l]) + b1_ref[l], 0.0)
        h = h + mm(ff, w2_ref[l]) + b2_ref[l]

    # ---- mean-pool over time + mlp Linear (fused epilogue) ----
    emb = jnp.mean(h.reshape(B, T, DP), axis=1)                 # (B, DP)
    emb_ref[...] = emb
    out_ref[...] = mm(emb, mlpw_ref[...]) + mlpb_ref[...]


# ----------------------------------------------------------------------------
# Parameter construction (original, unpadded shapes — what the PyTorch module has).
# ----------------------------------------------------------------------------
def init_params(key, *, n_mel, n, d_model, heads, kernel_size, embedding_size):
    def nrm(k, shape, scale):
        return scale * jax.random.normal(k, shape, dtype=jnp.float32)

    keys = iter(jax.random.split(key, 8 + 16 * n))
    p = {}
    p["conv_w"] = nrm(next(keys), (kernel_size * n_mel, d_model), 0.05)  # (K outer, C inner)
    p["conv_b"] = jnp.zeros((d_model,), jnp.float32)

    d_ff = 4 * d_model
    layers = []
    for _ in range(n):
        layers.append({
            "ln1_g": jnp.ones((d_model,), jnp.float32),
            "ln1_b": jnp.zeros((d_model,), jnp.float32),
            "wq": nrm(next(keys), (d_model, d_model), 0.05),
            "bq": jnp.zeros((d_model,), jnp.float32),
            "wk": nrm(next(keys), (d_model, d_model), 0.05),
            "bk": jnp.zeros((d_model,), jnp.float32),
            "wv": nrm(next(keys), (d_model, d_model), 0.05),
            "bv": jnp.zeros((d_model,), jnp.float32),
            "wo": nrm(next(keys), (d_model, d_model), 0.05),
            "bo": jnp.zeros((d_model,), jnp.float32),
            "ln2_g": jnp.ones((d_model,), jnp.float32),
            "ln2_b": jnp.zeros((d_model,), jnp.float32),
            "w1": nrm(next(keys), (d_model, d_ff), 0.05),
            "b1": jnp.zeros((d_ff,), jnp.float32),
            "w2": nrm(next(keys), (d_ff, d_model), 0.05),
            "b2": jnp.zeros((d_model,), jnp.float32),
        })
    p["layers"] = layers
    p["mlp_w"] = nrm(next(keys), (d_model, embedding_size), 0.05)
    p["mlp_b"] = jnp.zeros((embedding_size,), jnp.float32)
    return p


# ----------------------------------------------------------------------------
# Zero-pad to lane-dense shapes, place each head in its own 128-lane slot, stack the
# per-layer weights and pre-cast all matmul weights to bf16 (biases / LN stay f32).
# ----------------------------------------------------------------------------
def build_kernel_params(params, *, heads, kernel_size, n_mel, d_model, embedding_size):
    D = d_model
    assert D % heads == 0
    Dh = D // heads
    DP = _round_up(D, LANE)
    HP = LANE                       # whole-vreg per-head slot
    HPT = heads * HP
    d_ff = params["layers"][0]["w1"].shape[1]
    FP = _round_up(d_ff, LANE)
    E = embedding_size
    EP = _round_up(E, LANE)
    C, K = n_mel, kernel_size
    KCP = _round_up(K * C, LANE)
    f32, bf16 = jnp.float32, jnp.bfloat16

    def pad2(w, r, c):
        return jnp.zeros((r, c), f32).at[: w.shape[0], : w.shape[1]].set(w)

    def vec(b, c):
        return jnp.zeros((1, c), f32).at[0, : b.shape[0]].set(b)

    def qkv_cols(w, b):             # (D,D)/(D,) -> columns laid out per 128-lane head slot
        wo = jnp.zeros((DP, HPT), f32)
        bo = jnp.zeros((1, HPT), f32)
        w3 = w.reshape(D, heads, Dh)
        b2 = b.reshape(heads, Dh)
        for h in range(heads):
            wo = wo.at[:D, h * HP: h * HP + Dh].set(w3[:, h, :])
            bo = bo.at[0, h * HP: h * HP + Dh].set(b2[h])
        return wo, bo

    def out_rows(w):                # (D,D) -> rows laid out per 128-lane head slot
        out = jnp.zeros((HPT, DP), f32)
        w3 = w.reshape(heads, Dh, D)
        for h in range(heads):
            out = out.at[h * HP: h * HP + Dh, :D].set(w3[h])
        return out

    kp = {
        "conv_w": pad2(params["conv_w"], KCP, DP).astype(bf16),
        "conv_b": vec(params["conv_b"], DP),
        "mlp_w": pad2(params["mlp_w"], DP, EP).astype(bf16),
        "mlp_b": vec(params["mlp_b"], EP),
    }
    ln1, wqkv, bqkv, wo, bo, ln2, w1, b1, w2, b2 = ([] for _ in range(10))
    for lp in params["layers"]:
        wq, bq = qkv_cols(lp["wq"], lp["bq"])
        wk, bk = qkv_cols(lp["wk"], lp["bk"])
        wv, bv = qkv_cols(lp["wv"], lp["bv"])
        ln1.append(jnp.stack([vec(lp["ln1_g"], DP)[0], vec(lp["ln1_b"], DP)[0]], 0))
        wqkv.append(jnp.concatenate([wq, wk, wv], axis=1))
        bqkv.append(jnp.concatenate([bq, bk, bv], axis=1))
        wo.append(out_rows(lp["wo"]))
        bo.append(vec(lp["bo"], DP))
        ln2.append(jnp.stack([vec(lp["ln2_g"], DP)[0], vec(lp["ln2_b"], DP)[0]], 0))
        w1.append(pad2(lp["w1"], DP, FP))
        b1.append(vec(lp["b1"], FP))
        w2.append(pad2(lp["w2"], FP, DP))
        b2.append(vec(lp["b2"], DP))
    kp.update({
        "ln1": jnp.stack(ln1),
        "wqkv": jnp.stack(wqkv).astype(bf16),
        "bqkv": jnp.stack(bqkv),
        "wo": jnp.stack(wo).astype(bf16),
        "bo": jnp.stack(bo),
        "ln2": jnp.stack(ln2),
        "w1": jnp.stack(w1).astype(bf16),
        "b1": jnp.stack(b1),
        "w2": jnp.stack(w2).astype(bf16),
        "b2": jnp.stack(b2),
    })
    dims = dict(D=D, DP=DP, HP=HP, FP=FP, E=E, EP=EP, KCP=KCP,
                heads=heads, kernel_size=K, n_mel=C)
    return kp, dims


# ----------------------------------------------------------------------------
# Forward pass: tiny im2col prologue, then ONE pallas_call (no grid — everything fits
# VMEM many times over at these sizes).  At scale one would re-introduce a
# ("parallel","arbitrary") row-tile x layer grid (2 TCs on v7x) with per-layer weight
# streaming and re-derive the VMEM budget (64 MiB on v7x vs 128 MiB on v5e/v6e).
# ----------------------------------------------------------------------------
def network_forward(kparams, x_nct, *, dims, eps, return_embedding=False):
    B, C, T = x_nct.shape
    K, D, DP, HP, FP, E, EP, KCP, heads = (dims[k] for k in
                                           ("kernel_size", "D", "DP", "HP", "FP",
                                            "E", "EP", "KCP", "heads"))
    n_layers = kparams["wqkv"].shape[0]
    BT = B * T
    HPT = heads * HP

    # im2col for Conv1d('same'): (BT, K*C), k-major / channel-minor, zero-padded to KCP
    # lanes and pre-cast to bf16 so the conv is a single lane-dense MXU matmul in-kernel.
    x = jnp.transpose(x_nct, (0, 2, 1))                          # (B, T, C)
    pad = K // 2
    xp = jnp.pad(x, ((0, 0), (pad, pad), (0, 0)))
    patches = jnp.concatenate([xp[:, kk:kk + T, :] for kk in range(K)], axis=-1)
    patches = patches.reshape(BT, K * C)
    x_in = (jnp.zeros((BT, KCP), jnp.float32).at[:, : K * C].set(patches)
            .astype(jnp.bfloat16))

    args = (x_in, kparams["conv_w"], kparams["conv_b"],
            kparams["ln1"], kparams["wqkv"], kparams["bqkv"], kparams["wo"], kparams["bo"],
            kparams["ln2"], kparams["w1"], kparams["b1"], kparams["w2"], kparams["b2"],
            kparams["mlp_w"], kparams["mlp_b"])

    # Advisory cost estimate (lets XLA schedule the im2col prologue around the call).
    mm2 = lambda m, k, n: 2 * m * k * n
    flops = (mm2(BT, KCP, DP) + mm2(B, DP, EP)
             + n_layers * (mm2(BT, DP, 3 * HPT) + heads * 2 * mm2(B * T, HP, T)
                           + mm2(BT, HPT, DP) + mm2(BT, DP, FP) + mm2(BT, FP, DP)))
    transcendentals = n_layers * (heads * B * T * T + 2 * BT)
    bytes_accessed = (sum(int(a.size) * a.dtype.itemsize for a in args)
                      + (B * DP + B * EP) * 4)

    kernel = functools.partial(_network_kernel, B=B, T=T, heads=heads, D=D,
                               n_layers=n_layers, eps=eps)

    emb_p, out_p = pl.pallas_call(
        kernel,
        out_shape=(
            jax.ShapeDtypeStruct((B, DP), jnp.float32),   # encoder embedding (padded)
            jax.ShapeDtypeStruct((B, EP), jnp.float32),   # mlp output (padded)
        ),
        in_specs=[pl.BlockSpec(memory_space=pltpu.MemorySpace.VMEM)] * len(args),
        out_specs=(pl.BlockSpec(memory_space=pltpu.MemorySpace.VMEM),
                   pl.BlockSpec(memory_space=pltpu.MemorySpace.VMEM)),
        cost_estimate=pl.CostEstimate(flops=flops, transcendentals=transcendentals,
                                      bytes_accessed=bytes_accessed),
    )(*args)

    if return_embedding:
        return emb_p[:, :D]
    return out_p[:, :E]


# ----------------------------------------------------------------------------
# Pure-JAX reference (original unpadded params, same bf16-MXU / f32-accumulate math)
# used only to validate the fused kernel.
# ----------------------------------------------------------------------------
def network_forward_ref(params, x_nct, *, heads, kernel_size, eps, return_embedding=False):
    B, C, T = x_nct.shape
    x = jnp.transpose(x_nct, (0, 2, 1))
    pad = kernel_size // 2
    xp = jnp.pad(x, ((0, 0), (pad, pad), (0, 0)))
    patches = jnp.stack([xp[:, t:t + T, :] for t in range(kernel_size)], axis=2)
    patches = patches.reshape(B * T, kernel_size * C)

    def mm(a, w):
        return jnp.dot(a.astype(jnp.bfloat16), w.astype(jnp.bfloat16),
                       preferred_element_type=jnp.float32)

    def ln(x, g, b):
        m = jnp.mean(x, -1, keepdims=True)
        v = jnp.mean((x - m) ** 2, -1, keepdims=True)
        return (x - m) * jax.lax.rsqrt(v + eps) * g + b

    h = jnp.maximum(mm(patches, params["conv_w"]) + params["conv_b"], 0.0)
    D = h.shape[-1]
    Dh = D // heads
    for lp in params["layers"]:
        hn = ln(h, lp["ln1_g"], lp["ln1_b"])
        q = mm(hn, lp["wq"]) + lp["bq"]
        k = mm(hn, lp["wk"]) + lp["bk"]
        v = mm(hn, lp["wv"]) + lp["bv"]

        def sh(t):
            return t.reshape(B, T, heads, Dh).transpose(0, 2, 1, 3)

        s = jnp.einsum("bhqd,bhkd->bhqk", sh(q).astype(jnp.bfloat16),
                       sh(k).astype(jnp.bfloat16),
                       preferred_element_type=jnp.float32) / (Dh ** 0.5)
        p = jax.nn.softmax(s, axis=-1)
        o = jnp.einsum("bhqk,bhkd->bhqd", p.astype(jnp.bfloat16),
                       sh(v).astype(jnp.bfloat16),
                       preferred_element_type=jnp.float32)
        o = o.transpose(0, 2, 1, 3).reshape(B * T, D)
        h = h + mm(o, lp["wo"]) + lp["bo"]
        hn = ln(h, lp["ln2_g"], lp["ln2_b"])
        ff = jnp.maximum(mm(hn, lp["w1"]) + lp["b1"], 0.0)
        h = h + mm(ff, lp["w2"]) + lp["b2"]
    emb = jnp.mean(h.reshape(B, T, D), axis=1)
    if return_embedding:
        return emb
    return mm(emb, params["mlp_w"]) + params["mlp_b"]


# ----------------------------------------------------------------------------
# Driver
# ----------------------------------------------------------------------------
if __name__ == "__main__":
    n_mel_channels = 8
    n = 2
    d_model = 32
    heads = 2
    kernel_size = 3
    eps = 1e-5
    dropout_rate = 0.0       # inference: dropout is identity
    embedding_size = 16
    B, T = 2, 16

    key = jax.random.PRNGKey(0)
    kx, kp = jax.random.split(key)
    x = jax.random.normal(kx, (B, n_mel_channels, T), dtype=jnp.float32)

    params = init_params(kp, n_mel=n_mel_channels, n=n, d_model=d_model,
                         heads=heads, kernel_size=kernel_size,
                         embedding_size=embedding_size)
    kparams, dims = build_kernel_params(
        params, heads=heads, kernel_size=kernel_size, n_mel=n_mel_channels,
        d_model=d_model, embedding_size=embedding_size)

    fwd = jax.jit(functools.partial(network_forward, dims=dims, eps=eps))
    emb_fwd = jax.jit(functools.partial(network_forward, dims=dims, eps=eps,
                                        return_embedding=True))

    out = fwd(kparams, x)
    jax.block_until_ready(out)
    assert out.shape == (B, embedding_size), out.shape

    emb = emb_fwd(kparams, x)
    jax.block_until_ready(emb)
    assert emb.shape == (B, d_model), emb.shape

    # Validate the fused/padded kernel against a pure-JAX reference.
    out_ref = network_forward_ref(params, x, heads=heads, kernel_size=kernel_size, eps=eps)
    emb_ref = network_forward_ref(params, x, heads=heads, kernel_size=kernel_size,
                                  eps=eps, return_embedding=True)
    err_out = float(jnp.max(jnp.abs(out - out_ref)))
    err_emb = float(jnp.max(jnp.abs(emb - emb_ref)))
    assert err_out < 5e-2 and err_emb < 5e-2, (err_out, err_emb)

    print("KERNEL_OK")
</pallas_src>

<mosaic_0001>
module attributes {stable_mosaic.version = 11 : i64} {
  func.func @_network_kernel(%arg0: memref<32x128xbf16, #tpu.memory_space<vmem>>, %arg1: memref<128x128xbf16, #tpu.memory_space<vmem>>, %arg2: memref<1x128xf32, #tpu.memory_space<vmem>>, %arg3: memref<2x2x128xf32, #tpu.memory_space<vmem>>, %arg4: memref<2x128x768xbf16, #tpu.memory_space<vmem>>, %arg5: memref<2x1x768xf32, #tpu.memory_space<vmem>>, %arg6: memref<2x256x128xbf16, #tpu.memory_space<vmem>>, %arg7: memref<2x1x128xf32, #tpu.memory_space<vmem>>, %arg8: memref<2x2x128xf32, #tpu.memory_space<vmem>>, %arg9: memref<2x128x128xbf16, #tpu.memory_space<vmem>>, %arg10: memref<2x1x128xf32, #tpu.memory_space<vmem>>, %arg11: memref<2x128x128xbf16, #tpu.memory_space<vmem>>, %arg12: memref<2x1x128xf32, #tpu.memory_space<vmem>>, %arg13: memref<128x128xbf16, #tpu.memory_space<vmem>>, %arg14: memref<1x128xf32, #tpu.memory_space<vmem>>, %arg15: memref<2x128xf32, #tpu.memory_space<vmem>>, %arg16: memref<2x128xf32, #tpu.memory_space<vmem>>) attributes {dimension_semantics = [], scalar_prefetch = 0 : i64, scratch_operands = 0 : i64, tpu.core_type = #tpu.core_type<tc>} {
    %0 = tpu.iota {dimensions = array<i32: 1>} : vector<1x128xi32>
    %c32_i32 = arith.constant 32 : i32
    %1 = vector.broadcast %c32_i32 : i32 to vector<1x128xi32>
    %2 = arith.cmpi slt, %0, %1 : vector<1x128xi32>
    %3 = arith.extui %2 : vector<1x128xi1> to vector<1x128xi32>
    %4 = arith.sitofp %3 : vector<1x128xi32> to vector<1x128xf32>
    %c0 = arith.constant 0 : index
    %c0_0 = arith.constant 0 : index
    %5 = vector.load %arg0[%c0, %c0_0] : memref<32x128xbf16, #tpu.memory_space<vmem>>, vector<32x128xbf16>
    %c0_1 = arith.constant 0 : index
    %c0_2 = arith.constant 0 : index
    %6 = vector.load %arg1[%c0_1, %c0_2] : memref<128x128xbf16, #tpu.memory_space<vmem>>, vector<128x128xbf16>
    %cst = arith.constant dense<0.000000e+00> : vector<32x128xf32>
    %7 = tpu.matmul %5, %6, %cst {dimension_numbers = #tpu.dot_dimension_numbers<[1], [0], [0], [1], [0, 0, 1, 1], [], []>} : vector<32x128xbf16>, vector<128x128xbf16>, vector<32x128xf32> -> vector<32x128xf32>
    %c0_3 = arith.constant 0 : index
    %c0_4 = arith.constant 0 : index
    %8 = vector.load %arg2[%c0_3, %c0_4] : memref<1x128xf32, #tpu.memory_space<vmem>>, vector<1x128xf32>
    %9 = vector.broadcast %8 : vector<1x128xf32> to vector<32x128xf32>
    %10 = arith.addf %7, %9 : vector<32x128xf32>
    %cst_5 = arith.constant 0.000000e+00 : f32
    %11 = vector.broadcast %cst_5 : f32 to vector<32x128xf32>
    %12 = arith.maximumf %10, %11 : vector<32x128xf32>
    %c0_6 = arith.constant 0 : index
    %c0_7 = arith.constant 0 : index
    %c0_8 = arith.constant 0 : index
    %13 = vector.load %arg3[%c0_6, %c0_7, %c0_8] : memref<2x2x128xf32, #tpu.memory_space<vmem>>, vector<1x2x128xf32>
    %14 = vector.shape_cast %13 : vector<1x2x128xf32> to vector<2x128xf32>
    %15 = vector.extract_strided_slice %14 {offsets = [0, 0], sizes = [1, 128], strides = [1, 1]} : vector<2x128xf32> to vector<1x128xf32>
    %16 = vector.extract_strided_slice %14 {offsets = [1, 0], sizes = [1, 128], strides = [1, 1]} : vector<2x128xf32> to vector<1x128xf32>
    %cst_9 = arith.constant dense<0.000000e+00> : vector<32xf32>
    %17 = vector.multi_reduction <add>, %12, %cst_9 [1] : vector<32x128xf32> to vector<32xf32>
    %18 = vector.shape_cast %17 : vector<32xf32> to vector<32x1xf32>
    %cst_10 = arith.constant 3.125000e-02 : f32
    %19 = vector.broadcast %cst_10 : f32 to vector<32x1xf32>
    %20 = arith.mulf %18, %19 : vector<32x1xf32>
    %21 = vector.broadcast %20 : vector<32x1xf32> to vector<32x128xf32>
    %22 = arith.subf %12, %21 : vector<32x128xf32>
    %23 = arith.mulf %22, %22 : vector<32x128xf32>
    %24 = vector.broadcast %4 : vector<1x128xf32> to vector<32x128xf32>
    %25 = arith.mulf %23, %24 : vector<32x128xf32>
    %cst_11 = arith.constant dense<0.000000e+00> : vector<32xf32>
    %26 = vector.multi_reduction <add>, %25, %cst_11 [1] : vector<32x128xf32> to vector<32xf32>
    %27 = vector.shape_cast %26 : vector<32xf32> to vector<32x1xf32>
    %cst_12 = arith.constant 3.125000e-02 : f32
    %28 = vector.broadcast %cst_12 : f32 to vector<32x1xf32>
    %29 = arith.mulf %27, %28 : vector<32x1xf32>
    %cst_13 = arith.constant 9.99999974E-6 : f32
    %30 = vector.broadcast %cst_13 : f32 to vector<32x1xf32>
    %31 = arith.addf %29, %30 : vector<32x1xf32>
    %32 = math.rsqrt %31 : vector<32x1xf32>
    %33 = vector.broadcast %32 : vector<32x1xf32> to vector<32x128xf32>
    %34 = arith.mulf %22, %33 : vector<32x128xf32>
    %35 = vector.broadcast %15 : vector<1x128xf32> to vector<32x128xf32>
    %36 = arith.mulf %34, %35 : vector<32x128xf32>
    %37 = vector.broadcast %16 : vector<1x128xf32> to vector<32x128xf32>
    %38 = arith.addf %36, %37 : vector<32x128xf32>
    %c0_14 = arith.constant 0 : index
    %c0_15 = arith.constant 0 : index
    %c0_16 = arith.constant 0 : index
    %39 = vector.load %arg4[%c0_14, %c0_15, %c0_16] : memref<2x128x768xbf16, #tpu.memory_space<vmem>>, vector<1x128x768xbf16>
    %40 = vector.shape_cast %39 : vector<1x128x768xbf16> to vector<128x768xbf16>
    %41 = arith.truncf %38 : vector<32x128xf32> to vector<32x128xbf16>
    %cst_17 = arith.constant dense<0.000000e+00> : vector<32x768xf32>
    %42 = tpu.matmul %41, %40, %cst_17 {dimension_numbers = #tpu.dot_dimension_numbers<[1], [0], [0], [1], [0, 0, 1, 1], [], []>} : vector<32x128xbf16>, vector<128x768xbf16>, vector<32x768xf32> -> vector<32x768xf32>
    %c0_18 = arith.constant 0 : index
    %c0_19 = arith.constant 0 : index
    %c0_20 = arith.constant 0 : index
    %43 = vector.load %arg5[%c0_18, %c0_19, %c0_20] : memref<2x1x768xf32, #tpu.memory_space<vmem>>, vector<1x1x768xf32>
    %44 = vector.shape_cast %43 : vector<1x1x768xf32> to vector<1x768xf32>
    %45 = vector.broadcast %44 : vector<1x768xf32> to vector<32x768xf32>
    %46 = arith.addf %42, %45 : vector<32x768xf32>
    %47 = vector.extract_strided_slice %46 {offsets = [0, 0], sizes = [32, 256], strides = [1, 1]} : vector<32x768xf32> to vector<32x256xf32>
    %48 = vector.extract_strided_slice %46 {offsets = [0, 256], sizes = [32, 256], strides = [1, 1]} : vector<32x768xf32> to vector<32x256xf32>
    %49 = vector.extract_strided_slice %46 {offsets = [0, 512], sizes = [32, 256], strides = [1, 1]} : vector<32x768xf32> to vector<32x256xf32>
    %50 = vector.extract_strided_slice %47 {offsets = [0, 0], sizes = [32, 128], strides = [1, 1]} : vector<32x256xf32> to vector<32x128xf32>
    %51 = vector.shape_cast %50 : vector<32x128xf32> to vector<2x16x128xf32>
    %52 = vector.extract_strided_slice %48 {offsets = [0, 0], sizes = [32, 128], strides = [1, 1]} : vector<32x256xf32> to vector<32x128xf32>
    %53 = vector.shape_cast %52 : vector<32x128xf32> to vector<2x16x128xf32>
    %54 = vector.extract_strided_slice %49 {offsets = [0, 0], sizes = [32, 128], strides = [1, 1]} : vector<32x256xf32> to vector<32x128xf32>
    %55 = vector.shape_cast %54 : vector<32x128xf32> to vector<2x16x128xf32>
    %56 = arith.truncf %51 : vector<2x16x128xf32> to vector<2x16x128xbf16>
    %57 = arith.truncf %53 : vector<2x16x128xf32> to vector<2x16x128xbf16>
    "tpu.trace_start"() <{level = 10 : i32, message = "bqd,bkd->bqk"}> : () -> ()
    %cst_21 = arith.constant dense<0.000000e+00> : vector<2x16x16xf32>
    %58 = tpu.matmul %56, %57, %cst_21 {dimension_numbers = #tpu.dot_dimension_numbers<[2], [2], [1], [1], [0, 0, 0, 1, 1, 1], [0], [0]>} : vector<2x16x128xbf16>, vector<2x16x128xbf16>, vector<2x16x16xf32> -> vector<2x16x16xf32>
    "tpu.trace_stop"() : () -> ()
    %cst_22 = arith.constant 2.500000e-01 : f32
    %59 = vector.broadcast %cst_22 : f32 to vector<2x16x16xf32>
    %60 = arith.mulf %58, %59 : vector<2x16x16xf32>
    %cst_23 = arith.constant dense<0xFF800000> : vector<2x16xf32>
    %61 = vector.multi_reduction <maximumf>, %60, %cst_23 [2] : vector<2x16x16xf32> to vector<2x16xf32>
    %62 = vector.shape_cast %61 : vector<2x16xf32> to vector<2x16x1xf32>
    %63 = vector.broadcast %62 : vector<2x16x1xf32> to vector<2x16x16xf32>
    %64 = arith.subf %60, %63 : vector<2x16x16xf32>
    %65 = math.exp %64 : vector<2x16x16xf32>
    %cst_24 = arith.constant dense<0.000000e+00> : vector<2x16xf32>
    %66 = vector.multi_reduction <add>, %65, %cst_24 [2] : vector<2x16x16xf32> to vector<2x16xf32>
    %67 = vector.shape_cast %66 : vector<2x16xf32> to vector<2x16x1xf32>
    %68 = vector.broadcast %67 : vector<2x16x1xf32> to vector<2x16x16xf32>
    %69 = arith.divf %65, %68 : vector<2x16x16xf32>
    %70 = arith.truncf %69 : vector<2x16x16xf32> to vector<2x16x16xbf16>
    %71 = arith.truncf %55 : vector<2x16x128xf32> to vector<2x16x128xbf16>
    "tpu.trace_start"() <{level = 10 : i32, message = "bqk,bkd->bqd"}> : () -> ()
    %cst_25 = arith.constant dense<0.000000e+00> : vector<2x16x128xf32>
    %72 = tpu.matmul %70, %71, %cst_25 {dimension_numbers = #tpu.dot_dimension_numbers<[2], [1], [1], [2], [0, 0, 0, 1, 1, 2], [0], [0]>} : vector<2x16x16xbf16>, vector<2x16x128xbf16>, vector<2x16x128xf32> -> vector<2x16x128xf32>
    "tpu.trace_stop"() : () -> ()
    %73 = vector.shape_cast %72 : vector<2x16x128xf32> to vector<32x128xf32>
    %74 = vector.extract_strided_slice %47 {offsets = [0, 128], sizes = [32, 128], strides = [1, 1]} : vector<32x256xf32> to vector<32x128xf32>
    %75 = vector.shape_cast %74 : vector<32x128xf32> to vector<2x16x128xf32>
    %76 = vector.extract_strided_slice %48 {offsets = [0, 128], sizes = [32, 128], strides = [1, 1]} : vector<32x256xf32> to vector<32x128xf32>
    %77 = vector.shape_cast %76 : vector<32x128xf32> to vector<2x16x128xf32>
    %78 = vector.extract_strided_slice %49 {offsets = [0, 128], sizes = [32, 128], strides = [1, 1]} : vector<32x256xf32> to vector<32x128xf32>
    %79 = vector.shape_cast %78 : vector<32x128xf32> to vector<2x16x128xf32>
    %80 = arith.truncf %75 : vector<2x16x128xf32> to vector<2x16x128xbf16>
    %81 = arith.truncf %77 : vector<2x16x128xf32> to vector<2x16x128xbf16>
    "tpu.trace_start"() <{level = 10 : i32, message = "bqd,bkd->bqk"}> : () -> ()
    %cst_26 = arith.constant dense<0.000000e+00> : vector<2x16x16xf32>
    %82 = tpu.matmul %80, %81, %cst_26 {dimension_numbers = #tpu.dot_dimension_numbers<[2], [2], [1], [1], [0, 0, 0, 1, 1, 1], [0], [0]>} : vector<2x16x128xbf16>, vector<2x16x128xbf16>, vector<2x16x16xf32> -> vector<2x16x16xf32>
    "tpu.trace_stop"() : () -> ()
    %cst_27 = arith.constant 2.500000e-01 : f32
    %83 = vector.broadcast %cst_27 : f32 to vector<2x16x16xf32>
    %84 = arith.mulf %82, %83 : vector<2x16x16xf32>
    %cst_28 = arith.constant dense<0xFF800000> : vector<2x16xf32>
    %85 = vector.multi_reduction <maximumf>, %84, %cst_28 [2] : vector<2x16x16xf32> to vector<2x16xf32>
    %86 = vector.shape_cast %85 : vector<2x16xf32> to vector<2x16x1xf32>
    %87 = vector.broadcast %86 : vector<2x16x1xf32> to vector<2x16x16xf32>
    %88 = arith.subf %84, %87 : vector<2x16x16xf32>
    %89 = math.exp %88 : vector<2x16x16xf32>
    %cst_29 = arith.constant dense<0.000000e+00> : vector<2x16xf32>
    %90 = vector.multi_reduction <add>, %89, %cst_29 [2] : vector<2x16x16xf32> to vector<2x16xf32>
    %91 = vector.shape_cast %90 : vector<2x16xf32> to vector<2x16x1xf32>
    %92 = vector.broadcast %91 : vector<2x16x1xf32> to vector<2x16x16xf32>
    %93 = arith.divf %89, %92 : vector<2x16x16xf32>
    %94 = arith.truncf %93 : vector<2x16x16xf32> to vector<2x16x16xbf16>
    %95 = arith.truncf %79 : vector<2x16x128xf32> to vector<2x16x128xbf16>
    "tpu.trace_start"() <{level = 10 : i32, message = "bqk,bkd->bqd"}> : () -> ()
    %cst_30 = arith.constant dense<0.000000e+00> : vector<2x16x128xf32>
    %96 = tpu.matmul %94, %95, %cst_30 {dimension_numbers = #tpu.dot_dimension_numbers<[2], [1], [1], [2], [0, 0, 0, 1, 1, 2], [0], [0]>} : vector<2x16x16xbf16>, vector<2x16x128xbf16>, vector<2x16x128xf32> -> vector<2x16x128xf32>
    "tpu.trace_stop"() : () -> ()
    %97 = vector.shape_cast %96 : vector<2x16x128xf32> to vector<32x128xf32>
    %98 = tpu.concatenate %73, %97 in 1 : vector<32x128xf32>, vector<32x128xf32> -> vector<32x256xf32>
    %c0_31 = arith.constant 0 : index
    %c0_32 = arith.constant 0 : index
    %c0_33 = arith.constant 0 : index
    %99 = vector.load %arg6[%c0_31, %c0_32, %c0_33] : memref<2x256x128xbf16, #tpu.memory_space<vmem>>, vector<1x256x128xbf16>
    %100 = vector.shape_cast %99 : vector<1x256x128xbf16> to vector<256x128xbf16>
    %101 = arith.truncf %98 : vector<32x256xf32> to vector<32x256xbf16>
    %cst_34 = arith.constant dense<0.000000e+00> : vector<32x128xf32>
    %102 = tpu.matmul %101, %100, %cst_34 {dimension_numbers = #tpu.dot_dimension_numbers<[1], [0], [0], [1], [0, 0, 1, 1], [], []>} : vector<32x256xbf16>, vector<256x128xbf16>, vector<32x128xf32> -> vector<32x128xf32>
    %103 = arith.addf %12, %102 : vector<32x128xf32>
    %c0_35 = arith.constant 0 : index
    %c0_36 = arith.constant 0 : index
    %c0_37 = arith.constant 0 : index
    %104 = vector.load %arg7[%c0_35, %c0_36, %c0_37] : memref<2x1x128xf32, #tpu.memory_space<vmem>>, vector<1x1x128xf32>
    %105 = vector.shape_cast %104 : vector<1x1x128xf32> to vector<1x128xf32>
    %106 = vector.broadcast %105 : vector<1x128xf32> to vector<32x128xf32>
    %107 = arith.addf %103, %106 : vector<32x128xf32>
    %c0_38 = arith.constant 0 : index
    %c0_39 = arith.constant 0 : index
    %c0_40 = arith.constant 0 : index
    %108 = vector.load %arg8[%c0_38, %c0_39, %c0_40] : memref<2x2x128xf32, #tpu.memory_space<vmem>>, vector<1x2x128xf32>
    %109 = vector.shape_cast %108 : vector<1x2x128xf32> to vector<2x128xf32>
    %110 = vector.extract_strided_slice %109 {offsets = [0, 0], sizes = [1, 128], strides = [1, 1]} : vector<2x128xf32> to vector<1x128xf32>
    %111 = vector.extract_strided_slice %109 {offsets = [1, 0], sizes = [1, 128], strides = [1, 1]} : vector<2x128xf32> to vector<1x128xf32>
    %cst_41 = arith.constant dense<0.000000e+00> : vector<32xf32>
    %112 = vector.multi_reduction <add>, %107, %cst_41 [1] : vector<32x128xf32> to vector<32xf32>
    %113 = vector.shape_cast %112 : vector<32xf32> to vector<32x1xf32>
    %cst_42 = arith.constant 3.125000e-02 : f32
    %114 = vector.broadcast %cst_42 : f32 to vector<32x1xf32>
    %115 = arith.mulf %113, %114 : vector<32x1xf32>
    %116 = vector.broadcast %115 : vector<32x1xf32> to vector<32x128xf32>
    %117 = arith.subf %107, %116 : vector<32x128xf32>
    %118 = arith.mulf %117, %117 : vector<32x128xf32>
    %119 = vector.broadcast %4 : vector<1x128xf32> to vector<32x128xf32>
    %120 = arith.mulf %118, %119 : vector<32x128xf32>
    %cst_43 = arith.constant dense<0.000000e+00> : vector<32xf32>
    %121 = vector.multi_reduction <add>, %120, %cst_43 [1] : vector<32x128xf32> to vector<32xf32>
    %122 = vector.shape_cast %121 : vector<32xf32> to vector<32x1xf32>
    %cst_44 = arith.constant 3.125000e-02 : f32
    %123 = vector.broadcast %cst_44 : f32 to vector<32x1xf32>
    %124 = arith.mulf %122, %123 : vector<32x1xf32>
    %cst_45 = arith.constant 9.99999974E-6 : f32
    %125 = vector.broadcast %cst_45 : f32 to vector<32x1xf32>
    %126 = arith.addf %124, %125 : vector<32x1xf32>
    %127 = math.rsqrt %126 : vector<32x1xf32>
    %128 = vector.broadcast %127 : vector<32x1xf32> to vector<32x128xf32>
    %129 = arith.mulf %117, %128 : vector<32x128xf32>
    %130 = vector.broadcast %110 : vector<1x128xf32> to vector<32x128xf32>
    %131 = arith.mulf %129, %130 : vector<32x128xf32>
    %132 = vector.broadcast %111 : vector<1x128xf32> to vector<32x128xf32>
    %133 = arith.addf %131, %132 : vector<32x128xf32>
    %c0_46 = arith.constant 0 : index
    %c0_47 = arith.constant 0 : index
    %c0_48 = arith.constant 0 : index
    %134 = vector.load %arg9[%c0_46, %c0_47, %c0_48] : memref<2x128x128xbf16, #tpu.memory_space<vmem>>, vector<1x128x128xbf16>
    %135 = vector.shape_cast %134 : vector<1x128x128xbf16> to vector<128x128xbf16>
    %136 = arith.truncf %133 : vector<32x128xf32> to vector<32x128xbf16>
    %cst_49 = arith.constant dense<0.000000e+00> : vector<32x128xf32>
    %137 = tpu.matmul %136, %135, %cst_49 {dimension_numbers = #tpu.dot_dimension_numbers<[1], [0], [0], [1], [0, 0, 1, 1], [], []>} : vector<32x128xbf16>, vector<128x128xbf16>, vector<32x128xf32> -> vector<32x128xf32>
    %c0_50 = arith.constant 0 : index
    %c0_51 = arith.constant 0 : index
    %c0_52 = arith.constant 0 : index
    %138 = vector.load %arg10[%c0_50, %c0_51, %c0_52] : memref<2x1x128xf32, #tpu.memory_space<vmem>>, vector<1x1x128xf32>
    %139 = vector.shape_cast %138 : vector<1x1x128xf32> to vector<1x128xf32>
    %140 = vector.broadcast %139 : vector<1x128xf32> to vector<32x128xf32>
    %141 = arith.addf %137, %140 : vector<32x128xf32>
    %cst_53 = arith.constant 0.000000e+00 : f32
    %142 = vector.broadcast %cst_53 : f32 to vector<32x128xf32>
    %143 = arith.maximumf %141, %142 : vector<32x128xf32>
    %c0_54 = arith.constant 0 : index
    %c0_55 = arith.constant 0 : index
    %c0_56 = arith.constant 0 : index
    %144 = vector.load %arg11[%c0_54, %c0_55, %c0_56] : memref<2x128x128xbf16, #tpu.memory_space<vmem>>, vector<1x128x128xbf16>
    %145 = vector.shape_cast %144 : vector<1x128x128xbf16> to vector<128x128xbf16>
    %146 = arith.truncf %143 : vector<32x128xf32> to vector<32x128xbf16>
    %cst_57 = arith.constant dense<0.000000e+00> : vector<32x128xf32>
    %147 = tpu.matmul %146, %145, %cst_57 {dimension_numbers = #tpu.dot_dimension_numbers<[1], [0], [0], [1], [0, 0, 1, 1], [], []>} : vector<32x128xbf16>, vector<128x128xbf16>, vector<32x128xf32> -> vector<32x128xf32>
    %148 = arith.addf %107, %147 : vector<32x128xf32>
    %c0_58 = arith.constant 0 : index
    %c0_59 = arith.constant 0 : index
    %c0_60 = arith.constant 0 : index
    %149 = vector.load %arg12[%c0_58, %c0_59, %c0_60] : memref<2x1x128xf32, #tpu.memory_space<vmem>>, vector<1x1x128xf32>
    %150 = vector.shape_cast %149 : vector<1x1x128xf32> to vector<1x128xf32>
    %151 = vector.broadcast %150 : vector<1x128xf32> to vector<32x128xf32>
    %152 = arith.addf %148, %151 : vector<32x128xf32>
    %c1 = arith.constant 1 : index
    %c0_61 = arith.constant 0 : index
    %c0_62 = arith.constant 0 : index
    %153 = vector.load %arg3[%c1, %c0_61, %c0_62] : memref<2x2x128xf32, #tpu.memory_space<vmem>>, vector<1x2x128xf32>
    %154 = vector.shape_cast %153 : vector<1x2x128xf32> to vector<2x128xf32>
    %155 = vector.extract_strided_slice %154 {offsets = [0, 0], sizes = [1, 128], strides = [1, 1]} : vector<2x128xf32> to vector<1x128xf32>
    %156 = vector.extract_strided_slice %154 {offsets = [1, 0], sizes = [1, 128], strides = [1, 1]} : vector<2x128xf32> to vector<1x128xf32>
    %cst_63 = arith.constant dense<0.000000e+00> : vector<32xf32>
    %157 = vector.multi_reduction <add>, %152, %cst_63 [1] : vector<32x128xf32> to vector<32xf32>
    %158 = vector.shape_cast %157 : vector<32xf32> to vector<32x1xf32>
    %cst_64 = arith.constant 3.125000e-02 : f32
    %159 = vector.broadcast %cst_64 : f32 to vector<32x1xf32>
    %160 = arith.mulf %158, %159 : vector<32x1xf32>
    %161 = vector.broadcast %160 : vector<32x1xf32> to vector<32x128xf32>
    %162 = arith.subf %152, %161 : vector<32x128xf32>
    %163 = arith.mulf %162, %162 : vector<32x128xf32>
    %164 = vector.broadcast %4 : vector<1x128xf32> to vector<32x128xf32>
    %165 = arith.mulf %163, %164 : vector<32x128xf32>
    %cst_65 = arith.constant dense<0.000000e+00> : vector<32xf32>
    %166 = vector.multi_reduction <add>, %165, %cst_65 [1] : vector<32x128xf32> to vector<32xf32>
    %167 = vector.shape_cast %166 : vector<32xf32> to vector<32x1xf32>
    %cst_66 = arith.constant 3.125000e-02 : f32
    %168 = vector.broadcast %cst_66 : f32 to vector<32x1xf32>
    %169 = arith.mulf %167, %168 : vector<32x1xf32>
    %cst_67 = arith.constant 9.99999974E-6 : f32
    %170 = vector.broadcast %cst_67 : f32 to vector<32x1xf32>
    %171 = arith.addf %169, %170 : vector<32x1xf32>
    %172 = math.rsqrt %171 : vector<32x1xf32>
    %173 = vector.broadcast %172 : vector<32x1xf32> to vector<32x128xf32>
    %174 = arith.mulf %162, %173 : vector<32x128xf32>
    %175 = vector.broadcast %155 : vector<1x128xf32> to vector<32x128xf32>
    %176 = arith.mulf %174, %175 : vector<32x128xf32>
    %177 = vector.broadcast %156 : vector<1x128xf32> to vector<32x128xf32>
    %178 = arith.addf %176, %177 : vector<32x128xf32>
    %c1_68 = arith.constant 1 : index
    %c0_69 = arith.constant 0 : index
    %c0_70 = arith.constant 0 : index
    %179 = vector.load %arg4[%c1_68, %c0_69, %c0_70] : memref<2x128x768xbf16, #tpu.memory_space<vmem>>, vector<1x128x768xbf16>
    %180 = vector.shape_cast %179 : vector<1x128x768xbf16> to vector<128x768xbf16>
    %181 = arith.truncf %178 : vector<32x128xf32> to vector<32x128xbf16>
    %cst_71 = arith.constant dense<0.000000e+00> : vector<32x768xf32>
    %182 = tpu.matmul %181, %180, %cst_71 {dimension_numbers = #tpu.dot_dimension_numbers<[1], [0], [0], [1], [0, 0, 1, 1], [], []>} : vector<32x128xbf16>, vector<128x768xbf16>, vector<32x768xf32> -> vector<32x768xf32>
    %c1_72 = arith.constant 1 : index
    %c0_73 = arith.constant 0 : index
    %c0_74 = arith.constant 0 : index
    %183 = vector.load %arg5[%c1_72, %c0_73, %c0_74] : memref<2x1x768xf32, #tpu.memory_space<vmem>>, vector<1x1x768xf32>
    %184 = vector.shape_cast %183 : vector<1x1x768xf32> to vector<1x768xf32>
    %185 = vector.broadcast %184 : vector<1x768xf32> to vector<32x768xf32>
    %186 = arith.addf %182, %185 : vector<32x768xf32>
    %187 = vector.extract_strided_slice %186 {offsets = [0, 0], sizes = [32, 256], strides = [1, 1]} : vector<32x768xf32> to vector<32x256xf32>
    %188 = vector.extract_strided_slice %186 {offsets = [0, 256], sizes = [32, 256], strides = [1, 1]} : vector<32x768xf32> to vector<32x256xf32>
    %189 = vector.extract_strided_slice %186 {offsets = [0, 512], sizes = [32, 256], strides = [1, 1]} : vector<32x768xf32> to vector<32x256xf32>
    %190 = vector.extract_strided_slice %187 {offsets = [0, 0], sizes = [32, 128], strides = [1, 1]} : vector<32x256xf32> to vector<32x128xf32>
    %191 = vector.shape_cast %190 : vector<32x128xf32> to vector<2x16x128xf32>
    %192 = vector.extract_strided_slice %188 {offsets = [0, 0], sizes = [32, 128], strides = [1, 1]} : vector<32x256xf32> to vector<32x128xf32>
    %193 = vector.shape_cast %192 : vector<32x128xf32> to vector<2x16x128xf32>
    %194 = vector.extract_strided_slice %189 {offsets = [0, 0], sizes = [32, 128], strides = [1, 1]} : vector<32x256xf32> to vector<32x128xf32>
    %195 = vector.shape_cast %194 : vector<32x128xf32> to vector<2x16x128xf32>
    %196 = arith.truncf %191 : vector<2x16x128xf32> to vector<2x16x128xbf16>
    %197 = arith.truncf %193 : vector<2x16x128xf32> to vector<2x16x128xbf16>
    "tpu.trace_start"() <{level = 10 : i32, message = "bqd,bkd->bqk"}> : () -> ()
    %cst_75 = arith.constant dense<0.000000e+00> : vector<2x16x16xf32>
    %198 = tpu.matmul %196, %197, %cst_75 {dimension_numbers = #tpu.dot_dimension_numbers<[2], [2], [1], [1], [0, 0, 0, 1, 1, 1], [0], [0]>} : vector<2x16x128xbf16>, vector<2x16x128xbf16>, vector<2x16x16xf32> -> vector<2x16x16xf32>
    "tpu.trace_stop"() : () -> ()
    %cst_76 = arith.constant 2.500000e-01 : f32
    %199 = vector.broadcast %cst_76 : f32 to vector<2x16x16xf32>
    %200 = arith.mulf %198, %199 : vector<2x16x16xf32>
    %cst_77 = arith.constant dense<0xFF800000> : vector<2x16xf32>
    %201 = vector.multi_reduction <maximumf>, %200, %cst_77 [2] : vector<2x16x16xf32> to vector<2x16xf32>
    %202 = vector.shape_cast %201 : vector<2x16xf32> to vector<2x16x1xf32>
    %203 = vector.broadcast %202 : vector<2x16x1xf32> to vector<2x16x16xf32>
    %204 = arith.subf %200, %203 : vector<2x16x16xf32>
    %205 = math.exp %204 : vector<2x16x16xf32>
    %cst_78 = arith.constant dense<0.000000e+00> : vector<2x16xf32>
    %206 = vector.multi_reduction <add>, %205, %cst_78 [2] : vector<2x16x16xf32> to vector<2x16xf32>
    %207 = vector.shape_cast %206 : vector<2x16xf32> to vector<2x16x1xf32>
    %208 = vector.broadcast %207 : vector<2x16x1xf32> to vector<2x16x16xf32>
    %209 = arith.divf %205, %208 : vector<2x16x16xf32>
    %210 = arith.truncf %209 : vector<2x16x16xf32> to vector<2x16x16xbf16>
    %211 = arith.truncf %195 : vector<2x16x128xf32> to vector<2x16x128xbf16>
    "tpu.trace_start"() <{level = 10 : i32, message = "bqk,bkd->bqd"}> : () -> ()
    %cst_79 = arith.constant dense<0.000000e+00> : vector<2x16x128xf32>
    %212 = tpu.matmul %210, %211, %cst_79 {dimension_numbers = #tpu.dot_dimension_numbers<[2], [1], [1], [2], [0, 0, 0, 1, 1, 2], [0], [0]>} : vector<2x16x16xbf16>, vector<2x16x128xbf16>, vector<2x16x128xf32> -> vector<2x16x128xf32>
    "tpu.trace_stop"() : () -> ()
    %213 = vector.shape_cast %212 : vector<2x16x128xf32> to vector<32x128xf32>
    %214 = vector.extract_strided_slice %187 {offsets = [0, 128], sizes = [32, 128], strides = [1, 1]} : vector<32x256xf32> to vector<32x128xf32>
    %215 = vector.shape_cast %214 : vector<32x128xf32> to vector<2x16x128xf32>
    %216 = vector.extract_strided_slice %188 {offsets = [0, 128], sizes = [32, 128], strides = [1, 1]} : vector<32x256xf32> to vector<32x128xf32>
    %217 = vector.shape_cast %216 : vector<32x128xf32> to vector<2x16x128xf32>
    %218 = vector.extract_strided_slice %189 {offsets = [0, 128], sizes = [32, 128], strides = [1, 1]} : vector<32x256xf32> to vector<32x128xf32>
    %219 = vector.shape_cast %218 : vector<32x128xf32> to vector<2x16x128xf32>
    %220 = arith.truncf %215 : vector<2x16x128xf32> to vector<2x16x128xbf16>
    %221 = arith.truncf %217 : vector<2x16x128xf32> to vector<2x16x128xbf16>
    "tpu.trace_start"() <{level = 10 : i32, message = "bqd,bkd->bqk"}> : () -> ()
    %cst_80 = arith.constant dense<0.000000e+00> : vector<2x16x16xf32>
    %222 = tpu.matmul %220, %221, %cst_80 {dimension_numbers = #tpu.dot_dimension_numbers<[2], [2], [1], [1], [0, 0, 0, 1, 1, 1], [0], [0]>} : vector<2x16x128xbf16>, vector<2x16x128xbf16>, vector<2x16x16xf32> -> vector<2x16x16xf32>
    "tpu.trace_stop"() : () -> ()
    %cst_81 = arith.constant 2.500000e-01 : f32
    %223 = vector.broadcast %cst_81 : f32 to vector<2x16x16xf32>
    %224 = arith.mulf %222, %223 : vector<2x16x16xf32>
    %cst_82 = arith.constant dense<0xFF800000> : vector<2x16xf32>
    %225 = vector.multi_reduction <maximumf>, %224, %cst_82 [2] : vector<2x16x16xf32> to vector<2x16xf32>
    %226 = vector.shape_cast %225 : vector<2x16xf32> to vector<2x16x1xf32>
    %227 = vector.broadcast %226 : vector<2x16x1xf32> to vector<2x16x16xf32>
    %228 = arith.subf %224, %227 : vector<2x16x16xf32>
    %229 = math.exp %228 : vector<2x16x16xf32>
    %cst_83 = arith.constant dense<0.000000e+00> : vector<2x16xf32>
    %230 = vector.multi_reduction <add>, %229, %cst_83 [2] : vector<2x16x16xf32> to vector<2x16xf32>
    %231 = vector.shape_cast %230 : vector<2x16xf32> to vector<2x16x1xf32>
    %232 = vector.broadcast %231 : vector<2x16x1xf32> to vector<2x16x16xf32>
    %233 = arith.divf %229, %232 : vector<2x16x16xf32>
    %234 = arith.truncf %233 : vector<2x16x16xf32> to vector<2x16x16xbf16>
    %235 = arith.truncf %219 : vector<2x16x128xf32> to vector<2x16x128xbf16>
    "tpu.trace_start"() <{level = 10 : i32, message = "bqk,bkd->bqd"}> : () -> ()
    %cst_84 = arith.constant dense<0.000000e+00> : vector<2x16x128xf32>
    %236 = tpu.matmul %234, %235, %cst_84 {dimension_numbers = #tpu.dot_dimension_numbers<[2], [1], [1], [2], [0, 0, 0, 1, 1, 2], [0], [0]>} : vector<2x16x16xbf16>, vector<2x16x128xbf16>, vector<2x16x128xf32> -> vector<2x16x128xf32>
    "tpu.trace_stop"() : () -> ()
    %237 = vector.shape_cast %236 : vector<2x16x128xf32> to vector<32x128xf32>
    %238 = tpu.concatenate %213, %237 in 1 : vector<32x128xf32>, vector<32x128xf32> -> vector<32x256xf32>
    %c1_85 = arith.constant 1 : index
    %c0_86 = arith.constant 0 : index
    %c0_87 = arith.constant 0 : index
    %239 = vector.load %arg6[%c1_85, %c0_86, %c0_87] : memref<2x256x128xbf16, #tpu.memory_space<vmem>>, vector<1x256x128xbf16>
    %240 = vector.shape_cast %239 : vector<1x256x128xbf16> to vector<256x128xbf16>
    %241 = arith.truncf %238 : vector<32x256xf32> to vector<32x256xbf16>
    %cst_88 = arith.constant dense<0.000000e+00> : vector<32x128xf32>
    %242 = tpu.matmul %241, %240, %cst_88 {dimension_numbers = #tpu.dot_dimension_numbers<[1], [0], [0], [1], [0, 0, 1, 1], [], []>} : vector<32x256xbf16>, vector<256x128xbf16>, vector<32x128xf32> -> vector<32x128xf32>
    %243 = arith.addf %152, %242 : vector<32x128xf32>
    %c1_89 = arith.constant 1 : index
    %c0_90 = arith.constant 0 : index
    %c0_91 = arith.constant 0 : index
    %244 = vector.load %arg7[%c1_89, %c0_90, %c0_91] : memref<2x1x128xf32, #tpu.memory_space<vmem>>, vector<1x1x128xf32>
    %245 = vector.shape_cast %244 : vector<1x1x128xf32> to vector<1x128xf32>
    %246 = vector.broadcast %245 : vector<1x128xf32> to vector<32x128xf32>
    %247 = arith.addf %243, %246 : vector<32x128xf32>
    %c1_92 = arith.constant 1 : index
    %c0_93 = arith.constant 0 : index
    %c0_94 = arith.constant 0 : index
    %248 = vector.load %arg8[%c1_92, %c0_93, %c0_94] : memref<2x2x128xf32, #tpu.memory_space<vmem>>, vector<1x2x128xf32>
    %249 = vector.shape_cast %248 : vector<1x2x128xf32> to vector<2x128xf32>
    %250 = vector.extract_strided_slice %249 {offsets = [0, 0], sizes = [1, 128], strides = [1, 1]} : vector<2x128xf32> to vector<1x128xf32>
    %251 = vector.extract_strided_slice %249 {offsets = [1, 0], sizes = [1, 128], strides = [1, 1]} : vector<2x128xf32> to vector<1x128xf32>
    %cst_95 = arith.constant dense<0.000000e+00> : vector<32xf32>
    %252 = vector.multi_reduction <add>, %247, %cst_95 [1] : vector<32x128xf32> to vector<32xf32>
    %253 = vector.shape_cast %252 : vector<32xf32> to vector<32x1xf32>
    %cst_96 = arith.constant 3.125000e-02 : f32
    %254 = vector.broadcast %cst_96 : f32 to vector<32x1xf32>
    %255 = arith.mulf %253, %254 : vector<32x1xf32>
    %256 = vector.broadcast %255 : vector<32x1xf32> to vector<32x128xf32>
    %257 = arith.subf %247, %256 : vector<32x128xf32>
    %258 = arith.mulf %257, %257 : vector<32x128xf32>
    %259 = vector.broadcast %4 : vector<1x128xf32> to vector<32x128xf32>
    %260 = arith.mulf %258, %259 : vector<32x128xf32>
    %cst_97 = arith.constant dense<0.000000e+00> : vector<32xf32>
    %261 = vector.multi_reduction <add>, %260, %cst_97 [1] : vector<32x128xf32> to vector<32xf32>
    %262 = vector.shape_cast %261 : vector<32xf32> to vector<32x1xf32>
    %cst_98 = arith.constant 3.125000e-02 : f32
    %263 = vector.broadcast %cst_98 : f32 to vector<32x1xf32>
    %264 = arith.mulf %262, %263 : vector<32x1xf32>
    %cst_99 = arith.constant 9.99999974E-6 : f32
    %265 = vector.broadcast %cst_99 : f32 to vector<32x1xf32>
    %266 = arith.addf %264, %265 : vector<32x1xf32>
    %267 = math.rsqrt %266 : vector<32x1xf32>
    %268 = vector.broadcast %267 : vector<32x1xf32> to vector<32x128xf32>
    %269 = arith.mulf %257, %268 : vector<32x128xf32>
    %270 = vector.broadcast %250 : vector<1x128xf32> to vector<32x128xf32>
    %271 = arith.mulf %269, %270 : vector<32x128xf32>
    %272 = vector.broadcast %251 : vector<1x128xf32> to vector<32x128xf32>
    %273 = arith.addf %271, %272 : vector<32x128xf32>
    %c1_100 = arith.constant 1 : index
    %c0_101 = arith.constant 0 : index
    %c0_102 = arith.constant 0 : index
    %274 = vector.load %arg9[%c1_100, %c0_101, %c0_102] : memref<2x128x128xbf16, #tpu.memory_space<vmem>>, vector<1x128x128xbf16>
    %275 = vector.shape_cast %274 : vector<1x128x128xbf16> to vector<128x128xbf16>
    %276 = arith.truncf %273 : vector<32x128xf32> to vector<32x128xbf16>
    %cst_103 = arith.constant dense<0.000000e+00> : vector<32x128xf32>
    %277 = tpu.matmul %276, %275, %cst_103 {dimension_numbers = #tpu.dot_dimension_numbers<[1], [0], [0], [1], [0, 0, 1, 1], [], []>} : vector<32x128xbf16>, vector<128x128xbf16>, vector<32x128xf32> -> vector<32x128xf32>
    %c1_104 = arith.constant 1 : index
    %c0_105 = arith.constant 0 : index
    %c0_106 = arith.constant 0 : index
    %278 = vector.load %arg10[%c1_104, %c0_105, %c0_106] : memref<2x1x128xf32, #tpu.memory_space<vmem>>, vector<1x1x128xf32>
    %279 = vector.shape_cast %278 : vector<1x1x128xf32> to vector<1x128xf32>
    %280 = vector.broadcast %279 : vector<1x128xf32> to vector<32x128xf32>
    %281 = arith.addf %277, %280 : vector<32x128xf32>
    %cst_107 = arith.constant 0.000000e+00 : f32
    %282 = vector.broadcast %cst_107 : f32 to vector<32x128xf32>
    %283 = arith.maximumf %281, %282 : vector<32x128xf32>
    %c1_108 = arith.constant 1 : index
    %c0_109 = arith.constant 0 : index
    %c0_110 = arith.constant 0 : index
    %284 = vector.load %arg11[%c1_108, %c0_109, %c0_110] : memref<2x128x128xbf16, #tpu.memory_space<vmem>>, vector<1x128x128xbf16>
    %285 = vector.shape_cast %284 : vector<1x128x128xbf16> to vector<128x128xbf16>
    %286 = arith.truncf %283 : vector<32x128xf32> to vector<32x128xbf16>
    %cst_111 = arith.constant dense<0.000000e+00> : vector<32x128xf32>
    %287 = tpu.matmul %286, %285, %cst_111 {dimension_numbers = #tpu.dot_dimension_numbers<[1], [0], [0], [1], [0, 0, 1, 1], [], []>} : vector<32x128xbf16>, vector<128x128xbf16>, vector<32x128xf32> -> vector<32x128xf32>
    %288 = arith.addf %247, %287 : vector<32x128xf32>
    %c1_112 = arith.constant 1 : index
    %c0_113 = arith.constant 0 : index
    %c0_114 = arith.constant 0 : index
    %289 = vector.load %arg12[%c1_112, %c0_113, %c0_114] : memref<2x1x128xf32, #tpu.memory_space<vmem>>, vector<1x1x128xf32>
    %290 = vector.shape_cast %289 : vector<1x1x128xf32> to vector<1x128xf32>
    %291 = vector.broadcast %290 : vector<1x128xf32> to vector<32x128xf32>
    %292 = arith.addf %288, %291 : vector<32x128xf32>
    %293 = vector.shape_cast %292 : vector<32x128xf32> to vector<2x16x128xf32>
    %cst_115 = arith.constant dense<0.000000e+00> : vector<2x128xf32>
    %294 = vector.multi_reduction <add>, %293, %cst_115 [1] : vector<2x16x128xf32> to vector<2x128xf32>
    %cst_116 = arith.constant 1.600000e+01 : f32
    %295 = vector.broadcast %cst_116 : f32 to vector<2x128xf32>
    %296 = arith.divf %294, %295 : vector<2x128xf32>
    %c0_117 = arith.constant 0 : index
    %c0_118 = arith.constant 0 : index
    %297 = vector.load %arg15[%c0_117, %c0_118] : memref<2x128xf32, #tpu.memory_space<vmem>>, vector<2x128xf32>
    tpu.vector_store %arg15[%c0_117, %c0_118], %296 {strides = array<i32>} : memref<2x128xf32, #tpu.memory_space<vmem>>, vector<2x128xf32>,
    %c0_119 = arith.constant 0 : index
    %c0_120 = arith.constant 0 : index
    %298 = vector.load %arg13[%c0_119, %c0_120] : memref<128x128xbf16, #tpu.memory_space<vmem>>, vector<128x128xbf16>
    %299 = arith.truncf %296 : vector<2x128xf32> to vector<2x128xbf16>
    %cst_121 = arith.constant dense<0.000000e+00> : vector<2x128xf32>
    %300 = tpu.matmul %299, %298, %cst_121 {dimension_numbers = #tpu.dot_dimension_numbers<[1], [0], [0], [1], [0, 0, 1, 1], [], []>} : vector<2x128xbf16>, vector<128x128xbf16>, vector<2x128xf32> -> vector<2x128xf32>
    %c0_122 = arith.constant 0 : index
    %c0_123 = arith.constant 0 : index
    %301 = vector.load %arg14[%c0_122, %c0_123] : memref<1x128xf32, #tpu.memory_space<vmem>>, vector<1x128xf32>
    %302 = vector.broadcast %301 : vector<1x128xf32> to vector<2x128xf32>
    %303 = arith.addf %300, %302 : vector<2x128xf32>
    %c0_124 = arith.constant 0 : index
    %c0_125 = arith.constant 0 : index
    %304 = vector.load %arg16[%c0_124, %c0_125] : memref<2x128xf32, #tpu.memory_space<vmem>>, vector<2x128xf32>
    tpu.vector_store %arg16[%c0_124, %c0_125], %303 {strides = array<i32>} : memref<2x128xf32, #tpu.memory_space<vmem>>, vector<2x128xf32>,
    return
  }
}

</mosaic_0001>

<llo_original>
// kernel: network_forward.1
$region0: #{network_forward.1}
  #allocation0 [shape = 'u32[]', space=smem, size = 0x4, offset = 0x4, fixed_abs, tag = 'smem constant byte address 0x4 - core index']
  #allocation1 [shape = 'u32[144,128]{1,0:T(1,128)}', space=vmem, size = 0x12000, scoped, tag = 'internal scratch']
  %s0 = inlined_call_operand.vmem [shape: bf16[32,128], index: 0, kind: input, shape index: {}]
  %s1 = inlined_call_operand.vmem [shape: bf16[128,128], index: 1, kind: input, shape index: {}]
  %s2 = inlined_call_operand.vmem [shape: f32[1,128], index: 2, kind: input, shape index: {}]
  %s3 = inlined_call_operand.vmem [shape: f32[2,2,128], index: 3, kind: input, shape index: {}]
  %s4 = inlined_call_operand.hbm [shape: bf16[2,128,768], index: 4, kind: input, shape index: {}]
  %s5 = inlined_call_operand.vmem [shape: f32[2,1,768], index: 5, kind: input, shape index: {}]
  %s6 = inlined_call_operand.hbm [shape: bf16[2,256,128], index: 6, kind: input, shape index: {}]
  %s7 = inlined_call_operand.vmem [shape: f32[2,1,128], index: 7, kind: input, shape index: {}]
  %s8 = inlined_call_operand.vmem [shape: f32[2,2,128], index: 8, kind: input, shape index: {}]
  %s9 = inlined_call_operand.vmem [shape: bf16[2,128,128], index: 9, kind: input, shape index: {}]
  %s10 = inlined_call_operand.vmem [shape: f32[2,1,128], index: 10, kind: input, shape index: {}]
  %s11 = inlined_call_operand.hbm [shape: bf16[2,128,128], index: 11, kind: input, shape index: {}]
  %s12 = inlined_call_operand.vmem [shape: f32[2,1,128], index: 12, kind: input, shape index: {}]
  %s13 = inlined_call_operand.hbm [shape: bf16[128,128], index: 13, kind: input, shape index: {}]
  %s14 = inlined_call_operand.vmem [shape: f32[1,128], index: 14, kind: input, shape index: {}]
  %s15 = inlined_call_operand.hbm [shape: f32[2,128], index: 15, kind: output, shape index: {0}]
  %s16 = inlined_call_operand.hbm [shape: f32[2,128], index: 16, kind: output, shape index: {1}]
  %17 = xla_tuple %s15, %s16
  %s18 = sld [smem:[#allocation0]]
  $region94: #{network_forward.1} parent=0
    _
  %s20 = ssub.s32 1, %s18
  %s21 = scalar_select 0, %s20, %s18
  $region1: #{network_forward.1} parent=0
    #allocation2 [shape = 'u8[393216]{0}', space=vmem, size = 0x60000, scoped, tag = 'input window, operand 4, single buffered']
    #allocation3 [shape = 's32[1]{0}', space=sflag, size = 0x4, scoped, tag = 'scoped memory for network_forward.1']
    #allocation4 [shape = 's32[1]{0}', space=sflag, size = 0x4, scoped, tag = 'scoped memory for network_forward.1']
    #allocation5 [shape = 'u8[131072]{0}', space=vmem, size = 0x20000, scoped, tag = 'input window, operand 6, single buffered']
    #allocation6 [shape = 's32[1]{0}', space=sflag, size = 0x4, scoped, tag = 'scoped memory for network_forward.1']
    #allocation7 [shape = 'u8[65536]{0}', space=vmem, size = 0x10000, scoped, tag = 'input window, operand 11, single buffered']
    #allocation8 [shape = 'u8[32768]{0}', space=vmem, size = 0x8000, scoped, tag = 'input window, operand 13, single buffered']
    #allocation9 [shape = 's32[1]{0}', space=sflag, size = 0x4, scoped, tag = 'scoped memory for network_forward.1']
    #allocation10 [shape = 'u8[1024]{0}', space=vmem, size = 0x400, scoped, tag = 'output window, operand 0, single buffered']
    #allocation11 [shape = 'u8[1024]{0}', space=vmem, size = 0x400, scoped, tag = 'output window, operand 1, single buffered']
    #allocation12 [shape = 's32[1]{0}', space=sflag, size = 0x4, scoped, tag = 'scoped memory for network_forward.1']
    %22 = vsyncpa [#allocation3], 0
    %23 = vsyncpa [#allocation6], 0
    %24 = vsyncpa [#allocation9], 0
    %25 = vsyncpa [#allocation4], 0
    %26 = vsyncpa [#allocation12], 0
    // Predicated region
    $region2: #{network_forward.1} parent=1 // pred_check
      _
    $region3: #{network_forward.1} parent=1 // pred_check_branch
      %28 = sbr.rel (0) target = $region5
    $region4: #{network_forward.1} parent=1 // pred_region
      _
    $region5: #{network_forward.1} parent=1 // pred_fallthru
      _
    // Predicated region
    $region6: #{network_forward.1} parent=1 // pred_check
      _
    $region7: #{network_forward.1} parent=1 // pred_check_branch
      %30 = sbr.rel (0) target = $region9
    $region8: #{network_forward.1} parent=1 // pred_region
      _
    $region9: #{network_forward.1} parent=1 // pred_fallthru
      _
    // Predicated region
    $region10: #{network_forward.1} parent=1 // pred_check
      _
    $region11: #{network_forward.1} parent=1 // pred_check_branch
      %32 = sbr.rel (0) target = $region13
    $region12: #{network_forward.1} parent=1 // pred_region
      _
    $region13: #{network_forward.1} parent=1 // pred_fallthru
      _
    // Predicated region
    $region14: #{network_forward.1} parent=1 // pred_check
      _
    $region15: #{network_forward.1} parent=1 // pred_check_branch
      %34 = sbr.rel (0) target = $region17
    $region16: #{network_forward.1} parent=1 // pred_region
      _
    $region17: #{network_forward.1} parent=1 // pred_fallthru
      _
    // Predicated region
    $region18: #{network_forward.1} parent=1 // pred_check
      _
    $region19: #{network_forward.1} parent=1 // pred_check_branch
      %36 = sbr.rel (0) target = $region21
    $region20: #{network_forward.1} parent=1 // pred_region
      %s38 = ssub.s32 12288, 12288
      %39 = vsyncadd [#allocation3], %s38
      %s40 = sshll.u32 [#allocation2], 4
      %s41 = int_to_ptr.vmem [resolvable:$true] %s40
      %46 = dma.hbm_to_vmem [thread:$0]  %s4, 12288, %s41, [#allocation3], 384, 384, 24
    $region21: #{network_forward.1} parent=1 // pred_fallthru
      _
    // Predicated region
    $region22: #{network_forward.1} parent=1 // pred_check
      _
    $region23: #{network_forward.1} parent=1 // pred_check_branch
      %48 = sbr.rel (0) target = $region25
    $region24: #{network_forward.1} parent=1 // pred_region
      _
    $region25: #{network_forward.1} parent=1 // pred_fallthru
      _
    // Predicated region
    $region26: #{network_forward.1} parent=1 // pred_check
      _
    $region27: #{network_forward.1} parent=1 // pred_check_branch
      %50 = sbr.rel (0) target = $region29
    $region28: #{network_forward.1} parent=1 // pred_region
      %s52 = ssub.s32 4096, 4096
      %53 = vsyncadd [#allocation6], %s52
      %s54 = sshll.u32 [#allocation5], 4
      %s55 = int_to_ptr.vmem [resolvable:$true] %s54
      %60 = dma.hbm_to_vmem [thread:$0]  %s6, 4096, %s55, [#allocation6], 64, 64, 4
    $region29: #{network_forward.1} parent=1 // pred_fallthru
      _
    // Predicated region
    $region30: #{network_forward.1} parent=1 // pred_check
      _
    $region31: #{network_forward.1} parent=1 // pred_check_branch
      %62 = sbr.rel (0) target = $region33
    $region32: #{network_forward.1} parent=1 // pred_region
      _
    $region33: #{network_forward.1} parent=1 // pred_fallthru
      _
    // Predicated region
    $region34: #{network_forward.1} parent=1 // pred_check
      _
    $region35: #{network_forward.1} parent=1 // pred_check_branch
      %64 = sbr.rel (0) target = $region37
    $region36: #{network_forward.1} parent=1 // pred_region
      _
    $region37: #{network_forward.1} parent=1 // pred_fallthru
      _
    // Predicated region
    $region38: #{network_forward.1} parent=1 // pred_check
      _
    $region39: #{network_forward.1} parent=1 // pred_check_branch
      %66 = sbr.rel (0) target = $region41
    $region40: #{network_forward.1} parent=1 // pred_region
      _
    $region41: #{network_forward.1} parent=1 // pred_fallthru
      _
    // Predicated region
    $region42: #{network_forward.1} parent=1 // pred_check
      _
    $region43: #{network_forward.1} parent=1 // pred_check_branch
      %68 = sbr.rel (0) target = $region45
    $region44: #{network_forward.1} parent=1 // pred_region
      _
    $region45: #{network_forward.1} parent=1 // pred_fallthru
      _
    // Predicated region
    $region46: #{network_forward.1} parent=1 // pred_check
      _
    $region47: #{network_forward.1} parent=1 // pred_check_branch
      %70 = sbr.rel (0) target = $region49
    $region48: #{network_forward.1} parent=1 // pred_region
      %s72 = ssub.s32 2048, 2048
      %73 = vsyncadd [#allocation6], %s72
      %s74 = sshll.u32 [#allocation7], 4
      %s75 = int_to_ptr.vmem [resolvable:$true] %s74
      %80 = dma.hbm_to_vmem [thread:$0]  %s11, 2048, %s75, [#allocation6], 64, 64, 4
    $region49: #{network_forward.1} parent=1 // pred_fallthru
      _
    // Predicated region
    $region50: #{network_forward.1} parent=1 // pred_check
      _
    $region51: #{network_forward.1} parent=1 // pred_check_branch
      %82 = sbr.rel (0) target = $region53
    $region52: #{network_forward.1} parent=1 // pred_region
      _
    $region53: #{network_forward.1} parent=1 // pred_fallthru
      _
    // Predicated region
    $region54: #{network_forward.1} parent=1 // pred_check
      _
    $region55: #{network_forward.1} parent=1 // pred_check_branch
      %84 = sbr.rel (0) target = $region57
    $region56: #{network_forward.1} parent=1 // pred_region
      %s86 = ssub.s32 1024, 1024
      %87 = vsyncadd [#allocation9], %s86
      %s88 = sshll.u32 [#allocation8], 4
      %s89 = int_to_ptr.vmem [resolvable:$true] %s88
      %94 = dma.hbm_to_vmem [thread:$0]  %s13, 1024, %s89, [#allocation9], 64, 64, 4
    $region57: #{network_forward.1} parent=1 // pred_fallthru
      _
    // Predicated region
    $region58: #{network_forward.1} parent=1 // pred_check
      _
    $region59: #{network_forward.1} parent=1 // pred_check_branch
      %96 = sbr.rel (0) target = $region61
    $region60: #{network_forward.1} parent=1 // pred_region
      _
    $region61: #{network_forward.1} parent=1 // pred_fallthru
      _
    // Predicated region
    $region62: #{network_forward.1} parent=1 // pred_check
      _
    $region63: #{network_forward.1} parent=1 // pred_check_branch
      %98 = sbr.rel (0) target = $region65
    $region64: #{network_forward.1} parent=1 // pred_region
      %99 = dma.done [#allocation3], 12288
    $region65: #{network_forward.1} parent=1 // pred_fallthru
      _
    // Predicated region
    $region66: #{network_forward.1} parent=1 // pred_check
      _
    $region67: #{network_forward.1} parent=1 // pred_check_branch
      %101 = sbr.rel (0) target = $region69
    $region68: #{network_forward.1} parent=1 // pred_region
      %102 = dma.done [#allocation6], 4096
    $region69: #{network_forward.1} parent=1 // pred_fallthru
      _
    // Predicated region
    $region70: #{network_forward.1} parent=1 // pred_check
      _
    $region71: #{network_forward.1} parent=1 // pred_check_branch
      %104 = sbr.rel (0) target = $region73
    $region72: #{network_forward.1} parent=1 // pred_region
      %105 = dma.done [#allocation6], 2048
    $region73: #{network_forward.1} parent=1 // pred_fallthru
      _
    // Predicated region
    $region74: #{network_forward.1} parent=1 // pred_check
      _
    $region75: #{network_forward.1} parent=1 // pred_check_branch
      %107 = sbr.rel (0) target = $region77
    $region76: #{network_forward.1} parent=1 // pred_region
      %108 = dma.done [#allocation9], 1024
    $region77: #{network_forward.1} parent=1 // pred_fallthru
      _
    %v110 = vlaneseq
    %v111 = vand.u32 %v110, 127
    %vm112 = vcmp.lt.s32.totalorder %v111, 32
    %v113 = vsel %vm112, 1, 0
    %v114 = vcvt.s32.f32 %v113
    %v115 = vld [vmem:[%s0] sm:$0xf]
    %v116 = vld [vmem:[%s0 + $0x4] sm:$0xf]
    %v117 = vld [vmem:[%s0 + $0x8] sm:$0xf]
    %v118 = vld [vmem:[%s0 + $0xc] sm:$0xf]
    %v119 = vld [vmem:[%s1] sm:$0xf]
    %v120 = vld [vmem:[%s1 + $0x4] sm:$0xf]
    %v121 = vld [vmem:[%s1 + $0x8] sm:$0xf]
    %v122 = vld [vmem:[%s1 + $0xc] sm:$0xf]
    %v123 = vld [vmem:[%s1 + $0x10] sm:$0xf]
    %v124 = vld [vmem:[%s1 + $0x14] sm:$0xf]
    %v125 = vld [vmem:[%s1 + $0x18] sm:$0xf]
    %v126 = vld [vmem:[%s1 + $0x1c] sm:$0xf]
    %v127 = vld [vmem:[%s1 + $0x20] sm:$0xf]
    %v128 = vld [vmem:[%s1 + $0x24] sm:$0xf]
    %v129 = vld [vmem:[%s1 + $0x28] sm:$0xf]
    %v130 = vld [vmem:[%s1 + $0x2c] sm:$0xf]
    %v131 = vld [vmem:[%s1 + $0x30] sm:$0xf]
    %v132 = vld [vmem:[%s1 + $0x34] sm:$0xf]
    %v133 = vld [vmem:[%s1 + $0x38] sm:$0xf]
    %v134 = vld [vmem:[%s1 + $0x3c] sm:$0xf]
    %v135 = vld [vmem:[%s2] sm:$0x1]
    %v137 = vlaneseq
    %v138 = vshrl.u32 %v137, 7
    %v139 = vsub.s32 0, %v138
    %v140 = vrot.slane %v135, %v139
    %v146 = vunpack.c.l.b16 %v115
    %v147 = vunpack.c.l.b16 %v116
    %v148 = vunpack.c.l.b16 %v117
    %v149 = vunpack.c.l.b16 %v118
    %v150 = vpack.c.b16 %v147, %v146
    %v151 = vpack.c.b16 %v149, %v148
    %v170 = vunpack.c.l.b16 %v119
    %v171 = vunpack.c.l.b16 %v120
    %v172 = vunpack.c.l.b16 %v121
    %v173 = vunpack.c.l.b16 %v122
    %v174 = vunpack.c.l.b16 %v123
    %v175 = vunpack.c.l.b16 %v124
    %v176 = vunpack.c.l.b16 %v125
    %v177 = vunpack.c.l.b16 %v126
    %v178 = vunpack.c.l.b16 %v127
    %v179 = vunpack.c.l.b16 %v128
    %v180 = vunpack.c.l.b16 %v129
    %v181 = vunpack.c.l.b16 %v130
    %v182 = vunpack.c.l.b16 %v131
    %v183 = vunpack.c.l.b16 %v132
    %v184 = vunpack.c.l.b16 %v133
    %v185 = vunpack.c.l.b16 %v134
    %v186 = vpack.c.b16 %v171, %v170
    %v187 = vpack.c.b16 %v173, %v172
    %v188 = vpack.c.b16 %v175, %v174
    %v189 = vpack.c.b16 %v177, %v176
    %v190 = vpack.c.b16 %v179, %v178
    %v191 = vpack.c.b16 %v181, %v180
    %v192 = vpack.c.b16 %v183, %v182
    %v193 = vpack.c.b16 %v185, %v184
    %202 = vmatprep.subr.bf16.mxu0 0
    %203 = vmatpush1.bf16.msra.mxu0 %v186
    %204 = vmatprep.subr.bf16.mxu0 0
    %205 = vmatpush1.bf16.msra.mxu0 %v187
    %206 = vmatprep.subr.bf16.mxu0 0
    %207 = vmatpush1.bf16.msra.mxu0 %v188
    %208 = vmatprep.subr.bf16.mxu0 0
    %209 = vmatpush1.bf16.msra.mxu0 %v189
    %210 = vmatprep.subr.bf16.mxu0 0
    %211 = vmatpush1.bf16.msra.mxu0 %v190
    %212 = vmatprep.subr.bf16.mxu0 0
    %213 = vmatpush1.bf16.msra.mxu0 %v191
    %214 = vmatprep.subr.bf16.mxu0 0
    %215 = vmatpush1.bf16.msra.mxu0 %v192
    %216 = vmatprep.subr.bf16.mxu0 0
    %217 = vmatpush1.bf16.msra.mxu0 %v193
    %218 = vmatprep.subr.bf16.mxu0 0
    %219 = vmatpush1.bf16.msra.mxu0 0
    %220 = vmatprep.subr.bf16.mxu0 0
    %221 = vmatpush1.bf16.msra.mxu0 0
    %222 = vmatprep.subr.bf16.mxu0 0
    %223 = vmatpush1.bf16.msra.mxu0 0
    %224 = vmatprep.subr.bf16.mxu0 0
    %225 = vmatpush1.bf16.msra.mxu0 0
    %226 = vmatprep.subr.bf16.mxu0 0
    %227 = vmatpush1.bf16.msra.mxu0 0
    %228 = vmatprep.subr.bf16.mxu0 0
    %229 = vmatpush1.bf16.msra.mxu0 0
    %230 = vmatprep.subr.bf16.mxu0 0
    %231 = vmatpush1.bf16.msra.mxu0 0
    %232 = vmatprep.subr.bf16.mxu0 0
    %233 = vmatpush1.bf16.msra.mxu0 0
    %234 = vmatprep.mubr.bf16.mxu0 0
    %235 = vmatmul.mubr.bf16.gmra.mrb[0].mxu0 %v150
    %v236 = vpop.f32.mrb[0].mxu0
    %v237 = vadd.f32 %v140, %v236
    %v238 = vpop.f32.mrb[0].mxu0
    %v239 = vpop.f32.mrb[0].mxu0
    %v240 = vadd.f32 %v140, %v239
    %v241 = vpop.f32.mrb[0].mxu0
    %242 = vmatprep.mubr.bf16.mxu0 0
    %243 = vmatmul.mubr.bf16.gmra.mrb[0].mxu0 %v151
    %v244 = vpop.f32.mrb[0].mxu0
    %v245 = vadd.f32 %v140, %v244
    %v246 = vpop.f32.mrb[0].mxu0
    %v247 = vpop.f32.mrb[0].mxu0
    %v248 = vadd.f32 %v140, %v247
    %v249 = vpop.f32.mrb[0].mxu0
    %250 = vdwg.mxu0
    %v251 = vmax.f32 %v237, 0.0
    %v252 = vmax.f32 %v240, 0.0
    %v253 = vmax.f32 %v245, 0.0
    %v254 = vmax.f32 %v248, 0.0
    %v255 = vld [vmem:[%s3] sm:$0x3]
    %256 = vadd.xlane.f32.xlu0 %v251
    %v257 = vpop.xlane.xlu0 %256
    %258 = vadd.xlane.f32.xlu0 %v252
    %v259 = vpop.xlane.xlu0 %258
    %260 = vadd.xlane.f32.xlu0 %v253
    %v261 = vpop.xlane.xlu0 %260
    %262 = vadd.xlane.f32.xlu0 %v254
    %v263 = vpop.xlane.xlu0 %262
    %v264 = vmul.f32 %v257, 0.03125
    %v265 = vmul.f32 %v259, 0.03125
    %v266 = vmul.f32 %v261, 0.03125
    %v267 = vmul.f32 %v263, 0.03125
    %v268 = vsub.f32 %v251, %v264
    %v269 = vsub.f32 %v252, %v265
    %v270 = vsub.f32 %v253, %v266
    %v271 = vsub.f32 %v254, %v267
    %v272 = vmul.f32 %v268, %v268
    %v273 = vmul.f32 %v269, %v269
    %v274 = vmul.f32 %v270, %v270
    %v275 = vmul.f32 %v271, %v271
    %v276 = vmul.f32 %v272, %v114
    %v277 = vmul.f32 %v273, %v114
    %v278 = vmul.f32 %v274, %v114
    %v279 = vmul.f32 %v275, %v114
    %280 = vadd.xlane.f32.xlu0 %v276
    %v281 = vpop.xlane.xlu0 %280
    %282 = vadd.xlane.f32.xlu0 %v277
    %v283 = vpop.xlane.xlu0 %282
    %284 = vadd.xlane.f32.xlu0 %v278
    %v285 = vpop.xlane.xlu0 %284
    %286 = vadd.xlane.f32.xlu0 %v279
    %v287 = vpop.xlane.xlu0 %286
    %v288 = vmul.f32 %v281, 0.03125
    %v289 = vmul.f32 %v283, 0.03125
    %v290 = vmul.f32 %v285, 0.03125
    %v291 = vmul.f32 %v287, 0.03125
    %v292 = vadd.f32 %v288, 1e-05
    %v293 = vadd.f32 %v289, 1e-05
    %v294 = vadd.f32 %v290, 1e-05
    %v295 = vadd.f32 %v291, 1e-05
    %v296 = vrsqrt.pop %v292
    %v297 = vrsqrt.pop %v293
    %v298 = vrsqrt.pop %v294
    %v299 = vrsqrt.pop %v295
    %v300 = vmul.f32 %v268, %v296
    %v301 = vmul.f32 %v269, %v297
    %v302 = vmul.f32 %v270, %v298
    %v303 = vmul.f32 %v271, %v299
    %v304 = vlaneseq
    %v305 = vshrl.u32 %v304, 7
    %v306 = vsub.s32 0, %v305
    %v307 = vrot.slane %v255, %v306
    %v308 = vmul.f32 %v300, %v307
    %v309 = vmul.f32 %v301, %v307
    %v310 = vmul.f32 %v302, %v307
    %v311 = vmul.f32 %v303, %v307
    %v312 = vlaneseq
    %v313 = vshrl.u32 %v312, 7
    %v314 = vsub.s32 1, %v313
    %v315 = vrot.slane %v255, %v314
    %v316 = vadd.f32 %v308, %v315
    %v317 = vadd.f32 %v309, %v315
    %v318 = vadd.f32 %v310, %v315
    %v319 = vadd.f32 %v311, %v315
    %v320 = vld [vmem:[#allocation2] sm:$0xff]
    %v321 = vld [vmem:[#allocation2 + $0x8] sm:$0xff]
    %v322 = vld [vmem:[#allocation2 + $0x10] sm:$0xff]
    %v323 = vld [vmem:[#allocation2 + $0x18] sm:$0xff]
    %v324 = vld [vmem:[#allocation2 + $0x20] sm:$0xff]
    %v325 = vld [vmem:[#allocation2 + $0x28] sm:$0xff]
    %v326 = vld [vmem:[#allocation2 + $0x30] sm:$0xff]
    %v327 = vld [vmem:[#allocation2 + $0x38] sm:$0xff]
    %v328 = vld [vmem:[#allocation2 + $0x40] sm:$0xff]
    %v329 = vld [vmem:[#allocation2 + $0x48] sm:$0xff]
    %v330 = vld [vmem:[#allocation2 + $0x50] sm:$0xff]
    %v331 = vld [vmem:[#allocation2 + $0x58] sm:$0xff]
    %v332 = vld [vmem:[#allocation2 + $0x60] sm:$0xff]
    %v333 = vld [vmem:[#allocation2 + $0x68] sm:$0xff]
    %v334 = vld [vmem:[#allocation2 + $0x70] sm:$0xff]
    %v335 = vld [vmem:[#allocation2 + $0x78] sm:$0xff]
    %v336 = vld [vmem:[#allocation2 + $0x80] sm:$0xff]
    %v337 = vld [vmem:[#allocation2 + $0x88] sm:$0xff]
    %v338 = vld [vmem:[#allocation2 + $0x90] sm:$0xff]
    %v339 = vld [vmem:[#allocation2 + $0x98] sm:$0xff]
    %v340 = vld [vmem:[#allocation2 + $0xa0] sm:$0xff]
    %v341 = vld [vmem:[#allocation2 + $0xa8] sm:$0xff]
    %v342 = vld [vmem:[#allocation2 + $0xb0] sm:$0xff]
    %v343 = vld [vmem:[#allocation2 + $0xb8] sm:$0xff]
    %v344 = vld [vmem:[#allocation2 + $0xc0] sm:$0xff]
    %v345 = vld [vmem:[#allocation2 + $0xc8] sm:$0xff]
    %v346 = vld [vmem:[#allocation2 + $0xd0] sm:$0xff]
    %v347 = vld [vmem:[#allocation2 + $0xd8] sm:$0xff]
    %v348 = vld [vmem:[#allocation2 + $0xe0] sm:$0xff]
    %v349 = vld [vmem:[#allocation2 + $0xe8] sm:$0xff]
    %v350 = vld [vmem:[#allocation2 + $0xf0] sm:$0xff]
    %v351 = vld [vmem:[#allocation2 + $0xf8] sm:$0xff]
    %v352 = vld [vmem:[#allocation2 + $0x100] sm:$0xff]
    %v353 = vld [vmem:[#allocation2 + $0x108] sm:$0xff]
    %v354 = vld [vmem:[#allocation2 + $0x110] sm:$0xff]
    %v355 = vld [vmem:[#allocation2 + $0x118] sm:$0xff]
    %v356 = vld [vmem:[#allocation2 + $0x120] sm:$0xff]
    %v357 = vld [vmem:[#allocation2 + $0x128] sm:$0xff]
    %v358 = vld [vmem:[#allocation2 + $0x130] sm:$0xff]
    %v359 = vld [vmem:[#allocation2 + $0x138] sm:$0xff]
    %v360 = vld [vmem:[#allocation2 + $0x140] sm:$0xff]
    %v361 = vld [vmem:[#allocation2 + $0x148] sm:$0xff]
    %v362 = vld [vmem:[#allocation2 + $0x150] sm:$0xff]
    %v363 = vld [vmem:[#allocation2 + $0x158] sm:$0xff]
    %v364 = vld [vmem:[#allocation2 + $0x160] sm:$0xff]
    %v365 = vld [vmem:[#allocation2 + $0x168] sm:$0xff]
    %v366 = vld [vmem:[#allocation2 + $0x170] sm:$0xff]
    %v367 = vld [vmem:[#allocation2 + $0x178] sm:$0xff]
    %v368 = vpack.c.bf16 %v317, %v316
    %v369 = vpack.c.bf16 %v319, %v318
    %v370 = vld [vmem:[%s5] sm:$0x3f]
    %v372 = vlaneseq
    %v373 = vshrl.u32 %v372, 7
    %v374 = vsub.s32 0, %v373
    %v375 = vrot.slane %v370, %v374
    %v376 = vlaneseq
    %v377 = vshrl.u32 %v376, 7
    %v378 = vsub.s32 1, %v377
    %v379 = vrot.slane %v370, %v378
    %v380 = vlaneseq
    %v381 = vshrl.u32 %v380, 7
    %v382 = vsub.s32 2, %v381
    %v383 = vrot.slane %v370, %v382
    %v384 = vlaneseq
    %v385 = vshrl.u32 %v384, 7
    %v386 = vsub.s32 3, %v385
    %v387 = vrot.slane %v370, %v386
    %v388 = vlaneseq
    %v389 = vshrl.u32 %v388, 7
    %v390 = vsub.s32 4, %v389
    %v391 = vrot.slane %v370, %v390
    %v392 = vlaneseq
    %v393 = vshrl.u32 %v392, 7
    %v394 = vsub.s32 5, %v393
    %v395 = vrot.slane %v370, %v394
    %v450 = vunpack.c.l.b16 %v320
    %v451 = vunpack.c.h.b16 %v320
    %v452 = vunpack.c.l.b16 %v321
    %v453 = vunpack.c.h.b16 %v321
    %v454 = vunpack.c.l.b16 %v322
    %v455 = vunpack.c.h.b16 %v322
    %v456 = vunpack.c.l.b16 %v323
    %v457 = vunpack.c.h.b16 %v323
    %v458 = vunpack.c.l.b16 %v324
    %v459 = vunpack.c.h.b16 %v324
    %v460 = vunpack.c.l.b16 %v325
    %v461 = vunpack.c.h.b16 %v325
    %v462 = vunpack.c.l.b16 %v326
    %v463 = vunpack.c.h.b16 %v326
    %v464 = vunpack.c.l.b16 %v327
    %v465 = vunpack.c.h.b16 %v327
    %v466 = vunpack.c.l.b16 %v328
    %v467 = vunpack.c.h.b16 %v328
    %v468 = vunpack.c.l.b16 %v329
    %v469 = vunpack.c.h.b16 %v329
    %v470 = vunpack.c.l.b16 %v330
    %v471 = vunpack.c.h.b16 %v330
    %v472 = vunpack.c.l.b16 %v331
    %v473 = vunpack.c.h.b16 %v331
    %v474 = vunpack.c.l.b16 %v332
    %v475 = vunpack.c.h.b16 %v332
    %v476 = vunpack.c.l.b16 %v333
    %v477 = vunpack.c.h.b16 %v333
    %v478 = vunpack.c.l.b16 %v334
    %v479 = vunpack.c.h.b16 %v334
    %v480 = vunpack.c.l.b16 %v335
    %v481 = vunpack.c.h.b16 %v335
    %v482 = vunpack.c.l.b16 %v336
    %v483 = vunpack.c.h.b16 %v336
    %v484 = vunpack.c.l.b16 %v337
    %v485 = vunpack.c.h.b16 %v337
    %v486 = vunpack.c.l.b16 %v338
    %v487 = vunpack.c.h.b16 %v338
    %v488 = vunpack.c.l.b16 %v339
    %v489 = vunpack.c.h.b16 %v339
    %v490 = vunpack.c.l.b16 %v340
    %v491 = vunpack.c.h.b16 %v340
    %v492 = vunpack.c.l.b16 %v341
    %v493 = vunpack.c.h.b16 %v341
    %v494 = vunpack.c.l.b16 %v342
    %v495 = vunpack.c.h.b16 %v342
    %v496 = vunpack.c.l.b16 %v343
    %v497 = vunpack.c.h.b16 %v343
    %v498 = vunpack.c.l.b16 %v344
    %v499 = vunpack.c.h.b16 %v344
    %v500 = vunpack.c.l.b16 %v345
    %v501 = vunpack.c.h.b16 %v345
    %v502 = vunpack.c.l.b16 %v346
    %v503 = vunpack.c.h.b16 %v346
    %v504 = vunpack.c.l.b16 %v347
    %v505 = vunpack.c.h.b16 %v347
    %v506 = vunpack.c.l.b16 %v348
    %v507 = vunpack.c.h.b16 %v348
    %v508 = vunpack.c.l.b16 %v349
    %v509 = vunpack.c.h.b16 %v349
    %v510 = vunpack.c.l.b16 %v350
    %v511 = vunpack.c.h.b16 %v350
    %v512 = vunpack.c.l.b16 %v351
    %v513 = vunpack.c.h.b16 %v351
    %v514 = vunpack.c.l.b16 %v352
    %v515 = vunpack.c.h.b16 %v352
    %v516 = vunpack.c.l.b16 %v353
    %v517 = vunpack.c.h.b16 %v353
    %v518 = vunpack.c.l.b16 %v354
    %v519 = vunpack.c.h.b16 %v354
    %v520 = vunpack.c.l.b16 %v355
    %v521 = vunpack.c.h.b16 %v355
    %v522 = vunpack.c.l.b16 %v356
    %v523 = vunpack.c.h.b16 %v356
    %v524 = vunpack.c.l.b16 %v357
    %v525 = vunpack.c.h.b16 %v357
    %v526 = vunpack.c.l.b16 %v358
    %v527 = vunpack.c.h.b16 %v358
    %v528 = vunpack.c.l.b16 %v359
    %v529 = vunpack.c.h.b16 %v359
    %v530 = vunpack.c.l.b16 %v360
    %v531 = vunpack.c.h.b16 %v360
    %v532 = vunpack.c.l.b16 %v361
    %v533 = vunpack.c.h.b16 %v361
    %v534 = vunpack.c.l.b16 %v362
    %v535 = vunpack.c.h.b16 %v362
    %v536 = vunpack.c.l.b16 %v363
    %v537 = vunpack.c.h.b16 %v363
    %v538 = vunpack.c.l.b16 %v364
    %v539 = vunpack.c.h.b16 %v364
    %v540 = vunpack.c.l.b16 %v365
    %v541 = vunpack.c.h.b16 %v365
    %v542 = vunpack.c.l.b16 %v366
    %v543 = vunpack.c.h.b16 %v366
    %v544 = vunpack.c.l.b16 %v367
    %v545 = vunpack.c.h.b16 %v367
    %v546 = vpack.c.b16 %v456, %v450
    %v547 = vpack.c.b16 %v457, %v451
    %v548 = vpack.c.b16 %v458, %v452
    %v549 = vpack.c.b16 %v459, %v453
    %v550 = vpack.c.b16 %v460, %v454
    %v551 = vpack.c.b16 %v461, %v455
    %v552 = vpack.c.b16 %v468, %v462
    %v553 = vpack.c.b16 %v469, %v463
    %v554 = vpack.c.b16 %v470, %v464
    %v555 = vpack.c.b16 %v471, %v465
    %v556 = vpack.c.b16 %v472, %v466
    %v557 = vpack.c.b16 %v473, %v467
    %v558 = vpack.c.b16 %v480, %v474
    %v559 = vpack.c.b16 %v481, %v475
    %v560 = vpack.c.b16 %v482, %v476
    %v561 = vpack.c.b16 %v483, %v477
    %v562 = vpack.c.b16 %v484, %v478
    %v563 = vpack.c.b16 %v485, %v479
    %v564 = vpack.c.b16 %v492, %v486
    %v565 = vpack.c.b16 %v493, %v487
    %v566 = vpack.c.b16 %v494, %v488
    %v567 = vpack.c.b16 %v495, %v489
    %v568 = vpack.c.b16 %v496, %v490
    %v569 = vpack.c.b16 %v497, %v491
    %v570 = vpack.c.b16 %v504, %v498
    %v571 = vpack.c.b16 %v505, %v499
    %v572 = vpack.c.b16 %v506, %v500
    %v573 = vpack.c.b16 %v507, %v501
    %v574 = vpack.c.b16 %v508, %v502
    %v575 = vpack.c.b16 %v509, %v503
    %v576 = vpack.c.b16 %v516, %v510
    %v577 = vpack.c.b16 %v517, %v511
    %v578 = vpack.c.b16 %v518, %v512
    %v579 = vpack.c.b16 %v519, %v513
    %v580 = vpack.c.b16 %v520, %v514
    %v581 = vpack.c.b16 %v521, %v515
    %v582 = vpack.c.b16 %v528, %v522
    %v583 = vpack.c.b16 %v529, %v523
    %v584 = vpack.c.b16 %v530, %v524
    %v585 = vpack.c.b16 %v531, %v525
    %v586 = vpack.c.b16 %v532, %v526
    %v587 = vpack.c.b16 %v533, %v527
    %v588 = vpack.c.b16 %v540, %v534
    %v589 = vpack.c.b16 %v541, %v535
    %v590 = vpack.c.b16 %v542, %v536
    %v591 = vpack.c.b16 %v543, %v537
    %v592 = vpack.c.b16 %v544, %v538
    %v593 = vpack.c.b16 %v545, %v539
    %642 = vmatprep.subr.bf16.mxu0 %v547
    %643 = vmatpush1.bf16.msra.mxu0 %v546
    %644 = vmatprep.subr.bf16.mxu0 %v553
    %645 = vmatpush1.bf16.msra.mxu0 %v552
    %646 = vmatprep.subr.bf16.mxu0 %v559
    %647 = vmatpush1.bf16.msra.mxu0 %v558
    %648 = vmatprep.subr.bf16.mxu0 %v565
    %649 = vmatpush1.bf16.msra.mxu0 %v564
    %650 = vmatprep.subr.bf16.mxu0 %v571
    %651 = vmatpush1.bf16.msra.mxu0 %v570
    %652 = vmatprep.subr.bf16.mxu0 %v577
    %653 = vmatpush1.bf16.msra.mxu0 %v576
    %654 = vmatprep.subr.bf16.mxu0 %v583
    %655 = vmatpush1.bf16.msra.mxu0 %v582
    %656 = vmatprep.subr.bf16.mxu0 %v589
    %657 = vmatpush1.bf16.msra.mxu0 %v588
    %658 = vmatprep.subr.bf16.mxu0 0
    %659 = vmatpush1.bf16.msra.mxu0 0
    %660 = vmatprep.subr.bf16.mxu0 0
    %661 = vmatpush1.bf16.msra.mxu0 0
    %662 = vmatprep.subr.bf16.mxu0 0
    %663 = vmatpush1.bf16.msra.mxu0 0
    %664 = vmatprep.subr.bf16.mxu0 0
    %665 = vmatpush1.bf16.msra.mxu0 0
    %666 = vmatprep.subr.bf16.mxu0 0
    %667 = vmatpush1.bf16.msra.mxu0 0
    %668 = vmatprep.subr.bf16.mxu0 0
    %669 = vmatpush1.bf16.msra.mxu0 0
    %670 = vmatprep.subr.bf16.mxu0 0
    %671 = vmatpush1.bf16.msra.mxu0 0
    %672 = vmatprep.subr.bf16.mxu0 0
    %673 = vmatpush1.bf16.msra.mxu0 0
    %674 = vmatprep.mubr.bf16.mxu0 0
    %675 = vmatmul.mubr.bf16.gmra.mrb[0].mxu0 %v368
    %v676 = vpop.f32.mrb[0].mxu0
    %v677 = vadd.f32 %v375, %v676
    %v678 = vpop.f32.mrb[0].mxu0
    %v679 = vadd.f32 %v379, %v678
    %v680 = vpop.f32.mrb[0].mxu0
    %v681 = vadd.f32 %v375, %v680
    %v682 = vpop.f32.mrb[0].mxu0
    %v683 = vadd.f32 %v379, %v682
    %684 = vmatprep.mubr.bf16.mxu0 0
    %685 = vmatmul.mubr.bf16.gmra.mrb[0].mxu0 %v369
    %v686 = vpop.f32.mrb[0].mxu0
    %v687 = vadd.f32 %v375, %v686
    %v688 = vpop.f32.mrb[0].mxu0
    %v689 = vadd.f32 %v379, %v688
    %v690 = vpop.f32.mrb[0].mxu0
    %v691 = vadd.f32 %v375, %v690
    %v692 = vpop.f32.mrb[0].mxu0
    %v693 = vadd.f32 %v379, %v692
    %694 = vdwg.mxu0
    %695 = vmatprep.subr.bf16.mxu0 %v549
    %696 = vmatpush1.bf16.msra.mxu0 %v548
    %697 = vmatprep.subr.bf16.mxu0 %v555
    %698 = vmatpush1.bf16.msra.mxu0 %v554
    %699 = vmatprep.subr.bf16.mxu0 %v561
    %700 = vmatpush1.bf16.msra.mxu0 %v560
    %701 = vmatprep.subr.bf16.mxu0 %v567
    %702 = vmatpush1.bf16.msra.mxu0 %v566
    %703 = vmatprep.subr.bf16.mxu0 %v573
    %704 = vmatpush1.bf16.msra.mxu0 %v572
    %705 = vmatprep.subr.bf16.mxu0 %v579
    %706 = vmatpush1.bf16.msra.mxu0 %v578
    %707 = vmatprep.subr.bf16.mxu0 %v585
    %708 = vmatpush1.bf16.msra.mxu0 %v584
    %709 = vmatprep.subr.bf16.mxu0 %v591
    %710 = vmatpush1.bf16.msra.mxu0 %v590
    %711 = vmatprep.subr.bf16.mxu0 0
    %712 = vmatpush1.bf16.msra.mxu0 0
    %713 = vmatprep.subr.bf16.mxu0 0
    %714 = vmatpush1.bf16.msra.mxu0 0
    %715 = vmatprep.subr.bf16.mxu0 0
    %716 = vmatpush1.bf16.msra.mxu0 0
    %717 = vmatprep.subr.bf16.mxu0 0
    %718 = vmatpush1.bf16.msra.mxu0 0
    %719 = vmatprep.subr.bf16.mxu0 0
    %720 = vmatpush1.bf16.msra.mxu0 0
    %721 = vmatprep.subr.bf16.mxu0 0
    %722 = vmatpush1.bf16.msra.mxu0 0
    %723 = vmatprep.subr.bf16.mxu0 0
    %724 = vmatpush1.bf16.msra.mxu0 0
    %725 = vmatprep.subr.bf16.mxu0 0
    %726 = vmatpush1.bf16.msra.mxu0 0
    %727 = vmatprep.mubr.bf16.mxu0 0
    %728 = vmatmul.mubr.bf16.gmra.mrb[0].mxu0 %v368
    %v729 = vpop.f32.mrb[0].mxu0
    %v730 = vadd.f32 %v383, %v729
    %v731 = vpop.f32.mrb[0].mxu0
    %v732 = vadd.f32 %v387, %v731
    %v733 = vpop.f32.mrb[0].mxu0
    %v734 = vadd.f32 %v383, %v733
    %v735 = vpop.f32.mrb[0].mxu0
    %v736 = vadd.f32 %v387, %v735
    %737 = vmatprep.mubr.bf16.mxu0 0
    %738 = vmatmul.mubr.bf16.gmra.mrb[0].mxu0 %v369
    %v739 = vpop.f32.mrb[0].mxu0
    %v740 = vadd.f32 %v383, %v739
    %v741 = vpop.f32.mrb[0].mxu0
    %v742 = vadd.f32 %v387, %v741
    %v743 = vpop.f32.mrb[0].mxu0
    %v744 = vadd.f32 %v383, %v743
    %v745 = vpop.f32.mrb[0].mxu0
    %v746 = vadd.f32 %v387, %v745
    %747 = vdwg.mxu0
    %748 = vmatprep.subr.bf16.mxu0 %v551
    %749 = vmatpush1.bf16.msra.mxu0 %v550
    %750 = vmatprep.subr.bf16.mxu0 %v557
    %751 = vmatpush1.bf16.msra.mxu0 %v556
    %752 = vmatprep.subr.bf16.mxu0 %v563
    %753 = vmatpush1.bf16.msra.mxu0 %v562
    %754 = vmatprep.subr.bf16.mxu0 %v569
    %755 = vmatpush1.bf16.msra.mxu0 %v568
    %756 = vmatprep.subr.bf16.mxu0 %v575
    %757 = vmatpush1.bf16.msra.mxu0 %v574
    %758 = vmatprep.subr.bf16.mxu0 %v581
    %759 = vmatpush1.bf16.msra.mxu0 %v580
    %760 = vmatprep.subr.bf16.mxu0 %v587
    %761 = vmatpush1.bf16.msra.mxu0 %v586
    %762 = vmatprep.subr.bf16.mxu0 %v593
    %763 = vmatpush1.bf16.msra.mxu0 %v592
    %764 = vmatprep.subr.bf16.mxu0 0
    %765 = vmatpush1.bf16.msra.mxu0 0
    %766 = vmatprep.subr.bf16.mxu0 0
    %767 = vmatpush1.bf16.msra.mxu0 0
    %768 = vmatprep.subr.bf16.mxu0 0
    %769 = vmatpush1.bf16.msra.mxu0 0
    %770 = vmatprep.subr.bf16.mxu0 0
    %771 = vmatpush1.bf16.msra.mxu0 0
    %772 = vmatprep.subr.bf16.mxu0 0
    %773 = vmatpush1.bf16.msra.mxu0 0
    %774 = vmatprep.subr.bf16.mxu0 0
    %775 = vmatpush1.bf16.msra.mxu0 0
    %776 = vmatprep.subr.bf16.mxu0 0
    %777 = vmatpush1.bf16.msra.mxu0 0
    %778 = vmatprep.subr.bf16.mxu0 0
    %779 = vmatpush1.bf16.msra.mxu0 0
    %780 = vmatprep.mubr.bf16.mxu0 0
    %781 = vmatmul.mubr.bf16.gmra.mrb[0].mxu0 %v368
    %v782 = vpop.f32.mrb[0].mxu0
    %v783 = vadd.f32 %v391, %v782
    %v784 = vpop.f32.mrb[0].mxu0
    %v785 = vadd.f32 %v395, %v784
    %v786 = vpop.f32.mrb[0].mxu0
    %v787 = vadd.f32 %v391, %v786
    %v788 = vpop.f32.mrb[0].mxu0
    %v789 = vadd.f32 %v395, %v788
    %790 = vmatprep.mubr.bf16.mxu0 0
    %791 = vmatmul.mubr.bf16.gmra.mrb[0].mxu0 %v369
    %v792 = vpop.f32.mrb[0].mxu0
    %v793 = vadd.f32 %v391, %v792
    %v794 = vpop.f32.mrb[0].mxu0
    %v795 = vadd.f32 %v395, %v794
    %v796 = vpop.f32.mrb[0].mxu0
    %v797 = vadd.f32 %v391, %v796
    %v798 = vpop.f32.mrb[0].mxu0
    %v799 = vadd.f32 %v395, %v798
    %800 = vdwg.mxu0
    %v801 = vpack.c.bf16 %v681, %v677
    %v802 = vpack.c.bf16 %v691, %v687
    %v803 = vpack.c.bf16 %v734, %v730
    %v804 = vpack.c.bf16 %v744, %v740
    %805 = vmatprep.subr.bf16.mxu0 0
    %806 = vmatpush1.bf16.xpose.msra.mxu0 %v803
    %807 = vmatprep.subr.bf16.mxu0 0
    %808 = vmatpush1.bf16.xpose.msra.mxu0 0
    %809 = vmatprep.subr.bf16.mxu0 0
    %810 = vmatpush1.bf16.xpose.msra.mxu0 0
    %811 = vmatprep.subr.bf16.mxu0 0
    %812 = vmatpush1.bf16.xpose.msra.mxu0 0
    %813 = vmatprep.subr.bf16.mxu0 0
    %814 = vmatpush1.bf16.xpose.msra.mxu0 0
    %815 = vmatprep.subr.bf16.mxu0 0
    %816 = vmatpush1.bf16.xpose.msra.mxu0 0
    %817 = vmatprep.subr.bf16.mxu0 0
    %818 = vmatpush1.bf16.xpose.msra.mxu0 0
    %819 = vmatprep.subr.bf16.mxu0 0
    %820 = vmatpush1.bf16.xpose.msra.mxu0 0
    %821 = vmatprep.subr.bf16.mxu0 0
    %822 = vmatpush1.bf16.xpose.msra.mxu0 0
    %823 = vmatprep.subr.bf16.mxu0 0
    %824 = vmatpush1.bf16.xpose.msra.mxu0 0
    %825 = vmatprep.subr.bf16.mxu0 0
    %826 = vmatpush1.bf16.xpose.msra.mxu0 0
    %827 = vmatprep.subr.bf16.mxu0 0
    %828 = vmatpush1.bf16.xpose.msra.mxu0 0
    %829 = vmatprep.subr.bf16.mxu0 0
    %830 = vmatpush1.bf16.xpose.msra.mxu0 0
    %831 = vmatprep.subr.bf16.mxu0 0
    %832 = vmatpush1.bf16.xpose.msra.mxu0 0
    %833 = vmatprep.subr.bf16.mxu0 0
    %834 = vmatpush1.bf16.xpose.msra.mxu0 0
    %835 = vmatprep.subr.bf16.mxu0 0
    %836 = vmatpush1.bf16.xpose.msra.mxu0 0
    %837 = vmatprep.mubr.bf16.mxu0 0
    %838 = vmatmul.mubr.bf16.gmra.mrb[0].mxu0 %v801
    %v839 = vpop.f32.mrb[0].mxu0
    %v840 = vadd.f32 0.0, %v839
    %v841 = vpop.f32.mrb[0].mxu0
    %v842 = vpop.f32.mrb[0].mxu0
    %v843 = vadd.f32 0.0, %v842
    %v844 = vpop.f32.mrb[0].mxu0
    %845 = vdwg.mxu0
    %846 = vmatprep.subr.bf16.mxu0 0
    %847 = vmatpush1.bf16.xpose.msra.mxu0 %v804
    %848 = vmatprep.subr.bf16.mxu0 0
    %849 = vmatpush1.bf16.xpose.msra.mxu0 0
    %850 = vmatprep.subr.bf16.mxu0 0
    %851 = vmatpush1.bf16.xpose.msra.mxu0 0
    %852 = vmatprep.subr.bf16.mxu0 0
    %853 = vmatpush1.bf16.xpose.msra.mxu0 0
    %854 = vmatprep.subr.bf16.mxu0 0
    %855 = vmatpush1.bf16.xpose.msra.mxu0 0
    %856 = vmatprep.subr.bf16.mxu0 0
    %857 = vmatpush1.bf16.xpose.msra.mxu0 0
    %858 = vmatprep.subr.bf16.mxu0 0
    %859 = vmatpush1.bf16.xpose.msra.mxu0 0
    %860 = vmatprep.subr.bf16.mxu0 0
    %861 = vmatpush1.bf16.xpose.msra.mxu0 0
    %862 = vmatprep.subr.bf16.mxu0 0
    %863 = vmatpush1.bf16.xpose.msra.mxu0 0
    %864 = vmatprep.subr.bf16.mxu0 0
    %865 = vmatpush1.bf16.xpose.msra.mxu0 0
    %866 = vmatprep.subr.bf16.mxu0 0
    %867 = vmatpush1.bf16.xpose.msra.mxu0 0
    %868 = vmatprep.subr.bf16.mxu0 0
    %869 = vmatpush1.bf16.xpose.msra.mxu0 0
    %870 = vmatprep.subr.bf16.mxu0 0
    %871 = vmatpush1.bf16.xpose.msra.mxu0 0
    %872 = vmatprep.subr.bf16.mxu0 0
    %873 = vmatpush1.bf16.xpose.msra.mxu0 0
    %874 = vmatprep.subr.bf16.mxu0 0
    %875 = vmatpush1.bf16.xpose.msra.mxu0 0
    %876 = vmatprep.subr.bf16.mxu0 0
    %877 = vmatpush1.bf16.xpose.msra.mxu0 0
    %878 = vmatprep.mubr.bf16.mxu0 0
    %879 = vmatmul.mubr.bf16.gmra.mrb[0].mxu0 %v802
    %v880 = vpop.f32.mrb[0].mxu0
    %v881 = vadd.f32 0.0, %v880
    %v882 = vpop.f32.mrb[0].mxu0
    %v883 = vpop.f32.mrb[0].mxu0
    %v884 = vadd.f32 0.0, %v883
    %v885 = vpop.f32.mrb[0].mxu0
    %886 = vdwg.mxu0
    %v887 = vmul.f32 %v840, 0.25
    %v888 = vmul.f32 %v843, 0.25
    %v889 = vmul.f32 %v881, 0.25
    %v890 = vmul.f32 %v884, 0.25
    %vm891 = vcmask 130048
    %v892 = vsel %vm891, %v887, -inf
    %893 = vmax.xlane.f32.xlu0 %v892
    %v894 = vpop.xlane.xlu0 %893
    %v895 = vsel %vm891, %v888, -inf
    %896 = vmax.xlane.f32.xlu0 %v895
    %v897 = vpop.xlane.xlu0 %896
    %v898 = vsel %vm891, %v889, -inf
    %899 = vmax.xlane.f32.xlu0 %v898
    %v900 = vpop.xlane.xlu0 %899
    %v901 = vsel %vm891, %v890, -inf
    %902 = vmax.xlane.f32.xlu0 %v901
    %v903 = vpop.xlane.xlu0 %902
    %v904 = vsub.f32 %v887, %v894
    %v905 = vsub.f32 %v888, %v897
    %v906 = vsub.f32 %v889, %v900
    %v907 = vsub.f32 %v890, %v903
    %v908 = vmul.f32 %v904, 1.442695
    %v909 = vpow.pop %v908
    %v910 = vmul.f32 %v905, 1.442695
    %v911 = vpow.pop %v910
    %v912 = vmul.f32 %v906, 1.442695
    %v913 = vpow.pop %v912
    %v914 = vmul.f32 %v907, 1.442695
    %v915 = vpow.pop %v914
    %v916 = vsel %vm891, %v909, 0.0
    %917 = vadd.xlane.f32.xlu0 %v916
    %v918 = vpop.xlane.xlu0 %917
    %v919 = vsel %vm891, %v911, 0.0
    %920 = vadd.xlane.f32.xlu0 %v919
    %v921 = vpop.xlane.xlu0 %920
    %v922 = vsel %vm891, %v913, 0.0
    %923 = vadd.xlane.f32.xlu0 %v922
    %v924 = vpop.xlane.xlu0 %923
    %v925 = vsel %vm891, %v915, 0.0
    %926 = vadd.xlane.f32.xlu0 %v925
    %v927 = vpop.xlane.xlu0 %926
    %v928 = vrcp.pop %v918
    %v929 = vmul.f32 %v909, %v928
    %v930 = vrcp.pop %v921
    %v931 = vmul.f32 %v911, %v930
    %v932 = vrcp.pop %v924
    %v933 = vmul.f32 %v913, %v932
    %v934 = vrcp.pop %v927
    %v935 = vmul.f32 %v915, %v934
    %v936 = vpack.c.bf16 %v931, %v929
    %v937 = vpack.c.bf16 %v935, %v933
    %v938 = vpack.c.bf16 %v787, %v783
    %v939 = vpack.c.bf16 %v797, %v793
    %v941 = vsel %vm891, %v936, 0
    %943 = vmatprep.subr.bf16.mxu0 0
    %944 = vmatpush1.bf16.msra.mxu0 %v938
    %945 = vmatprep.subr.bf16.mxu0 0
    %946 = vmatpush1.bf16.msra.mxu0 0
    %947 = vmatprep.subr.bf16.mxu0 0
    %948 = vmatpush1.bf16.msra.mxu0 0
    %949 = vmatprep.subr.bf16.mxu0 0
    %950 = vmatpush1.bf16.msra.mxu0 0
    %951 = vmatprep.subr.bf16.mxu0 0
    %952 = vmatpush1.bf16.msra.mxu0 0
    %953 = vmatprep.subr.bf16.mxu0 0
    %954 = vmatpush1.bf16.msra.mxu0 0
    %955 = vmatprep.subr.bf16.mxu0 0
    %956 = vmatpush1.bf16.msra.mxu0 0
    %957 = vmatprep.subr.bf16.mxu0 0
    %958 = vmatpush1.bf16.msra.mxu0 0
    %959 = vmatprep.subr.bf16.mxu0 0
    %960 = vmatpush1.bf16.msra.mxu0 0
    %961 = vmatprep.subr.bf16.mxu0 0
    %962 = vmatpush1.bf16.msra.mxu0 0
    %963 = vmatprep.subr.bf16.mxu0 0
    %964 = vmatpush1.bf16.msra.mxu0 0
    %965 = vmatprep.subr.bf16.mxu0 0
    %966 = vmatpush1.bf16.msra.mxu0 0
    %967 = vmatprep.subr.bf16.mxu0 0
    %968 = vmatpush1.bf16.msra.mxu0 0
    %969 = vmatprep.subr.bf16.mxu0 0
    %970 = vmatpush1.bf16.msra.mxu0 0
    %971 = vmatprep.subr.bf16.mxu0 0
    %972 = vmatpush1.bf16.msra.mxu0 0
    %973 = vmatprep.subr.bf16.mxu0 0
    %974 = vmatpush1.bf16.msra.mxu0 0
    %975 = vmatprep.mubr.bf16.mxu0 0
    %976 = vmatmul.mubr.bf16.gmra.mrb[0].mxu0 %v941
    %v977 = vpop.f32.mrb[0].mxu0
    %v978 = vadd.f32 0.0, %v977
    %v979 = vpop.f32.mrb[0].mxu0
    %v980 = vpop.f32.mrb[0].mxu0
    %v981 = vadd.f32 0.0, %v980
    %v982 = vpop.f32.mrb[0].mxu0
    %983 = vdwg.mxu0
    %v985 = vsel %vm891, %v937, 0
    %987 = vmatprep.subr.bf16.mxu0 0
    %988 = vmatpush1.bf16.msra.mxu0 %v939
    %989 = vmatprep.subr.bf16.mxu0 0
    %990 = vmatpush1.bf16.msra.mxu0 0
    %991 = vmatprep.subr.bf16.mxu0 0
    %992 = vmatpush1.bf16.msra.mxu0 0
    %993 = vmatprep.subr.bf16.mxu0 0
    %994 = vmatpush1.bf16.msra.mxu0 0
    %995 = vmatprep.subr.bf16.mxu0 0
    %996 = vmatpush1.bf16.msra.mxu0 0
    %997 = vmatprep.subr.bf16.mxu0 0
    %998 = vmatpush1.bf16.msra.mxu0 0
    %999 = vmatprep.subr.bf16.mxu0 0
    %1000 = vmatpush1.bf16.msra.mxu0 0
    %1001 = vmatprep.subr.bf16.mxu0 0
    %1002 = vmatpush1.bf16.msra.mxu0 0
    %1003 = vmatprep.subr.bf16.mxu0 0
    %1004 = vmatpush1.bf16.msra.mxu0 0
    %1005 = vmatprep.subr.bf16.mxu0 0
    %1006 = vmatpush1.bf16.msra.mxu0 0
    %1007 = vmatprep.subr.bf16.mxu0 0
    %1008 = vmatpush1.bf16.msra.mxu0 0
    %1009 = vmatprep.subr.bf16.mxu0 0
    %1010 = vmatpush1.bf16.msra.mxu0 0
    %1011 = vmatprep.subr.bf16.mxu0 0
    %1012 = vmatpush1.bf16.msra.mxu0 0
    %1013 = vmatprep.subr.bf16.mxu0 0
    %1014 = vmatpush1.bf16.msra.mxu0 0
    %1015 = vmatprep.subr.bf16.mxu0 0
    %1016 = vmatpush1.bf16.msra.mxu0 0
    %1017 = vmatprep.subr.bf16.mxu0 0
    %1018 = vmatpush1.bf16.msra.mxu0 0
    %1019 = vmatprep.mubr.bf16.mxu0 0
    %1020 = vmatmul.mubr.bf16.gmra.mrb[0].mxu0 %v985
    %v1021 = vpop.f32.mrb[0].mxu0
    %v1022 = vadd.f32 0.0, %v1021
    %v1023 = vpop.f32.mrb[0].mxu0
    %v1024 = vpop.f32.mrb[0].mxu0
    %v1025 = vadd.f32 0.0, %v1024
    %v1026 = vpop.f32.mrb[0].mxu0
    %1027 = vdwg.mxu0
    %v1028 = vpack.c.bf16 %v683, %v679
    %v1029 = vpack.c.bf16 %v693, %v689
    %v1030 = vpack.c.bf16 %v736, %v732
    %v1031 = vpack.c.bf16 %v746, %v742
    %1032 = vmatprep.subr.bf16.mxu0 0
    %1033 = vmatpush1.bf16.xpose.msra.mxu0 %v1030
    %1034 = vmatprep.subr.bf16.mxu0 0
    %1035 = vmatpush1.bf16.xpose.msra.mxu0 0
    %1036 = vmatprep.subr.bf16.mxu0 0
    %1037 = vmatpush1.bf16.xpose.msra.mxu0 0
    %1038 = vmatprep.subr.bf16.mxu0 0
    %1039 = vmatpush1.bf16.xpose.msra.mxu0 0
    %1040 = vmatprep.subr.bf16.mxu0 0
    %1041 = vmatpush1.bf16.xpose.msra.mxu0 0
    %1042 = vmatprep.subr.bf16.mxu0 0
    %1043 = vmatpush1.bf16.xpose.msra.mxu0 0
    %1044 = vmatprep.subr.bf16.mxu0 0
    %1045 = vmatpush1.bf16.xpose.msra.mxu0 0
    %1046 = vmatprep.subr.bf16.mxu0 0
    %1047 = vmatpush1.bf16.xpose.msra.mxu0 0
    %1048 = vmatprep.subr.bf16.mxu0 0
    %1049 = vmatpush1.bf16.xpose.msra.mxu0 0
    %1050 = vmatprep.subr.bf16.mxu0 0
    %1051 = vmatpush1.bf16.xpose.msra.mxu0 0
    %1052 = vmatprep.subr.bf16.mxu0 0
    %1053 = vmatpush1.bf16.xpose.msra.mxu0 0
    %1054 = vmatprep.subr.bf16.mxu0 0
    %1055 = vmatpush1.bf16.xpose.msra.mxu0 0
    %1056 = vmatprep.subr.bf16.mxu0 0
    %1057 = vmatpush1.bf16.xpose.msra.mxu0 0
    %1058 = vmatprep.subr.bf16.mxu0 0
    %1059 = vmatpush1.bf16.xpose.msra.mxu0 0
    %1060 = vmatprep.subr.bf16.mxu0 0
    %1061 = vmatpush1.bf16.xpose.msra.mxu0 0
    %1062 = vmatprep.subr.bf16.mxu0 0
    %1063 = vmatpush1.bf16.xpose.msra.mxu0 0
    %1064 = vmatprep.mubr.bf16.mxu0 0
    %1065 = vmatmul.mubr.bf16.gmra.mrb[0].mxu0 %v1028
    %v1066 = vpop.f32.mrb[0].mxu0
    %v1067 = vadd.f32 0.0, %v1066
    %v1068 = vpop.f32.mrb[0].mxu0
    %v1069 = vpop.f32.mrb[0].mxu0
    %v1070 = vadd.f32 0.0, %v1069
    %v1071 = vpop.f32.mrb[0].mxu0
    %1072 = vdwg.mxu0
    %1073 = vmatprep.subr.bf16.mxu0 0
    %1074 = vmatpush1.bf16.xpose.msra.mxu0 %v1031
    %1075 = vmatprep.subr.bf16.mxu0 0
    %1076 = vmatpush1.bf16.xpose.msra.mxu0 0
    %1077 = vmatprep.subr.bf16.mxu0 0
    %1078 = vmatpush1.bf16.xpose.msra.mxu0 0
    %1079 = vmatprep.subr.bf16.mxu0 0
    %1080 = vmatpush1.bf16.xpose.msra.mxu0 0
    %1081 = vmatprep.subr.bf16.mxu0 0
    %1082 = vmatpush1.bf16.xpose.msra.mxu0 0
    %1083 = vmatprep.subr.bf16.mxu0 0
    %1084 = vmatpush1.bf16.xpose.msra.mxu0 0
    %1085 = vmatprep.subr.bf16.mxu0 0
    %1086 = vmatpush1.bf16.xpose.msra.mxu0 0
    %1087 = vmatprep.subr.bf16.mxu0 0
    %1088 = vmatpush1.bf16.xpose.msra.mxu0 0
    %1089 = vmatprep.subr.bf16.mxu0 0
    %1090 = vmatpush1.bf16.xpose.msra.mxu0 0
    %1091 = vmatprep.subr.bf16.mxu0 0
    %1092 = vmatpush1.bf16.xpose.msra.mxu0 0
    %1093 = vmatprep.subr.bf16.mxu0 0
    %1094 = vmatpush1.bf16.xpose.msra.mxu0 0
    %1095 = vmatprep.subr.bf16.mxu0 0
    %1096 = vmatpush1.bf16.xpose.msra.mxu0 0
    %1097 = vmatprep.subr.bf16.mxu0 0
    %1098 = vmatpush1.bf16.xpose.msra.mxu0 0
    %1099 = vmatprep.subr.bf16.mxu0 0
    %1100 = vmatpush1.bf16.xpose.msra.mxu0 0
    %1101 = vmatprep.subr.bf16.mxu0 0
    %1102 = vmatpush1.bf16.xpose.msra.mxu0 0
    %1103 = vmatprep.subr.bf16.mxu0 0
    %1104 = vmatpush1.bf16.xpose.msra.mxu0 0
    %1105 = vmatprep.mubr.bf16.mxu0 0
    %1106 = vmatmul.mubr.bf16.gmra.mrb[0].mxu0 %v1029
    %v1107 = vpop.f32.mrb[0].mxu0
    %v1108 = vadd.f32 0.0, %v1107
    %v1109 = vpop.f32.mrb[0].mxu0
    %v1110 = vpop.f32.mrb[0].mxu0
    %v1111 = vadd.f32 0.0, %v1110
    %v1112 = vpop.f32.mrb[0].mxu0
    %1113 = vdwg.mxu0
    %v1114 = vmul.f32 %v1067, 0.25
    %v1115 = vmul.f32 %v1070, 0.25
    %v1116 = vmul.f32 %v1108, 0.25
    %v1117 = vmul.f32 %v1111, 0.25
    %v1118 = vsel %vm891, %v1114, -inf
    %1119 = vmax.xlane.f32.xlu0 %v1118
    %v1120 = vpop.xlane.xlu0 %1119
    %v1121 = vsel %vm891, %v1115, -inf
    %1122 = vmax.xlane.f32.xlu0 %v1121
    %v1123 = vpop.xlane.xlu0 %1122
    %v1124 = vsel %vm891, %v1116, -inf
    %1125 = vmax.xlane.f32.xlu0 %v1124
    %v1126 = vpop.xlane.xlu0 %1125
    %v1127 = vsel %vm891, %v1117, -inf
    %1128 = vmax.xlane.f32.xlu0 %v1127
    %v1129 = vpop.xlane.xlu0 %1128
    %v1130 = vsub.f32 %v1114, %v1120
    %v1131 = vsub.f32 %v1115, %v1123
    %v1132 = vsub.f32 %v1116, %v1126
    %v1133 = vsub.f32 %v1117, %v1129
    %v1134 = vmul.f32 %v1130, 1.442695
    %v1135 = vpow.pop %v1134
    %v1136 = vmul.f32 %v1131, 1.442695
    %v1137 = vpow.pop %v1136
    %v1138 = vmul.f32 %v1132, 1.442695
    %v1139 = vpow.pop %v1138
    %v1140 = vmul.f32 %v1133, 1.442695
    %v1141 = vpow.pop %v1140
    %v1142 = vsel %vm891, %v1135, 0.0
    %1143 = vadd.xlane.f32.xlu0 %v1142
    %v1144 = vpop.xlane.xlu0 %1143
    %v1145 = vsel %vm891, %v1137, 0.0
    %1146 = vadd.xlane.f32.xlu0 %v1145
    %v1147 = vpop.xlane.xlu0 %1146
    %v1148 = vsel %vm891, %v1139, 0.0
    %1149 = vadd.xlane.f32.xlu0 %v1148
    %v1150 = vpop.xlane.xlu0 %1149
    %v1151 = vsel %vm891, %v1141, 0.0
    %1152 = vadd.xlane.f32.xlu0 %v1151
    %v1153 = vpop.xlane.xlu0 %1152
    %v1154 = vrcp.pop %v1144
    %v1155 = vmul.f32 %v1135, %v1154
    %v1156 = vrcp.pop %v1147
    %v1157 = vmul.f32 %v1137, %v1156
    %v1158 = vrcp.pop %v1150
    %v1159 = vmul.f32 %v1139, %v1158
    %v1160 = vrcp.pop %v1153
    %v1161 = vmul.f32 %v1141, %v1160
    %v1162 = vpack.c.bf16 %v1157, %v1155
    %v1163 = vpack.c.bf16 %v1161, %v1159
    %v1164 = vpack.c.bf16 %v789, %v785
    %v1165 = vpack.c.bf16 %v799, %v795
    %v1167 = vsel %vm891, %v1162, 0
    %1169 = vmatprep.subr.bf16.mxu0 0
    %1170 = vmatpush1.bf16.msra.mxu0 %v1164
    %1171 = vmatprep.subr.bf16.mxu0 0
    %1172 = vmatpush1.bf16.msra.mxu0 0
    %1173 = vmatprep.subr.bf16.mxu0 0
    %1174 = vmatpush1.bf16.msra.mxu0 0
    %1175 = vmatprep.subr.bf16.mxu0 0
    %1176 = vmatpush1.bf16.msra.mxu0 0
    %1177 = vmatprep.subr.bf16.mxu0 0
    %1178 = vmatpush1.bf16.msra.mxu0 0
    %1179 = vmatprep.subr.bf16.mxu0 0
    %1180 = vmatpush1.bf16.msra.mxu0 0
    %1181 = vmatprep.subr.bf16.mxu0 0
    %1182 = vmatpush1.bf16.msra.mxu0 0
    %1183 = vmatprep.subr.bf16.mxu0 0
    %1184 = vmatpush1.bf16.msra.mxu0 0
    %1185 = vmatprep.subr.bf16.mxu0 0
    %1186 = vmatpush1.bf16.msra.mxu0 0
    %1187 = vmatprep.subr.bf16.mxu0 0
    %1188 = vmatpush1.bf16.msra.mxu0 0
    %1189 = vmatprep.subr.bf16.mxu0 0
    %1190 = vmatpush1.bf16.msra.mxu0 0
    %1191 = vmatprep.subr.bf16.mxu0 0
    %1192 = vmatpush1.bf16.msra.mxu0 0
    %1193 = vmatprep.subr.bf16.mxu0 0
    %1194 = vmatpush1.bf16.msra.mxu0 0
    %1195 = vmatprep.subr.bf16.mxu0 0
    %1196 = vmatpush1.bf16.msra.mxu0 0
    %1197 = vmatprep.subr.bf16.mxu0 0
    %1198 = vmatpush1.bf16.msra.mxu0 0
    %1199 = vmatprep.subr.bf16.mxu0 0
    %1200 = vmatpush1.bf16.msra.mxu0 0
    %1201 = vmatprep.mubr.bf16.mxu0 0
    %1202 = vmatmul.mubr.bf16.gmra.mrb[0].mxu0 %v1167
    %v1203 = vpop.f32.mrb[0].mxu0
    %v1204 = vadd.f32 0.0, %v1203
    %v1205 = vpop.f32.mrb[0].mxu0
    %v1206 = vpop.f32.mrb[0].mxu0
    %v1207 = vadd.f32 0.0, %v1206
    %v1208 = vpop.f32.mrb[0].mxu0
    %1209 = vdwg.mxu0
    %v1211 = vsel %vm891, %v1163, 0
    %1213 = vmatprep.subr.bf16.mxu0 0
    %1214 = vmatpush1.bf16.msra.mxu0 %v1165
    %1215 = vmatprep.subr.bf16.mxu0 0
    %1216 = vmatpush1.bf16.msra.mxu0 0
    %1217 = vmatprep.subr.bf16.mxu0 0
    %1218 = vmatpush1.bf16.msra.mxu0 0
    %1219 = vmatprep.subr.bf16.mxu0 0
    %1220 = vmatpush1.bf16.msra.mxu0 0
    %1221 = vmatprep.subr.bf16.mxu0 0
    %1222 = vmatpush1.bf16.msra.mxu0 0
    %1223 = vmatprep.subr.bf16.mxu0 0
    %1224 = vmatpush1.bf16.msra.mxu0 0
    %1225 = vmatprep.subr.bf16.mxu0 0
    %1226 = vmatpush1.bf16.msra.mxu0 0
    %1227 = vmatprep.subr.bf16.mxu0 0
    %1228 = vmatpush1.bf16.msra.mxu0 0
    %1229 = vmatprep.subr.bf16.mxu0 0
    %1230 = vmatpush1.bf16.msra.mxu0 0
    %1231 = vmatprep.subr.bf16.mxu0 0
    %1232 = vmatpush1.bf16.msra.mxu0 0
    %1233 = vmatprep.subr.bf16.mxu0 0
    %1234 = vmatpush1.bf16.msra.mxu0 0
    %1235 = vmatprep.subr.bf16.mxu0 0
    %1236 = vmatpush1.bf16.msra.mxu0 0
    %1237 = vmatprep.subr.bf16.mxu0 0
    %1238 = vmatpush1.bf16.msra.mxu0 0
    %1239 = vmatprep.subr.bf16.mxu0 0
    %1240 = vmatpush1.bf16.msra.mxu0 0
    %1241 = vmatprep.subr.bf16.mxu0 0
    %1242 = vmatpush1.bf16.msra.mxu0 0
    %1243 = vmatprep.subr.bf16.mxu0 0
    %1244 = vmatpush1.bf16.msra.mxu0 0
    %1245 = vmatprep.mubr.bf16.mxu0 0
    %1246 = vmatmul.mubr.bf16.gmra.mrb[0].mxu0 %v1211
    %v1247 = vpop.f32.mrb[0].mxu0
    %v1248 = vadd.f32 0.0, %v1247
    %v1249 = vpop.f32.mrb[0].mxu0
    %v1250 = vpop.f32.mrb[0].mxu0
    %v1251 = vadd.f32 0.0, %v1250
    %v1252 = vpop.f32.mrb[0].mxu0
    %1253 = vdwg.mxu0
    %v1254 = vld [vmem:[#allocation5] sm:$0xf]
    %v1255 = vld [vmem:[#allocation5 + $0x4] sm:$0xf]
    %v1256 = vld [vmem:[#allocation5 + $0x8] sm:$0xf]
    %v1257 = vld [vmem:[#allocation5 + $0xc] sm:$0xf]
    %v1258 = vld [vmem:[#allocation5 + $0x10] sm:$0xf]
    %v1259 = vld [vmem:[#allocation5 + $0x14] sm:$0xf]
    %v1260 = vld [vmem:[#allocation5 + $0x18] sm:$0xf]
    %v1261 = vld [vmem:[#allocation5 + $0x1c] sm:$0xf]
    %v1262 = vld [vmem:[#allocation5 + $0x20] sm:$0xf]
    %v1263 = vld [vmem:[#allocation5 + $0x24] sm:$0xf]
    %v1264 = vld [vmem:[#allocation5 + $0x28] sm:$0xf]
    %v1265 = vld [vmem:[#allocation5 + $0x2c] sm:$0xf]
    %v1266 = vld [vmem:[#allocation5 + $0x30] sm:$0xf]
    %v1267 = vld [vmem:[#allocation5 + $0x34] sm:$0xf]
    %v1268 = vld [vmem:[#allocation5 + $0x38] sm:$0xf]
    %v1269 = vld [vmem:[#allocation5 + $0x3c] sm:$0xf]
    %v1270 = vld [vmem:[#allocation5 + $0x40] sm:$0xf]
    %v1271 = vld [vmem:[#allocation5 + $0x44] sm:$0xf]
    %v1272 = vld [vmem:[#allocation5 + $0x48] sm:$0xf]
    %v1273 = vld [vmem:[#allocation5 + $0x4c] sm:$0xf]
    %v1274 = vld [vmem:[#allocation5 + $0x50] sm:$0xf]
    %v1275 = vld [vmem:[#allocation5 + $0x54] sm:$0xf]
    %v1276 = vld [vmem:[#allocation5 + $0x58] sm:$0xf]
    %v1277 = vld [vmem:[#allocation5 + $0x5c] sm:$0xf]
    %v1278 = vld [vmem:[#allocation5 + $0x60] sm:$0xf]
    %v1279 = vld [vmem:[#allocation5 + $0x64] sm:$0xf]
    %v1280 = vld [vmem:[#allocation5 + $0x68] sm:$0xf]
    %v1281 = vld [vmem:[#allocation5 + $0x6c] sm:$0xf]
    %v1282 = vld [vmem:[#allocation5 + $0x70] sm:$0xf]
    %v1283 = vld [vmem:[#allocation5 + $0x74] sm:$0xf]
    %v1284 = vld [vmem:[#allocation5 + $0x78] sm:$0xf]
    %v1285 = vld [vmem:[#allocation5 + $0x7c] sm:$0xf]
    %v1286 = vpack.c.bf16 %v981, %v978
    %v1287 = vpack.c.bf16 %v1207, %v1204
    %v1288 = vpack.c.bf16 %v1025, %v1022
    %v1289 = vpack.c.bf16 %v1251, %v1248
    %v1322 = vunpack.c.l.b16 %v1254
    %v1323 = vunpack.c.l.b16 %v1255
    %v1324 = vunpack.c.l.b16 %v1256
    %v1325 = vunpack.c.l.b16 %v1257
    %v1326 = vunpack.c.l.b16 %v1258
    %v1327 = vunpack.c.l.b16 %v1259
    %v1328 = vunpack.c.l.b16 %v1260
    %v1329 = vunpack.c.l.b16 %v1261
    %v1330 = vunpack.c.l.b16 %v1262
    %v1331 = vunpack.c.l.b16 %v1263
    %v1332 = vunpack.c.l.b16 %v1264
    %v1333 = vunpack.c.l.b16 %v1265
    %v1334 = vunpack.c.l.b16 %v1266
    %v1335 = vunpack.c.l.b16 %v1267
    %v1336 = vunpack.c.l.b16 %v1268
    %v1337 = vunpack.c.l.b16 %v1269
    %v1338 = vunpack.c.l.b16 %v1270
    %v1339 = vunpack.c.l.b16 %v1271
    %v1340 = vunpack.c.l.b16 %v1272
    %v1341 = vunpack.c.l.b16 %v1273
    %v1342 = vunpack.c.l.b16 %v1274
    %v1343 = vunpack.c.l.b16 %v1275
    %v1344 = vunpack.c.l.b16 %v1276
    %v1345 = vunpack.c.l.b16 %v1277
    %v1346 = vunpack.c.l.b16 %v1278
    %v1347 = vunpack.c.l.b16 %v1279
    %v1348 = vunpack.c.l.b16 %v1280
    %v1349 = vunpack.c.l.b16 %v1281
    %v1350 = vunpack.c.l.b16 %v1282
    %v1351 = vunpack.c.l.b16 %v1283
    %v1352 = vunpack.c.l.b16 %v1284
    %v1353 = vunpack.c.l.b16 %v1285
    %v1354 = vpack.c.b16 %v1323, %v1322
    %v1355 = vpack.c.b16 %v1325, %v1324
    %v1356 = vpack.c.b16 %v1327, %v1326
    %v1357 = vpack.c.b16 %v1329, %v1328
    %v1358 = vpack.c.b16 %v1331, %v1330
    %v1359 = vpack.c.b16 %v1333, %v1332
    %v1360 = vpack.c.b16 %v1335, %v1334
    %v1361 = vpack.c.b16 %v1337, %v1336
    %v1362 = vpack.c.b16 %v1339, %v1338
    %v1363 = vpack.c.b16 %v1341, %v1340
    %v1364 = vpack.c.b16 %v1343, %v1342
    %v1365 = vpack.c.b16 %v1345, %v1344
    %v1366 = vpack.c.b16 %v1347, %v1346
    %v1367 = vpack.c.b16 %v1349, %v1348
    %v1368 = vpack.c.b16 %v1351, %v1350
    %v1369 = vpack.c.b16 %v1353, %v1352
    %1386 = vmatprep.subr.bf16.mxu0 0
    %1387 = vmatpush1.bf16.msra.mxu0 %v1354
    %1388 = vmatprep.subr.bf16.mxu0 0
    %1389 = vmatpush1.bf16.msra.mxu0 %v1355
    %1390 = vmatprep.subr.bf16.mxu0 0
    %1391 = vmatpush1.bf16.msra.mxu0 %v1356
    %1392 = vmatprep.subr.bf16.mxu0 0
    %1393 = vmatpush1.bf16.msra.mxu0 %v1357
    %1394 = vmatprep.subr.bf16.mxu0 0
    %1395 = vmatpush1.bf16.msra.mxu0 %v1358
    %1396 = vmatprep.subr.bf16.mxu0 0
    %1397 = vmatpush1.bf16.msra.mxu0 %v1359
    %1398 = vmatprep.subr.bf16.mxu0 0
    %1399 = vmatpush1.bf16.msra.mxu0 %v1360
    %1400 = vmatprep.subr.bf16.mxu0 0
    %1401 = vmatpush1.bf16.msra.mxu0 %v1361
    %1402 = vmatprep.subr.bf16.mxu0 0
    %1403 = vmatpush1.bf16.msra.mxu0 %v1362
    %1404 = vmatprep.subr.bf16.mxu0 0
    %1405 = vmatpush1.bf16.msra.mxu0 %v1363
    %1406 = vmatprep.subr.bf16.mxu0 0
    %1407 = vmatpush1.bf16.msra.mxu0 %v1364
    %1408 = vmatprep.subr.bf16.mxu0 0
    %1409 = vmatpush1.bf16.msra.mxu0 %v1365
    %1410 = vmatprep.subr.bf16.mxu0 0
    %1411 = vmatpush1.bf16.msra.mxu0 %v1366
    %1412 = vmatprep.subr.bf16.mxu0 0
    %1413 = vmatpush1.bf16.msra.mxu0 %v1367
    %1414 = vmatprep.subr.bf16.mxu0 0
    %1415 = vmatpush1.bf16.msra.mxu0 %v1368
    %1416 = vmatprep.subr.bf16.mxu0 0
    %1417 = vmatpush1.bf16.msra.mxu0 %v1369
    %1418 = vmatprep.mubr.bf16.mxu0 %v1287
    %1419 = vmatmul.mubr.bf16.gmra.mrb[0].mxu0 %v1286
    %v1420 = vpop.f32.mrb[0].mxu0
    %v1421 = vadd.f32 0.0, %v1420
    %v1422 = vpop.f32.mrb[0].mxu0
    %v1423 = vpop.f32.mrb[0].mxu0
    %v1424 = vadd.f32 0.0, %v1423
    %v1425 = vpop.f32.mrb[0].mxu0
    %1426 = vmatprep.mubr.bf16.mxu0 %v1289
    %1427 = vmatmul.mubr.bf16.gmra.mrb[0].mxu0 %v1288
    %v1428 = vpop.f32.mrb[0].mxu0
    %v1429 = vadd.f32 0.0, %v1428
    %v1430 = vpop.f32.mrb[0].mxu0
    %v1431 = vpop.f32.mrb[0].mxu0
    %v1432 = vadd.f32 0.0, %v1431
    %v1433 = vpop.f32.mrb[0].mxu0
    %1434 = vdwg.mxu0
    %v1435 = vadd.f32 %v251, %v1421
    %v1436 = vadd.f32 %v252, %v1424
    %v1437 = vadd.f32 %v253, %v1429
    %v1438 = vadd.f32 %v254, %v1432
    %v1439 = vld [vmem:[%s7] sm:$0x1]
    %v1441 = vlaneseq
    %v1442 = vshrl.u32 %v1441, 7
    %v1443 = vsub.s32 0, %v1442
    %v1444 = vrot.slane %v1439, %v1443
    %v1446 = vadd.f32 %v1435, %v1444
    %v1447 = vadd.f32 %v1436, %v1444
    %v1448 = vadd.f32 %v1437, %v1444
    %v1449 = vadd.f32 %v1438, %v1444
    %v1450 = vld [vmem:[%s8] sm:$0x3]
    %1451 = vadd.xlane.f32.xlu0 %v1446
    %v1452 = vpop.xlane.xlu0 %1451
    %1453 = vadd.xlane.f32.xlu0 %v1447
    %v1454 = vpop.xlane.xlu0 %1453
    %1455 = vadd.xlane.f32.xlu0 %v1448
    %v1456 = vpop.xlane.xlu0 %1455
    %1457 = vadd.xlane.f32.xlu0 %v1449
    %v1458 = vpop.xlane.xlu0 %1457
    %v1459 = vmul.f32 %v1452, 0.03125
    %v1460 = vmul.f32 %v1454, 0.03125
    %v1461 = vmul.f32 %v1456, 0.03125
    %v1462 = vmul.f32 %v1458, 0.03125
    %v1463 = vsub.f32 %v1446, %v1459
    %v1464 = vsub.f32 %v1447, %v1460
    %v1465 = vsub.f32 %v1448, %v1461
    %v1466 = vsub.f32 %v1449, %v1462
    %v1467 = vmul.f32 %v1463, %v1463
    %v1468 = vmul.f32 %v1464, %v1464
    %v1469 = vmul.f32 %v1465, %v1465
    %v1470 = vmul.f32 %v1466, %v1466
    %v1471 = vmul.f32 %v1467, %v114
    %v1472 = vmul.f32 %v1468, %v114
    %v1473 = vmul.f32 %v1469, %v114
    %v1474 = vmul.f32 %v1470, %v114
    %1475 = vadd.xlane.f32.xlu0 %v1471
    %v1476 = vpop.xlane.xlu0 %1475
    %1477 = vadd.xlane.f32.xlu0 %v1472
    %v1478 = vpop.xlane.xlu0 %1477
    %1479 = vadd.xlane.f32.xlu0 %v1473
    %v1480 = vpop.xlane.xlu0 %1479
    %1481 = vadd.xlane.f32.xlu0 %v1474
    %v1482 = vpop.xlane.xlu0 %1481
    %v1483 = vmul.f32 %v1476, 0.03125
    %v1484 = vmul.f32 %v1478, 0.03125
    %v1485 = vmul.f32 %v1480, 0.03125
    %v1486 = vmul.f32 %v1482, 0.03125
    %v1487 = vadd.f32 %v1483, 1e-05
    %v1488 = vadd.f32 %v1484, 1e-05
    %v1489 = vadd.f32 %v1485, 1e-05
    %v1490 = vadd.f32 %v1486, 1e-05
    %v1491 = vrsqrt.pop %v1487
    %v1492 = vrsqrt.pop %v1488
    %v1493 = vrsqrt.pop %v1489
    %v1494 = vrsqrt.pop %v1490
    %v1495 = vmul.f32 %v1463, %v1491
    %v1496 = vmul.f32 %v1464, %v1492
    %v1497 = vmul.f32 %v1465, %v1493
    %v1498 = vmul.f32 %v1466, %v1494
    %v1499 = vlaneseq
    %v1500 = vshrl.u32 %v1499, 7
    %v1501 = vsub.s32 0, %v1500
    %v1502 = vrot.slane %v1450, %v1501
    %v1503 = vmul.f32 %v1495, %v1502
    %v1504 = vmul.f32 %v1496, %v1502
    %v1505 = vmul.f32 %v1497, %v1502
    %v1506 = vmul.f32 %v1498, %v1502
    %v1507 = vlaneseq
    %v1508 = vshrl.u32 %v1507, 7
    %v1509 = vsub.s32 1, %v1508
    %v1510 = vrot.slane %v1450, %v1509
    %v1511 = vadd.f32 %v1503, %v1510
    %v1512 = vadd.f32 %v1504, %v1510
    %v1513 = vadd.f32 %v1505, %v1510
    %v1514 = vadd.f32 %v1506, %v1510
    %v1515 = vld [vmem:[%s9] sm:$0xf]
    %v1516 = vld [vmem:[%s9 + $0x4] sm:$0xf]
    %v1517 = vld [vmem:[%s9 + $0x8] sm:$0xf]
    %v1518 = vld [vmem:[%s9 + $0xc] sm:$0xf]
    %v1519 = vld [vmem:[%s9 + $0x10] sm:$0xf]
    %v1520 = vld [vmem:[%s9 + $0x14] sm:$0xf]
    %v1521 = vld [vmem:[%s9 + $0x18] sm:$0xf]
    %v1522 = vld [vmem:[%s9 + $0x1c] sm:$0xf]
    %v1523 = vld [vmem:[%s9 + $0x20] sm:$0xf]
    %v1524 = vld [vmem:[%s9 + $0x24] sm:$0xf]
    %v1525 = vld [vmem:[%s9 + $0x28] sm:$0xf]
    %v1526 = vld [vmem:[%s9 + $0x2c] sm:$0xf]
    %v1527 = vld [vmem:[%s9 + $0x30] sm:$0xf]
    %v1528 = vld [vmem:[%s9 + $0x34] sm:$0xf]
    %v1529 = vld [vmem:[%s9 + $0x38] sm:$0xf]
    %v1530 = vld [vmem:[%s9 + $0x3c] sm:$0xf]
    %v1531 = vpack.c.bf16 %v1512, %v1511
    %v1532 = vpack.c.bf16 %v1514, %v1513
    %v1533 = vld [vmem:[%s10] sm:$0x1]
    %v1535 = vlaneseq
    %v1536 = vshrl.u32 %v1535, 7
    %v1537 = vsub.s32 0, %v1536
    %v1538 = vrot.slane %v1533, %v1537
    %v1556 = vunpack.c.l.b16 %v1515
    %v1557 = vunpack.c.l.b16 %v1516
    %v1558 = vunpack.c.l.b16 %v1517
    %v1559 = vunpack.c.l.b16 %v1518
    %v1560 = vunpack.c.l.b16 %v1519
    %v1561 = vunpack.c.l.b16 %v1520
    %v1562 = vunpack.c.l.b16 %v1521
    %v1563 = vunpack.c.l.b16 %v1522
    %v1564 = vunpack.c.l.b16 %v1523
    %v1565 = vunpack.c.l.b16 %v1524
    %v1566 = vunpack.c.l.b16 %v1525
    %v1567 = vunpack.c.l.b16 %v1526
    %v1568 = vunpack.c.l.b16 %v1527
    %v1569 = vunpack.c.l.b16 %v1528
    %v1570 = vunpack.c.l.b16 %v1529
    %v1571 = vunpack.c.l.b16 %v1530
    %v1572 = vpack.c.b16 %v1557, %v1556
    %v1573 = vpack.c.b16 %v1559, %v1558
    %v1574 = vpack.c.b16 %v1561, %v1560
    %v1575 = vpack.c.b16 %v1563, %v1562
    %v1576 = vpack.c.b16 %v1565, %v1564
    %v1577 = vpack.c.b16 %v1567, %v1566
    %v1578 = vpack.c.b16 %v1569, %v1568
    %v1579 = vpack.c.b16 %v1571, %v1570
    %1588 = vmatprep.subr.bf16.mxu0 0
    %1589 = vmatpush1.bf16.msra.mxu0 %v1572
    %1590 = vmatprep.subr.bf16.mxu0 0
    %1591 = vmatpush1.bf16.msra.mxu0 %v1573
    %1592 = vmatprep.subr.bf16.mxu0 0
    %1593 = vmatpush1.bf16.msra.mxu0 %v1574
    %1594 = vmatprep.subr.bf16.mxu0 0
    %1595 = vmatpush1.bf16.msra.mxu0 %v1575
    %1596 = vmatprep.subr.bf16.mxu0 0
    %1597 = vmatpush1.bf16.msra.mxu0 %v1576
    %1598 = vmatprep.subr.bf16.mxu0 0
    %1599 = vmatpush1.bf16.msra.mxu0 %v1577
    %1600 = vmatprep.subr.bf16.mxu0 0
    %1601 = vmatpush1.bf16.msra.mxu0 %v1578
    %1602 = vmatprep.subr.bf16.mxu0 0
    %1603 = vmatpush1.bf16.msra.mxu0 %v1579
    %1604 = vmatprep.subr.bf16.mxu0 0
    %1605 = vmatpush1.bf16.msra.mxu0 0
    %1606 = vmatprep.subr.bf16.mxu0 0
    %1607 = vmatpush1.bf16.msra.mxu0 0
    %1608 = vmatprep.subr.bf16.mxu0 0
    %1609 = vmatpush1.bf16.msra.mxu0 0
    %1610 = vmatprep.subr.bf16.mxu0 0
    %1611 = vmatpush1.bf16.msra.mxu0 0
    %1612 = vmatprep.subr.bf16.mxu0 0
    %1613 = vmatpush1.bf16.msra.mxu0 0
    %1614 = vmatprep.subr.bf16.mxu0 0
    %1615 = vmatpush1.bf16.msra.mxu0 0
    %1616 = vmatprep.subr.bf16.mxu0 0
    %1617 = vmatpush1.bf16.msra.mxu0 0
    %1618 = vmatprep.subr.bf16.mxu0 0
    %1619 = vmatpush1.bf16.msra.mxu0 0
    %1620 = vmatprep.mubr.bf16.mxu0 0
    %1621 = vmatmul.mubr.bf16.gmra.mrb[0].mxu0 %v1531
    %v1622 = vpop.f32.mrb[0].mxu0
    %v1623 = vadd.f32 %v1538, %v1622
    %v1624 = vpop.f32.mrb[0].mxu0
    %v1625 = vpop.f32.mrb[0].mxu0
    %v1626 = vadd.f32 %v1538, %v1625
    %v1627 = vpop.f32.mrb[0].mxu0
    %1628 = vmatprep.mubr.bf16.mxu0 0
    %1629 = vmatmul.mubr.bf16.gmra.mrb[0].mxu0 %v1532
    %v1630 = vpop.f32.mrb[0].mxu0
    %v1631 = vadd.f32 %v1538, %v1630
    %v1632 = vpop.f32.mrb[0].mxu0
    %v1633 = vpop.f32.mrb[0].mxu0
    %v1634 = vadd.f32 %v1538, %v1633
    %v1635 = vpop.f32.mrb[0].mxu0
    %1636 = vdwg.mxu0
    %v1637 = vmax.f32 %v1623, 0.0
    %v1638 = vmax.f32 %v1626, 0.0
    %v1639 = vmax.f32 %v1631, 0.0
    %v1640 = vmax.f32 %v1634, 0.0
    %v1641 = vld [vmem:[#allocation7] sm:$0xf]
    %v1642 = vld [vmem:[#allocation7 + $0x4] sm:$0xf]
    %v1643 = vld [vmem:[#allocation7 + $0x8] sm:$0xf]
    %v1644 = vld [vmem:[#allocation7 + $0xc] sm:$0xf]
    %v1645 = vld [vmem:[#allocation7 + $0x10] sm:$0xf]
    %v1646 = vld [vmem:[#allocation7 + $0x14] sm:$0xf]
    %v1647 = vld [vmem:[#allocation7 + $0x18] sm:$0xf]
    %v1648 = vld [vmem:[#allocation7 + $0x1c] sm:$0xf]
    %v1649 = vld [vmem:[#allocation7 + $0x20] sm:$0xf]
    %v1650 = vld [vmem:[#allocation7 + $0x24] sm:$0xf]
    %v1651 = vld [vmem:[#allocation7 + $0x28] sm:$0xf]
    %v1652 = vld [vmem:[#allocation7 + $0x2c] sm:$0xf]
    %v1653 = vld [vmem:[#allocation7 + $0x30] sm:$0xf]
    %v1654 = vld [vmem:[#allocation7 + $0x34] sm:$0xf]
    %v1655 = vld [vmem:[#allocation7 + $0x38] sm:$0xf]
    %v1656 = vld [vmem:[#allocation7 + $0x3c] sm:$0xf]
    %v1657 = vpack.c.bf16 %v1638, %v1637
    %v1658 = vpack.c.bf16 %v1640, %v1639
    %v1675 = vunpack.c.l.b16 %v1641
    %v1676 = vunpack.c.l.b16 %v1642
    %v1677 = vunpack.c.l.b16 %v1643
    %v1678 = vunpack.c.l.b16 %v1644
    %v1679 = vunpack.c.l.b16 %v1645
    %v1680 = vunpack.c.l.b16 %v1646
    %v1681 = vunpack.c.l.b16 %v1647
    %v1682 = vunpack.c.l.b16 %v1648
    %v1683 = vunpack.c.l.b16 %v1649
    %v1684 = vunpack.c.l.b16 %v1650
    %v1685 = vunpack.c.l.b16 %v1651
    %v1686 = vunpack.c.l.b16 %v1652
    %v1687 = vunpack.c.l.b16 %v1653
    %v1688 = vunpack.c.l.b16 %v1654
    %v1689 = vunpack.c.l.b16 %v1655
    %v1690 = vunpack.c.l.b16 %v1656
    %v1691 = vpack.c.b16 %v1676, %v1675
    %v1692 = vpack.c.b16 %v1678, %v1677
    %v1693 = vpack.c.b16 %v1680, %v1679
    %v1694 = vpack.c.b16 %v1682, %v1681
    %v1695 = vpack.c.b16 %v1684, %v1683
    %v1696 = vpack.c.b16 %v1686, %v1685
    %v1697 = vpack.c.b16 %v1688, %v1687
    %v1698 = vpack.c.b16 %v1690, %v1689
    %1707 = vmatprep.subr.bf16.mxu0 0
    %1708 = vmatpush1.bf16.msra.mxu0 %v1691
    %1709 = vmatprep.subr.bf16.mxu0 0
    %1710 = vmatpush1.bf16.msra.mxu0 %v1692
    %1711 = vmatprep.subr.bf16.mxu0 0
    %1712 = vmatpush1.bf16.msra.mxu0 %v1693
    %1713 = vmatprep.subr.bf16.mxu0 0
    %1714 = vmatpush1.bf16.msra.mxu0 %v1694
    %1715 = vmatprep.subr.bf16.mxu0 0
    %1716 = vmatpush1.bf16.msra.mxu0 %v1695
    %1717 = vmatprep.subr.bf16.mxu0 0
    %1718 = vmatpush1.bf16.msra.mxu0 %v1696
    %1719 = vmatprep.subr.bf16.mxu0 0
    %1720 = vmatpush1.bf16.msra.mxu0 %v1697
    %1721 = vmatprep.subr.bf16.mxu0 0
    %1722 = vmatpush1.bf16.msra.mxu0 %v1698
    %1723 = vmatprep.subr.bf16.mxu0 0
    %1724 = vmatpush1.bf16.msra.mxu0 0
    %1725 = vmatprep.subr.bf16.mxu0 0
    %1726 = vmatpush1.bf16.msra.mxu0 0
    %1727 = vmatprep.subr.bf16.mxu0 0
    %1728 = vmatpush1.bf16.msra.mxu0 0
    %1729 = vmatprep.subr.bf16.mxu0 0
    %1730 = vmatpush1.bf16.msra.mxu0 0
    %1731 = vmatprep.subr.bf16.mxu0 0
    %1732 = vmatpush1.bf16.msra.mxu0 0
    %1733 = vmatprep.subr.bf16.mxu0 0
    %1734 = vmatpush1.bf16.msra.mxu0 0
    %1735 = vmatprep.subr.bf16.mxu0 0
    %1736 = vmatpush1.bf16.msra.mxu0 0
    %1737 = vmatprep.subr.bf16.mxu0 0
    %1738 = vmatpush1.bf16.msra.mxu0 0
    %1739 = vmatprep.mubr.bf16.mxu0 0
    %1740 = vmatmul.mubr.bf16.gmra.mrb[0].mxu0 %v1657
    %v1741 = vpop.f32.mrb[0].mxu0
    %v1742 = vadd.f32 0.0, %v1741
    %v1743 = vpop.f32.mrb[0].mxu0
    %v1744 = vpop.f32.mrb[0].mxu0
    %v1745 = vadd.f32 0.0, %v1744
    %v1746 = vpop.f32.mrb[0].mxu0
    %1747 = vmatprep.mubr.bf16.mxu0 0
    %1748 = vmatmul.mubr.bf16.gmra.mrb[0].mxu0 %v1658
    %v1749 = vpop.f32.mrb[0].mxu0
    %v1750 = vadd.f32 0.0, %v1749
    %v1751 = vpop.f32.mrb[0].mxu0
    %v1752 = vpop.f32.mrb[0].mxu0
    %v1753 = vadd.f32 0.0, %v1752
    %v1754 = vpop.f32.mrb[0].mxu0
    %1755 = vdwg.mxu0
    %v1756 = vadd.f32 %v1446, %v1742
    %v1757 = vadd.f32 %v1447, %v1745
    %v1758 = vadd.f32 %v1448, %v1750
    %v1759 = vadd.f32 %v1449, %v1753
    %v1760 = vld [vmem:[%s12] sm:$0x1]
    %v1762 = vlaneseq
    %v1763 = vshrl.u32 %v1762, 7
    %v1764 = vsub.s32 0, %v1763
    %v1765 = vrot.slane %v1760, %v1764
    %v1767 = vadd.f32 %v1756, %v1765
    %v1768 = vadd.f32 %v1757, %v1765
    %v1769 = vadd.f32 %v1758, %v1765
    %v1770 = vadd.f32 %v1759, %v1765
    %s1771 = scalar_lea.vmem %s3, 2
    %v1772 = vld [vmem:[%s1771] sm:$0x3]
    %1773 = vadd.xlane.f32.xlu0 %v1767
    %v1774 = vpop.xlane.xlu0 %1773
    %1775 = vadd.xlane.f32.xlu0 %v1768
    %v1776 = vpop.xlane.xlu0 %1775
    %1777 = vadd.xlane.f32.xlu0 %v1769
    %v1778 = vpop.xlane.xlu0 %1777
    %1779 = vadd.xlane.f32.xlu0 %v1770
    %v1780 = vpop.xlane.xlu0 %1779
    %v1781 = vmul.f32 %v1774, 0.03125
    %v1782 = vmul.f32 %v1776, 0.03125
    %v1783 = vmul.f32 %v1778, 0.03125
    %v1784 = vmul.f32 %v1780, 0.03125
    %v1785 = vsub.f32 %v1767, %v1781
    %v1786 = vsub.f32 %v1768, %v1782
    %v1787 = vsub.f32 %v1769, %v1783
    %v1788 = vsub.f32 %v1770, %v1784
    %v1789 = vmul.f32 %v1785, %v1785
    %v1790 = vmul.f32 %v1786, %v1786
    %v1791 = vmul.f32 %v1787, %v1787
    %v1792 = vmul.f32 %v1788, %v1788
    %v1793 = vmul.f32 %v1789, %v114
    %v1794 = vmul.f32 %v1790, %v114
    %v1795 = vmul.f32 %v1791, %v114
    %v1796 = vmul.f32 %v1792, %v114
    %1797 = vadd.xlane.f32.xlu0 %v1793
    %v1798 = vpop.xlane.xlu0 %1797
    %1799 = vadd.xlane.f32.xlu0 %v1794
    %v1800 = vpop.xlane.xlu0 %1799
    %1801 = vadd.xlane.f32.xlu0 %v1795
    %v1802 = vpop.xlane.xlu0 %1801
    %1803 = vadd.xlane.f32.xlu0 %v1796
    %v1804 = vpop.xlane.xlu0 %1803
    %v1805 = vmul.f32 %v1798, 0.03125
    %v1806 = vmul.f32 %v1800, 0.03125
    %v1807 = vmul.f32 %v1802, 0.03125
    %v1808 = vmul.f32 %v1804, 0.03125
    %v1809 = vadd.f32 %v1805, 1e-05
    %v1810 = vadd.f32 %v1806, 1e-05
    %v1811 = vadd.f32 %v1807, 1e-05
    %v1812 = vadd.f32 %v1808, 1e-05
    %v1813 = vrsqrt.pop %v1809
    %v1814 = vrsqrt.pop %v1810
    %v1815 = vrsqrt.pop %v1811
    %v1816 = vrsqrt.pop %v1812
    %v1817 = vmul.f32 %v1785, %v1813
    %v1818 = vmul.f32 %v1786, %v1814
    %v1819 = vmul.f32 %v1787, %v1815
    %v1820 = vmul.f32 %v1788, %v1816
    %v1821 = vlaneseq
    %v1822 = vshrl.u32 %v1821, 7
    %v1823 = vsub.s32 0, %v1822
    %v1824 = vrot.slane %v1772, %v1823
    %v1825 = vmul.f32 %v1817, %v1824
    %v1826 = vmul.f32 %v1818, %v1824
    %v1827 = vmul.f32 %v1819, %v1824
    %v1828 = vmul.f32 %v1820, %v1824
    %v1829 = vlaneseq
    %v1830 = vshrl.u32 %v1829, 7
    %v1831 = vsub.s32 1, %v1830
    %v1832 = vrot.slane %v1772, %v1831
    %v1833 = vadd.f32 %v1825, %v1832
    %v1834 = vadd.f32 %v1826, %v1832
    %v1835 = vadd.f32 %v1827, %v1832
    %v1836 = vadd.f32 %v1828, %v1832
    %s1837 = scalar_lea.vmem [#allocation2], 384
    %v1838 = vld [vmem:[%s1837] sm:$0xff]
    %v1839 = vld [vmem:[%s1837 + $0x8] sm:$0xff]
    %v1840 = vld [vmem:[%s1837 + $0x10] sm:$0xff]
    %v1841 = vld [vmem:[%s1837 + $0x18] sm:$0xff]
    %v1842 = vld [vmem:[%s1837 + $0x20] sm:$0xff]
    %v1843 = vld [vmem:[%s1837 + $0x28] sm:$0xff]
    %v1844 = vld [vmem:[%s1837 + $0x30] sm:$0xff]
    %v1845 = vld [vmem:[%s1837 + $0x38] sm:$0xff]
    %v1846 = vld [vmem:[%s1837 + $0x40] sm:$0xff]
    %v1847 = vld [vmem:[%s1837 + $0x48] sm:$0xff]
    %v1848 = vld [vmem:[%s1837 + $0x50] sm:$0xff]
    %v1849 = vld [vmem:[%s1837 + $0x58] sm:$0xff]
    %v1850 = vld [vmem:[%s1837 + $0x60] sm:$0xff]
    %v1851 = vld [vmem:[%s1837 + $0x68] sm:$0xff]
    %v1852 = vld [vmem:[%s1837 + $0x70] sm:$0xff]
    %v1853 = vld [vmem:[%s1837 + $0x78] sm:$0xff]
    %v1854 = vld [vmem:[%s1837 + $0x80] sm:$0xff]
    %v1855 = vld [vmem:[%s1837 + $0x88] sm:$0xff]
    %v1856 = vld [vmem:[%s1837 + $0x90] sm:$0xff]
    %v1857 = vld [vmem:[%s1837 + $0x98] sm:$0xff]
    %v1858 = vld [vmem:[%s1837 + $0xa0] sm:$0xff]
    %v1859 = vld [vmem:[%s1837 + $0xa8] sm:$0xff]
    %v1860 = vld [vmem:[%s1837 + $0xb0] sm:$0xff]
    %v1861 = vld [vmem:[%s1837 + $0xb8] sm:$0xff]
    %v1862 = vld [vmem:[%s1837 + $0xc0] sm:$0xff]
    %v1863 = vld [vmem:[%s1837 + $0xc8] sm:$0xff]
    %v1864 = vld [vmem:[%s1837 + $0xd0] sm:$0xff]
    %v1865 = vld [vmem:[%s1837 + $0xd8] sm:$0xff]
    %v1866 = vld [vmem:[%s1837 + $0xe0] sm:$0xff]
    %v1867 = vld [vmem:[%s1837 + $0xe8] sm:$0xff]
    %v1868 = vld [vmem:[%s1837 + $0xf0] sm:$0xff]
    %v1869 = vld [vmem:[%s1837 + $0xf8] sm:$0xff]
    %v1870 = vld [vmem:[%s1837 + $0x100] sm:$0xff]
    %v1871 = vld [vmem:[%s1837 + $0x108] sm:$0xff]
    %v1872 = vld [vmem:[%s1837 + $0x110] sm:$0xff]
    %v1873 = vld [vmem:[%s1837 + $0x118] sm:$0xff]
    %v1874 = vld [vmem:[%s1837 + $0x120] sm:$0xff]
    %v1875 = vld [vmem:[%s1837 + $0x128] sm:$0xff]
    %v1876 = vld [vmem:[%s1837 + $0x130] sm:$0xff]
    %v1877 = vld [vmem:[%s1837 + $0x138] sm:$0xff]
    %v1878 = vld [vmem:[%s1837 + $0x140] sm:$0xff]
    %v1879 = vld [vmem:[%s1837 + $0x148] sm:$0xff]
    %v1880 = vld [vmem:[%s1837 + $0x150] sm:$0xff]
    %v1881 = vld [vmem:[%s1837 + $0x158] sm:$0xff]
    %v1882 = vld [vmem:[%s1837 + $0x160] sm:$0xff]
    %v1883 = vld [vmem:[%s1837 + $0x168] sm:$0xff]
    %v1884 = vld [vmem:[%s1837 + $0x170] sm:$0xff]
    %v1885 = vld [vmem:[%s1837 + $0x178] sm:$0xff]
    %v1886 = vpack.c.bf16 %v1834, %v1833
    %v1887 = vpack.c.bf16 %v1836, %v1835
    %s1888 = scalar_lea.vmem %s5, 6
    %v1889 = vld [vmem:[%s1888] sm:$0x3f]
    %v1891 = vlaneseq
    %v1892 = vshrl.u32 %v1891, 7
    %v1893 = vsub.s32 0, %v1892
    %v1894 = vrot.slane %v1889, %v1893
    %v1895 = vlaneseq
    %v1896 = vshrl.u32 %v1895, 7
    %v1897 = vsub.s32 1, %v1896
    %v1898 = vrot.slane %v1889, %v1897
    %v1899 = vlaneseq
    %v1900 = vshrl.u32 %v1899, 7
    %v1901 = vsub.s32 2, %v1900
    %v1902 = vrot.slane %v1889, %v1901
    %v1903 = vlaneseq
    %v1904 = vshrl.u32 %v1903, 7
    %v1905 = vsub.s32 3, %v1904
    %v1906 = vrot.slane %v1889, %v1905
    %v1907 = vlaneseq
    %v1908 = vshrl.u32 %v1907, 7
    %v1909 = vsub.s32 4, %v1908
    %v1910 = vrot.slane %v1889, %v1909
    %v1911 = vlaneseq
    %v1912 = vshrl.u32 %v1911, 7
    %v1913 = vsub.s32 5, %v1912
    %v1914 = vrot.slane %v1889, %v1913
    %v1969 = vunpack.c.l.b16 %v1838
    %v1970 = vunpack.c.h.b16 %v1838
    %v1971 = vunpack.c.l.b16 %v1839
    %v1972 = vunpack.c.h.b16 %v1839
    %v1973 = vunpack.c.l.b16 %v1840
    %v1974 = vunpack.c.h.b16 %v1840
    %v1975 = vunpack.c.l.b16 %v1841
    %v1976 = vunpack.c.h.b16 %v1841
    %v1977 = vunpack.c.l.b16 %v1842
    %v1978 = vunpack.c.h.b16 %v1842
    %v1979 = vunpack.c.l.b16 %v1843
    %v1980 = vunpack.c.h.b16 %v1843
    %v1981 = vunpack.c.l.b16 %v1844
    %v1982 = vunpack.c.h.b16 %v1844
    %v1983 = vunpack.c.l.b16 %v1845
    %v1984 = vunpack.c.h.b16 %v1845
    %v1985 = vunpack.c.l.b16 %v1846
    %v1986 = vunpack.c.h.b16 %v1846
    %v1987 = vunpack.c.l.b16 %v1847
    %v1988 = vunpack.c.h.b16 %v1847
    %v1989 = vunpack.c.l.b16 %v1848
    %v1990 = vunpack.c.h.b16 %v1848
    %v1991 = vunpack.c.l.b16 %v1849
    %v1992 = vunpack.c.h.b16 %v1849
    %v1993 = vunpack.c.l.b16 %v1850
    %v1994 = vunpack.c.h.b16 %v1850
    %v1995 = vunpack.c.l.b16 %v1851
    %v1996 = vunpack.c.h.b16 %v1851
    %v1997 = vunpack.c.l.b16 %v1852
    %v1998 = vunpack.c.h.b16 %v1852
    %v1999 = vunpack.c.l.b16 %v1853
    %v2000 = vunpack.c.h.b16 %v1853
    %v2001 = vunpack.c.l.b16 %v1854
    %v2002 = vunpack.c.h.b16 %v1854
    %v2003 = vunpack.c.l.b16 %v1855
    %v2004 = vunpack.c.h.b16 %v1855
    %v2005 = vunpack.c.l.b16 %v1856
    %v2006 = vunpack.c.h.b16 %v1856
    %v2007 = vunpack.c.l.b16 %v1857
    %v2008 = vunpack.c.h.b16 %v1857
    %v2009 = vunpack.c.l.b16 %v1858
    %v2010 = vunpack.c.h.b16 %v1858
    %v2011 = vunpack.c.l.b16 %v1859
    %v2012 = vunpack.c.h.b16 %v1859
    %v2013 = vunpack.c.l.b16 %v1860
    %v2014 = vunpack.c.h.b16 %v1860
    %v2015 = vunpack.c.l.b16 %v1861
    %v2016 = vunpack.c.h.b16 %v1861
    %v2017 = vunpack.c.l.b16 %v1862
    %v2018 = vunpack.c.h.b16 %v1862
    %v2019 = vunpack.c.l.b16 %v1863
    %v2020 = vunpack.c.h.b16 %v1863
    %v2021 = vunpack.c.l.b16 %v1864
    %v2022 = vunpack.c.h.b16 %v1864
    %v2023 = vunpack.c.l.b16 %v1865
    %v2024 = vunpack.c.h.b16 %v1865
    %v2025 = vunpack.c.l.b16 %v1866
    %v2026 = vunpack.c.h.b16 %v1866
    %v2027 = vunpack.c.l.b16 %v1867
    %v2028 = vunpack.c.h.b16 %v1867
    %v2029 = vunpack.c.l.b16 %v1868
    %v2030 = vunpack.c.h.b16 %v1868
    %v2031 = vunpack.c.l.b16 %v1869
    %v2032 = vunpack.c.h.b16 %v1869
    %v2033 = vunpack.c.l.b16 %v1870
    %v2034 = vunpack.c.h.b16 %v1870
    %v2035 = vunpack.c.l.b16 %v1871
    %v2036 = vunpack.c.h.b16 %v1871
    %v2037 = vunpack.c.l.b16 %v1872
    %v2038 = vunpack.c.h.b16 %v1872
    %v2039 = vunpack.c.l.b16 %v1873
    %v2040 = vunpack.c.h.b16 %v1873
    %v2041 = vunpack.c.l.b16 %v1874
    %v2042 = vunpack.c.h.b16 %v1874
    %v2043 = vunpack.c.l.b16 %v1875
    %v2044 = vunpack.c.h.b16 %v1875
    %v2045 = vunpack.c.l.b16 %v1876
    %v2046 = vunpack.c.h.b16 %v1876
    %v2047 = vunpack.c.l.b16 %v1877
    %v2048 = vunpack.c.h.b16 %v1877
    %v2049 = vunpack.c.l.b16 %v1878
    %v2050 = vunpack.c.h.b16 %v1878
    %v2051 = vunpack.c.l.b16 %v1879
    %v2052 = vunpack.c.h.b16 %v1879
    %v2053 = vunpack.c.l.b16 %v1880
    %v2054 = vunpack.c.h.b16 %v1880
    %v2055 = vunpack.c.l.b16 %v1881
    %v2056 = vunpack.c.h.b16 %v1881
    %v2057 = vunpack.c.l.b16 %v1882
    %v2058 = vunpack.c.h.b16 %v1882
    %v2059 = vunpack.c.l.b16 %v1883
    %v2060 = vunpack.c.h.b16 %v1883
    %v2061 = vunpack.c.l.b16 %v1884
    %v2062 = vunpack.c.h.b16 %v1884
    %v2063 = vunpack.c.l.b16 %v1885
    %v2064 = vunpack.c.h.b16 %v1885
    %v2065 = vpack.c.b16 %v1975, %v1969
    %v2066 = vpack.c.b16 %v1976, %v1970
    %v2067 = vpack.c.b16 %v1977, %v1971
    %v2068 = vpack.c.b16 %v1978, %v1972
    %v2069 = vpack.c.b16 %v1979, %v1973
    %v2070 = vpack.c.b16 %v1980, %v1974
    %v2071 = vpack.c.b16 %v1987, %v1981
    %v2072 = vpack.c.b16 %v1988, %v1982
    %v2073 = vpack.c.b16 %v1989, %v1983
    %v2074 = vpack.c.b16 %v1990, %v1984
    %v2075 = vpack.c.b16 %v1991, %v1985
    %v2076 = vpack.c.b16 %v1992, %v1986
    %v2077 = vpack.c.b16 %v1999, %v1993
    %v2078 = vpack.c.b16 %v2000, %v1994
    %v2079 = vpack.c.b16 %v2001, %v1995
    %v2080 = vpack.c.b16 %v2002, %v1996
    %v2081 = vpack.c.b16 %v2003, %v1997
    %v2082 = vpack.c.b16 %v2004, %v1998
    %v2083 = vpack.c.b16 %v2011, %v2005
    %v2084 = vpack.c.b16 %v2012, %v2006
    %v2085 = vpack.c.b16 %v2013, %v2007
    %v2086 = vpack.c.b16 %v2014, %v2008
    %v2087 = vpack.c.b16 %v2015, %v2009
    %v2088 = vpack.c.b16 %v2016, %v2010
    %v2089 = vpack.c.b16 %v2023, %v2017
    %v2090 = vpack.c.b16 %v2024, %v2018
    %v2091 = vpack.c.b16 %v2025, %v2019
    %v2092 = vpack.c.b16 %v2026, %v2020
    %v2093 = vpack.c.b16 %v2027, %v2021
    %v2094 = vpack.c.b16 %v2028, %v2022
    %v2095 = vpack.c.b16 %v2035, %v2029
    %v2096 = vpack.c.b16 %v2036, %v2030
    %v2097 = vpack.c.b16 %v2037, %v2031
    %v2098 = vpack.c.b16 %v2038, %v2032
    %v2099 = vpack.c.b16 %v2039, %v2033
    %v2100 = vpack.c.b16 %v2040, %v2034
    %v2101 = vpack.c.b16 %v2047, %v2041
    %v2102 = vpack.c.b16 %v2048, %v2042
    %v2103 = vpack.c.b16 %v2049, %v2043
    %v2104 = vpack.c.b16 %v2050, %v2044
    %v2105 = vpack.c.b16 %v2051, %v2045
    %v2106 = vpack.c.b16 %v2052, %v2046
    %v2107 = vpack.c.b16 %v2059, %v2053
    %v2108 = vpack.c.b16 %v2060, %v2054
    %v2109 = vpack.c.b16 %v2061, %v2055
    %v2110 = vpack.c.b16 %v2062, %v2056
    %v2111 = vpack.c.b16 %v2063, %v2057
    %v2112 = vpack.c.b16 %v2064, %v2058
    %2161 = vmatprep.subr.bf16.mxu0 %v2066
    %2162 = vmatpush1.bf16.msra.mxu0 %v2065
    %2163 = vmatprep.subr.bf16.mxu0 %v2072
    %2164 = vmatpush1.bf16.msra.mxu0 %v2071
    %2165 = vmatprep.subr.bf16.mxu0 %v2078
    %2166 = vmatpush1.bf16.msra.mxu0 %v2077
    %2167 = vmatprep.subr.bf16.mxu0 %v2084
    %2168 = vmatpush1.bf16.msra.mxu0 %v2083
    %2169 = vmatprep.subr.bf16.mxu0 %v2090
    %2170 = vmatpush1.bf16.msra.mxu0 %v2089
    %2171 = vmatprep.subr.bf16.mxu0 %v2096
    %2172 = vmatpush1.bf16.msra.mxu0 %v2095
    %2173 = vmatprep.subr.bf16.mxu0 %v2102
    %2174 = vmatpush1.bf16.msra.mxu0 %v2101
    %2175 = vmatprep.subr.bf16.mxu0 %v2108
    %2176 = vmatpush1.bf16.msra.mxu0 %v2107
    %2177 = vmatprep.subr.bf16.mxu0 0
    %2178 = vmatpush1.bf16.msra.mxu0 0
    %2179 = vmatprep.subr.bf16.mxu0 0
    %2180 = vmatpush1.bf16.msra.mxu0 0
    %2181 = vmatprep.subr.bf16.mxu0 0
    %2182 = vmatpush1.bf16.msra.mxu0 0
    %2183 = vmatprep.subr.bf16.mxu0 0
    %2184 = vmatpush1.bf16.msra.mxu0 0
    %2185 = vmatprep.subr.bf16.mxu0 0
    %2186 = vmatpush1.bf16.msra.mxu0 0
    %2187 = vmatprep.subr.bf16.mxu0 0
    %2188 = vmatpush1.bf16.msra.mxu0 0
    %2189 = vmatprep.subr.bf16.mxu0 0
    %2190 = vmatpush1.bf16.msra.mxu0 0
    %2191 = vmatprep.subr.bf16.mxu0 0
    %2192 = vmatpush1.bf16.msra.mxu0 0
    %2193 = vmatprep.mubr.bf16.mxu0 0
    %2194 = vmatmul.mubr.bf16.gmra.mrb[0].mxu0 %v1886
    %v2195 = vpop.f32.mrb[0].mxu0
    %v2196 = vadd.f32 %v1894, %v2195
    %v2197 = vpop.f32.mrb[0].mxu0
    %v2198 = vadd.f32 %v1898, %v2197
    %v2199 = vpop.f32.mrb[0].mxu0
    %v2200 = vadd.f32 %v1894, %v2199
    %v2201 = vpop.f32.mrb[0].mxu0
    %v2202 = vadd.f32 %v1898, %v2201
    %2203 = vmatprep.mubr.bf16.mxu0 0
    %2204 = vmatmul.mubr.bf16.gmra.mrb[0].mxu0 %v1887
    %v2205 = vpop.f32.mrb[0].mxu0
    %v2206 = vadd.f32 %v1894, %v2205
    %v2207 = vpop.f32.mrb[0].mxu0
    %v2208 = vadd.f32 %v1898, %v2207
    %v2209 = vpop.f32.mrb[0].mxu0
    %v2210 = vadd.f32 %v1894, %v2209
    %v2211 = vpop.f32.mrb[0].mxu0
    %v2212 = vadd.f32 %v1898, %v2211
    %2213 = vdwg.mxu0
    %2214 = vmatprep.subr.bf16.mxu0 %v2068
    %2215 = vmatpush1.bf16.msra.mxu0 %v2067
    %2216 = vmatprep.subr.bf16.mxu0 %v2074
    %2217 = vmatpush1.bf16.msra.mxu0 %v2073
    %2218 = vmatprep.subr.bf16.mxu0 %v2080
    %2219 = vmatpush1.bf16.msra.mxu0 %v2079
    %2220 = vmatprep.subr.bf16.mxu0 %v2086
    %2221 = vmatpush1.bf16.msra.mxu0 %v2085
    %2222 = vmatprep.subr.bf16.mxu0 %v2092
    %2223 = vmatpush1.bf16.msra.mxu0 %v2091
    %2224 = vmatprep.subr.bf16.mxu0 %v2098
    %2225 = vmatpush1.bf16.msra.mxu0 %v2097
    %2226 = vmatprep.subr.bf16.mxu0 %v2104
    %2227 = vmatpush1.bf16.msra.mxu0 %v2103
    %2228 = vmatprep.subr.bf16.mxu0 %v2110
    %2229 = vmatpush1.bf16.msra.mxu0 %v2109
    %2230 = vmatprep.subr.bf16.mxu0 0
    %2231 = vmatpush1.bf16.msra.mxu0 0
    %2232 = vmatprep.subr.bf16.mxu0 0
    %2233 = vmatpush1.bf16.msra.mxu0 0
    %2234 = vmatprep.subr.bf16.mxu0 0
    %2235 = vmatpush1.bf16.msra.mxu0 0
    %2236 = vmatprep.subr.bf16.mxu0 0
    %2237 = vmatpush1.bf16.msra.mxu0 0
    %2238 = vmatprep.subr.bf16.mxu0 0
    %2239 = vmatpush1.bf16.msra.mxu0 0
    %2240 = vmatprep.subr.bf16.mxu0 0
    %2241 = vmatpush1.bf16.msra.mxu0 0
    %2242 = vmatprep.subr.bf16.mxu0 0
    %2243 = vmatpush1.bf16.msra.mxu0 0
    %2244 = vmatprep.subr.bf16.mxu0 0
    %2245 = vmatpush1.bf16.msra.mxu0 0
    %2246 = vmatprep.mubr.bf16.mxu0 0
    %2247 = vmatmul.mubr.bf16.gmra.mrb[0].mxu0 %v1886
    %v2248 = vpop.f32.mrb[0].mxu0
    %v2249 = vadd.f32 %v1902, %v2248
    %v2250 = vpop.f32.mrb[0].mxu0
    %v2251 = vadd.f32 %v1906, %v2250
    %v2252 = vpop.f32.mrb[0].mxu0
    %v2253 = vadd.f32 %v1902, %v2252
    %v2254 = vpop.f32.mrb[0].mxu0
    %v2255 = vadd.f32 %v1906, %v2254
    %2256 = vmatprep.mubr.bf16.mxu0 0
    %2257 = vmatmul.mubr.bf16.gmra.mrb[0].mxu0 %v1887
    %v2258 = vpop.f32.mrb[0].mxu0
    %v2259 = vadd.f32 %v1902, %v2258
    %v2260 = vpop.f32.mrb[0].mxu0
    %v2261 = vadd.f32 %v1906, %v2260
    %v2262 = vpop.f32.mrb[0].mxu0
    %v2263 = vadd.f32 %v1902, %v2262
    %v2264 = vpop.f32.mrb[0].mxu0
    %v2265 = vadd.f32 %v1906, %v2264
    %2266 = vdwg.mxu0
    %2267 = vmatprep.subr.bf16.mxu0 %v2070
    %2268 = vmatpush1.bf16.msra.mxu0 %v2069
    %2269 = vmatprep.subr.bf16.mxu0 %v2076
    %2270 = vmatpush1.bf16.msra.mxu0 %v2075
    %2271 = vmatprep.subr.bf16.mxu0 %v2082
    %2272 = vmatpush1.bf16.msra.mxu0 %v2081
    %2273 = vmatprep.subr.bf16.mxu0 %v2088
    %2274 = vmatpush1.bf16.msra.mxu0 %v2087
    %2275 = vmatprep.subr.bf16.mxu0 %v2094
    %2276 = vmatpush1.bf16.msra.mxu0 %v2093
    %2277 = vmatprep.subr.bf16.mxu0 %v2100
    %2278 = vmatpush1.bf16.msra.mxu0 %v2099
    %2279 = vmatprep.subr.bf16.mxu0 %v2106
    %2280 = vmatpush1.bf16.msra.mxu0 %v2105
    %2281 = vmatprep.subr.bf16.mxu0 %v2112
    %2282 = vmatpush1.bf16.msra.mxu0 %v2111
    %2283 = vmatprep.subr.bf16.mxu0 0
    %2284 = vmatpush1.bf16.msra.mxu0 0
    %2285 = vmatprep.subr.bf16.mxu0 0
    %2286 = vmatpush1.bf16.msra.mxu0 0
    %2287 = vmatprep.subr.bf16.mxu0 0
    %2288 = vmatpush1.bf16.msra.mxu0 0
    %2289 = vmatprep.subr.bf16.mxu0 0
    %2290 = vmatpush1.bf16.msra.mxu0 0
    %2291 = vmatprep.subr.bf16.mxu0 0
    %2292 = vmatpush1.bf16.msra.mxu0 0
    %2293 = vmatprep.subr.bf16.mxu0 0
    %2294 = vmatpush1.bf16.msra.mxu0 0
    %2295 = vmatprep.subr.bf16.mxu0 0
    %2296 = vmatpush1.bf16.msra.mxu0 0
    %2297 = vmatprep.subr.bf16.mxu0 0
    %2298 = vmatpush1.bf16.msra.mxu0 0
    %2299 = vmatprep.mubr.bf16.mxu0 0
    %2300 = vmatmul.mubr.bf16.gmra.mrb[0].mxu0 %v1886
    %v2301 = vpop.f32.mrb[0].mxu0
    %v2302 = vadd.f32 %v1910, %v2301
    %v2303 = vpop.f32.mrb[0].mxu0
    %v2304 = vadd.f32 %v1914, %v2303
    %v2305 = vpop.f32.mrb[0].mxu0
    %v2306 = vadd.f32 %v1910, %v2305
    %v2307 = vpop.f32.mrb[0].mxu0
    %v2308 = vadd.f32 %v1914, %v2307
    %2309 = vmatprep.mubr.bf16.mxu0 0
    %2310 = vmatmul.mubr.bf16.gmra.mrb[0].mxu0 %v1887
    %v2311 = vpop.f32.mrb[0].mxu0
    %v2312 = vadd.f32 %v1910, %v2311
    %v2313 = vpop.f32.mrb[0].mxu0
    %v2314 = vadd.f32 %v1914, %v2313
    %v2315 = vpop.f32.mrb[0].mxu0
    %v2316 = vadd.f32 %v1910, %v2315
    %v2317 = vpop.f32.mrb[0].mxu0
    %v2318 = vadd.f32 %v1914, %v2317
    %2319 = vdwg.mxu0
    %v2320 = vpack.c.bf16 %v2200, %v2196
    %v2321 = vpack.c.bf16 %v2210, %v2206
    %v2322 = vpack.c.bf16 %v2253, %v2249
    %v2323 = vpack.c.bf16 %v2263, %v2259
    %2324 = vmatprep.subr.bf16.mxu0 0
    %2325 = vmatpush1.bf16.xpose.msra.mxu0 %v2322
    %2326 = vmatprep.subr.bf16.mxu0 0
    %2327 = vmatpush1.bf16.xpose.msra.mxu0 0
    %2328 = vmatprep.subr.bf16.mxu0 0
    %2329 = vmatpush1.bf16.xpose.msra.mxu0 0
    %2330 = vmatprep.subr.bf16.mxu0 0
    %2331 = vmatpush1.bf16.xpose.msra.mxu0 0
    %2332 = vmatprep.subr.bf16.mxu0 0
    %2333 = vmatpush1.bf16.xpose.msra.mxu0 0
    %2334 = vmatprep.subr.bf16.mxu0 0
    %2335 = vmatpush1.bf16.xpose.msra.mxu0 0
    %2336 = vmatprep.subr.bf16.mxu0 0
    %2337 = vmatpush1.bf16.xpose.msra.mxu0 0
    %2338 = vmatprep.subr.bf16.mxu0 0
    %2339 = vmatpush1.bf16.xpose.msra.mxu0 0
    %2340 = vmatprep.subr.bf16.mxu0 0
    %2341 = vmatpush1.bf16.xpose.msra.mxu0 0
    %2342 = vmatprep.subr.bf16.mxu0 0
    %2343 = vmatpush1.bf16.xpose.msra.mxu0 0
    %2344 = vmatprep.subr.bf16.mxu0 0
    %2345 = vmatpush1.bf16.xpose.msra.mxu0 0
    %2346 = vmatprep.subr.bf16.mxu0 0
    %2347 = vmatpush1.bf16.xpose.msra.mxu0 0
    %2348 = vmatprep.subr.bf16.mxu0 0
    %2349 = vmatpush1.bf16.xpose.msra.mxu0 0
    %2350 = vmatprep.subr.bf16.mxu0 0
    %2351 = vmatpush1.bf16.xpose.msra.mxu0 0
    %2352 = vmatprep.subr.bf16.mxu0 0
    %2353 = vmatpush1.bf16.xpose.msra.mxu0 0
    %2354 = vmatprep.subr.bf16.mxu0 0
    %2355 = vmatpush1.bf16.xpose.msra.mxu0 0
    %2356 = vmatprep.mubr.bf16.mxu0 0
    %2357 = vmatmul.mubr.bf16.gmra.mrb[0].mxu0 %v2320
    %v2358 = vpop.f32.mrb[0].mxu0
    %v2359 = vadd.f32 0.0, %v2358
    %v2360 = vpop.f32.mrb[0].mxu0
    %v2361 = vpop.f32.mrb[0].mxu0
    %v2362 = vadd.f32 0.0, %v2361
    %v2363 = vpop.f32.mrb[0].mxu0
    %2364 = vdwg.mxu0
    %2365 = vmatprep.subr.bf16.mxu0 0
    %2366 = vmatpush1.bf16.xpose.msra.mxu0 %v2323
    %2367 = vmatprep.subr.bf16.mxu0 0
    %2368 = vmatpush1.bf16.xpose.msra.mxu0 0
    %2369 = vmatprep.subr.bf16.mxu0 0
    %2370 = vmatpush1.bf16.xpose.msra.mxu0 0
    %2371 = vmatprep.subr.bf16.mxu0 0
    %2372 = vmatpush1.bf16.xpose.msra.mxu0 0
    %2373 = vmatprep.subr.bf16.mxu0 0
    %2374 = vmatpush1.bf16.xpose.msra.mxu0 0
    %2375 = vmatprep.subr.bf16.mxu0 0
    %2376 = vmatpush1.bf16.xpose.msra.mxu0 0
    %2377 = vmatprep.subr.bf16.mxu0 0
    %2378 = vmatpush1.bf16.xpose.msra.mxu0 0
    %2379 = vmatprep.subr.bf16.mxu0 0
    %2380 = vmatpush1.bf16.xpose.msra.mxu0 0
    %2381 = vmatprep.subr.bf16.mxu0 0
    %2382 = vmatpush1.bf16.xpose.msra.mxu0 0
    %2383 = vmatprep.subr.bf16.mxu0 0
    %2384 = vmatpush1.bf16.xpose.msra.mxu0 0
    %2385 = vmatprep.subr.bf16.mxu0 0
    %2386 = vmatpush1.bf16.xpose.msra.mxu0 0
    %2387 = vmatprep.subr.bf16.mxu0 0
    %2388 = vmatpush1.bf16.xpose.msra.mxu0 0
    %2389 = vmatprep.subr.bf16.mxu0 0
    %2390 = vmatpush1.bf16.xpose.msra.mxu0 0
    %2391 = vmatprep.subr.bf16.mxu0 0
    %2392 = vmatpush1.bf16.xpose.msra.mxu0 0
    %2393 = vmatprep.subr.bf16.mxu0 0
    %2394 = vmatpush1.bf16.xpose.msra.mxu0 0
    %2395 = vmatprep.subr.bf16.mxu0 0
    %2396 = vmatpush1.bf16.xpose.msra.mxu0 0
    %2397 = vmatprep.mubr.bf16.mxu0 0
    %2398 = vmatmul.mubr.bf16.gmra.mrb[0].mxu0 %v2321
    %v2399 = vpop.f32.mrb[0].mxu0
    %v2400 = vadd.f32 0.0, %v2399
    %v2401 = vpop.f32.mrb[0].mxu0
    %v2402 = vpop.f32.mrb[0].mxu0
    %v2403 = vadd.f32 0.0, %v2402
    %v2404 = vpop.f32.mrb[0].mxu0
    %2405 = vdwg.mxu0
    %v2406 = vmul.f32 %v2359, 0.25
    %v2407 = vmul.f32 %v2362, 0.25
    %v2408 = vmul.f32 %v2400, 0.25
    %v2409 = vmul.f32 %v2403, 0.25
    %v2410 = vsel %vm891, %v2406, -inf
    %2411 = vmax.xlane.f32.xlu0 %v2410
    %v2412 = vpop.xlane.xlu0 %2411
    %v2413 = vsel %vm891, %v2407, -inf
    %2414 = vmax.xlane.f32.xlu0 %v2413
    %v2415 = vpop.xlane.xlu0 %2414
    %v2416 = vsel %vm891, %v2408, -inf
    %2417 = vmax.xlane.f32.xlu0 %v2416
    %v2418 = vpop.xlane.xlu0 %2417
    %v2419 = vsel %vm891, %v2409, -inf
    %2420 = vmax.xlane.f32.xlu0 %v2419
    %v2421 = vpop.xlane.xlu0 %2420
    %v2422 = vsub.f32 %v2406, %v2412
    %v2423 = vsub.f32 %v2407, %v2415
    %v2424 = vsub.f32 %v2408, %v2418
    %v2425 = vsub.f32 %v2409, %v2421
    %v2426 = vmul.f32 %v2422, 1.442695
    %v2427 = vpow.pop %v2426
    %v2428 = vmul.f32 %v2423, 1.442695
    %v2429 = vpow.pop %v2428
    %v2430 = vmul.f32 %v2424, 1.442695
    %v2431 = vpow.pop %v2430
    %v2432 = vmul.f32 %v2425, 1.442695
    %v2433 = vpow.pop %v2432
    %v2434 = vsel %vm891, %v2427, 0.0
    %2435 = vadd.xlane.f32.xlu0 %v2434
    %v2436 = vpop.xlane.xlu0 %2435
    %v2437 = vsel %vm891, %v2429, 0.0
    %2438 = vadd.xlane.f32.xlu0 %v2437
    %v2439 = vpop.xlane.xlu0 %2438
    %v2440 = vsel %vm891, %v2431, 0.0
    %2441 = vadd.xlane.f32.xlu0 %v2440
    %v2442 = vpop.xlane.xlu0 %2441
    %v2443 = vsel %vm891, %v2433, 0.0
    %2444 = vadd.xlane.f32.xlu0 %v2443
    %v2445 = vpop.xlane.xlu0 %2444
    %v2446 = vrcp.pop %v2436
    %v2447 = vmul.f32 %v2427, %v2446
    %v2448 = vrcp.pop %v2439
    %v2449 = vmul.f32 %v2429, %v2448
    %v2450 = vrcp.pop %v2442
    %v2451 = vmul.f32 %v2431, %v2450
    %v2452 = vrcp.pop %v2445
    %v2453 = vmul.f32 %v2433, %v2452
    %v2454 = vpack.c.bf16 %v2449, %v2447
    %v2455 = vpack.c.bf16 %v2453, %v2451
    %v2456 = vpack.c.bf16 %v2306, %v2302
    %v2457 = vpack.c.bf16 %v2316, %v2312
    %v2459 = vsel %vm891, %v2454, 0
    %2461 = vmatprep.subr.bf16.mxu0 0
    %2462 = vmatpush1.bf16.msra.mxu0 %v2456
    %2463 = vmatprep.subr.bf16.mxu0 0
    %2464 = vmatpush1.bf16.msra.mxu0 0
    %2465 = vmatprep.subr.bf16.mxu0 0
    %2466 = vmatpush1.bf16.msra.mxu0 0
    %2467 = vmatprep.subr.bf16.mxu0 0
    %2468 = vmatpush1.bf16.msra.mxu0 0
    %2469 = vmatprep.subr.bf16.mxu0 0
    %2470 = vmatpush1.bf16.msra.mxu0 0
    %2471 = vmatprep.subr.bf16.mxu0 0
    %2472 = vmatpush1.bf16.msra.mxu0 0
    %2473 = vmatprep.subr.bf16.mxu0 0
    %2474 = vmatpush1.bf16.msra.mxu0 0
    %2475 = vmatprep.subr.bf16.mxu0 0
    %2476 = vmatpush1.bf16.msra.mxu0 0
    %2477 = vmatprep.subr.bf16.mxu0 0
    %2478 = vmatpush1.bf16.msra.mxu0 0
    %2479 = vmatprep.subr.bf16.mxu0 0
    %2480 = vmatpush1.bf16.msra.mxu0 0
    %2481 = vmatprep.subr.bf16.mxu0 0
    %2482 = vmatpush1.bf16.msra.mxu0 0
    %2483 = vmatprep.subr.bf16.mxu0 0
    %2484 = vmatpush1.bf16.msra.mxu0 0
    %2485 = vmatprep.subr.bf16.mxu0 0
    %2486 = vmatpush1.bf16.msra.mxu0 0
    %2487 = vmatprep.subr.bf16.mxu0 0
    %2488 = vmatpush1.bf16.msra.mxu0 0
    %2489 = vmatprep.subr.bf16.mxu0 0
    %2490 = vmatpush1.bf16.msra.mxu0 0
    %2491 = vmatprep.subr.bf16.mxu0 0
    %2492 = vmatpush1.bf16.msra.mxu0 0
    %2493 = vmatprep.mubr.bf16.mxu0 0
    %2494 = vmatmul.mubr.bf16.gmra.mrb[0].mxu0 %v2459
    %v2495 = vpop.f32.mrb[0].mxu0
    %v2496 = vadd.f32 0.0, %v2495
    %v2497 = vpop.f32.mrb[0].mxu0
    %v2498 = vpop.f32.mrb[0].mxu0
    %v2499 = vadd.f32 0.0, %v2498
    %v2500 = vpop.f32.mrb[0].mxu0
    %2501 = vdwg.mxu0
    %v2503 = vsel %vm891, %v2455, 0
    %2505 = vmatprep.subr.bf16.mxu0 0
    %2506 = vmatpush1.bf16.msra.mxu0 %v2457
    %2507 = vmatprep.subr.bf16.mxu0 0
    %2508 = vmatpush1.bf16.msra.mxu0 0
    %2509 = vmatprep.subr.bf16.mxu0 0
    %2510 = vmatpush1.bf16.msra.mxu0 0
    %2511 = vmatprep.subr.bf16.mxu0 0
    %2512 = vmatpush1.bf16.msra.mxu0 0
    %2513 = vmatprep.subr.bf16.mxu0 0
    %2514 = vmatpush1.bf16.msra.mxu0 0
    %2515 = vmatprep.subr.bf16.mxu0 0
    %2516 = vmatpush1.bf16.msra.mxu0 0
    %2517 = vmatprep.subr.bf16.mxu0 0
    %2518 = vmatpush1.bf16.msra.mxu0 0
    %2519 = vmatprep.subr.bf16.mxu0 0
    %2520 = vmatpush1.bf16.msra.mxu0 0
    %2521 = vmatprep.subr.bf16.mxu0 0
    %2522 = vmatpush1.bf16.msra.mxu0 0
    %2523 = vmatprep.subr.bf16.mxu0 0
    %2524 = vmatpush1.bf16.msra.mxu0 0
    %2525 = vmatprep.subr.bf16.mxu0 0
    %2526 = vmatpush1.bf16.msra.mxu0 0
    %2527 = vmatprep.subr.bf16.mxu0 0
    %2528 = vmatpush1.bf16.msra.mxu0 0
    %2529 = vmatprep.subr.bf16.mxu0 0
    %2530 = vmatpush1.bf16.msra.mxu0 0
    %2531 = vmatprep.subr.bf16.mxu0 0
    %2532 = vmatpush1.bf16.msra.mxu0 0
    %2533 = vmatprep.subr.bf16.mxu0 0
    %2534 = vmatpush1.bf16.msra.mxu0 0
    %2535 = vmatprep.subr.bf16.mxu0 0
    %2536 = vmatpush1.bf16.msra.mxu0 0
    %2537 = vmatprep.mubr.bf16.mxu0 0
    %2538 = vmatmul.mubr.bf16.gmra.mrb[0].mxu0 %v2503
    %v2539 = vpop.f32.mrb[0].mxu0
    %v2540 = vadd.f32 0.0, %v2539
    %v2541 = vpop.f32.mrb[0].mxu0
    %v2542 = vpop.f32.mrb[0].mxu0
    %v2543 = vadd.f32 0.0, %v2542
    %v2544 = vpop.f32.mrb[0].mxu0
    %2545 = vdwg.mxu0
    %v2546 = vpack.c.bf16 %v2202, %v2198
    %v2547 = vpack.c.bf16 %v2212, %v2208
    %v2548 = vpack.c.bf16 %v2255, %v2251
    %v2549 = vpack.c.bf16 %v2265, %v2261
    %2550 = vmatprep.subr.bf16.mxu0 0
    %2551 = vmatpush1.bf16.xpose.msra.mxu0 %v2548
    %2552 = vmatprep.subr.bf16.mxu0 0
    %2553 = vmatpush1.bf16.xpose.msra.mxu0 0
    %2554 = vmatprep.subr.bf16.mxu0 0
    %2555 = vmatpush1.bf16.xpose.msra.mxu0 0
    %2556 = vmatprep.subr.bf16.mxu0 0
    %2557 = vmatpush1.bf16.xpose.msra.mxu0 0
    %2558 = vmatprep.subr.bf16.mxu0 0
    %2559 = vmatpush1.bf16.xpose.msra.mxu0 0
    %2560 = vmatprep.subr.bf16.mxu0 0
    %2561 = vmatpush1.bf16.xpose.msra.mxu0 0
    %2562 = vmatprep.subr.bf16.mxu0 0
    %2563 = vmatpush1.bf16.xpose.msra.mxu0 0
    %2564 = vmatprep.subr.bf16.mxu0 0
    %2565 = vmatpush1.bf16.xpose.msra.mxu0 0
    %2566 = vmatprep.subr.bf16.mxu0 0
    %2567 = vmatpush1.bf16.xpose.msra.mxu0 0
    %2568 = vmatprep.subr.bf16.mxu0 0
    %2569 = vmatpush1.bf16.xpose.msra.mxu0 0
    %2570 = vmatprep.subr.bf16.mxu0 0
    %2571 = vmatpush1.bf16.xpose.msra.mxu0 0
    %2572 = vmatprep.subr.bf16.mxu0 0
    %2573 = vmatpush1.bf16.xpose.msra.mxu0 0
    %2574 = vmatprep.subr.bf16.mxu0 0
    %2575 = vmatpush1.bf16.xpose.msra.mxu0 0
    %2576 = vmatprep.subr.bf16.mxu0 0
    %2577 = vmatpush1.bf16.xpose.msra.mxu0 0
    %2578 = vmatprep.subr.bf16.mxu0 0
    %2579 = vmatpush1.bf16.xpose.msra.mxu0 0
    %2580 = vmatprep.subr.bf16.mxu0 0
    %2581 = vmatpush1.bf16.xpose.msra.mxu0 0
    %2582 = vmatprep.mubr.bf16.mxu0 0
    %2583 = vmatmul.mubr.bf16.gmra.mrb[0].mxu0 %v2546
    %v2584 = vpop.f32.mrb[0].mxu0
    %v2585 = vadd.f32 0.0, %v2584
    %v2586 = vpop.f32.mrb[0].mxu0
    %v2587 = vpop.f32.mrb[0].mxu0
    %v2588 = vadd.f32 0.0, %v2587
    %v2589 = vpop.f32.mrb[0].mxu0
    %2590 = vdwg.mxu0
    %2591 = vmatprep.subr.bf16.mxu0 0
    %2592 = vmatpush1.bf16.xpose.msra.mxu0 %v2549
    %2593 = vmatprep.subr.bf16.mxu0 0
    %2594 = vmatpush1.bf16.xpose.msra.mxu0 0
    %2595 = vmatprep.subr.bf16.mxu0 0
    %2596 = vmatpush1.bf16.xpose.msra.mxu0 0
    %2597 = vmatprep.subr.bf16.mxu0 0
    %2598 = vmatpush1.bf16.xpose.msra.mxu0 0
    %2599 = vmatprep.subr.bf16.mxu0 0
    %2600 = vmatpush1.bf16.xpose.msra.mxu0 0
    %2601 = vmatprep.subr.bf16.mxu0 0
    %2602 = vmatpush1.bf16.xpose.msra.mxu0 0
    %2603 = vmatprep.subr.bf16.mxu0 0
    %2604 = vmatpush1.bf16.xpose.msra.mxu0 0
    %2605 = vmatprep.subr.bf16.mxu0 0
    %2606 = vmatpush1.bf16.xpose.msra.mxu0 0
    %2607 = vmatprep.subr.bf16.mxu0 0
    %2608 = vmatpush1.bf16.xpose.msra.mxu0 0
    %2609 = vmatprep.subr.bf16.mxu0 0
    %2610 = vmatpush1.bf16.xpose.msra.mxu0 0
    %2611 = vmatprep.subr.bf16.mxu0 0
    %2612 = vmatpush1.bf16.xpose.msra.mxu0 0
    %2613 = vmatprep.subr.bf16.mxu0 0
    %2614 = vmatpush1.bf16.xpose.msra.mxu0 0
    %2615 = vmatprep.subr.bf16.mxu0 0
    %2616 = vmatpush1.bf16.xpose.msra.mxu0 0
    %2617 = vmatprep.subr.bf16.mxu0 0
    %2618 = vmatpush1.bf16.xpose.msra.mxu0 0
    %2619 = vmatprep.subr.bf16.mxu0 0
    %2620 = vmatpush1.bf16.xpose.msra.mxu0 0
    %2621 = vmatprep.subr.bf16.mxu0 0
    %2622 = vmatpush1.bf16.xpose.msra.mxu0 0
    %2623 = vmatprep.mubr.bf16.mxu0 0
    %2624 = vmatmul.mubr.bf16.gmra.mrb[0].mxu0 %v2547
    %v2625 = vpop.f32.mrb[0].mxu0
    %v2626 = vadd.f32 0.0, %v2625
    %v2627 = vpop.f32.mrb[0].mxu0
    %v2628 = vpop.f32.mrb[0].mxu0
    %v2629 = vadd.f32 0.0, %v2628
    %v2630 = vpop.f32.mrb[0].mxu0
    %2631 = vdwg.mxu0
    %v2632 = vmul.f32 %v2585, 0.25
    %v2633 = vmul.f32 %v2588, 0.25
    %v2634 = vmul.f32 %v2626, 0.25
    %v2635 = vmul.f32 %v2629, 0.25
    %v2636 = vsel %vm891, %v2632, -inf
    %2637 = vmax.xlane.f32.xlu0 %v2636
    %v2638 = vpop.xlane.xlu0 %2637
    %v2639 = vsel %vm891, %v2633, -inf
    %2640 = vmax.xlane.f32.xlu0 %v2639
    %v2641 = vpop.xlane.xlu0 %2640
    %v2642 = vsel %vm891, %v2634, -inf
    %2643 = vmax.xlane.f32.xlu0 %v2642
    %v2644 = vpop.xlane.xlu0 %2643
    %v2645 = vsel %vm891, %v2635, -inf
    %2646 = vmax.xlane.f32.xlu0 %v2645
    %v2647 = vpop.xlane.xlu0 %2646
    %v2648 = vsub.f32 %v2632, %v2638
    %v2649 = vsub.f32 %v2633, %v2641
    %v2650 = vsub.f32 %v2634, %v2644
    %v2651 = vsub.f32 %v2635, %v2647
    %v2652 = vmul.f32 %v2648, 1.442695
    %v2653 = vpow.pop %v2652
    %v2654 = vmul.f32 %v2649, 1.442695
    %v2655 = vpow.pop %v2654
    %v2656 = vmul.f32 %v2650, 1.442695
    %v2657 = vpow.pop %v2656
    %v2658 = vmul.f32 %v2651, 1.442695
    %v2659 = vpow.pop %v2658
    %v2660 = vsel %vm891, %v2653, 0.0
    %2661 = vadd.xlane.f32.xlu0 %v2660
    %v2662 = vpop.xlane.xlu0 %2661
    %v2663 = vsel %vm891, %v2655, 0.0
    %2664 = vadd.xlane.f32.xlu0 %v2663
    %v2665 = vpop.xlane.xlu0 %2664
    %v2666 = vsel %vm891, %v2657, 0.0
    %2667 = vadd.xlane.f32.xlu0 %v2666
    %v2668 = vpop.xlane.xlu0 %2667
    %v2669 = vsel %vm891, %v2659, 0.0
    %2670 = vadd.xlane.f32.xlu0 %v2669
    %v2671 = vpop.xlane.xlu0 %2670
    %v2672 = vrcp.pop %v2662
    %v2673 = vmul.f32 %v2653, %v2672
    %v2674 = vrcp.pop %v2665
    %v2675 = vmul.f32 %v2655, %v2674
    %v2676 = vrcp.pop %v2668
    %v2677 = vmul.f32 %v2657, %v2676
    %v2678 = vrcp.pop %v2671
    %v2679 = vmul.f32 %v2659, %v2678
    %v2680 = vpack.c.bf16 %v2675, %v2673
    %v2681 = vpack.c.bf16 %v2679, %v2677
    %v2682 = vpack.c.bf16 %v2308, %v2304
    %v2683 = vpack.c.bf16 %v2318, %v2314
    %v2685 = vsel %vm891, %v2680, 0
    %2687 = vmatprep.subr.bf16.mxu0 0
    %2688 = vmatpush1.bf16.msra.mxu0 %v2682
    %2689 = vmatprep.subr.bf16.mxu0 0
    %2690 = vmatpush1.bf16.msra.mxu0 0
    %2691 = vmatprep.subr.bf16.mxu0 0
    %2692 = vmatpush1.bf16.msra.mxu0 0
    %2693 = vmatprep.subr.bf16.mxu0 0
    %2694 = vmatpush1.bf16.msra.mxu0 0
    %2695 = vmatprep.subr.bf16.mxu0 0
    %2696 = vmatpush1.bf16.msra.mxu0 0
    %2697 = vmatprep.subr.bf16.mxu0 0
    %2698 = vmatpush1.bf16.msra.mxu0 0
    %2699 = vmatprep.subr.bf16.mxu0 0
    %2700 = vmatpush1.bf16.msra.mxu0 0
    %2701 = vmatprep.subr.bf16.mxu0 0
    %2702 = vmatpush1.bf16.msra.mxu0 0
    %2703 = vmatprep.subr.bf16.mxu0 0
    %2704 = vmatpush1.bf16.msra.mxu0 0
    %2705 = vmatprep.subr.bf16.mxu0 0
    %2706 = vmatpush1.bf16.msra.mxu0 0
    %2707 = vmatprep.subr.bf16.mxu0 0
    %2708 = vmatpush1.bf16.msra.mxu0 0
    %2709 = vmatprep.subr.bf16.mxu0 0
    %2710 = vmatpush1.bf16.msra.mxu0 0
    %2711 = vmatprep.subr.bf16.mxu0 0
    %2712 = vmatpush1.bf16.msra.mxu0 0
    %2713 = vmatprep.subr.bf16.mxu0 0
    %2714 = vmatpush1.bf16.msra.mxu0 0
    %2715 = vmatprep.subr.bf16.mxu0 0
    %2716 = vmatpush1.bf16.msra.mxu0 0
    %2717 = vmatprep.subr.bf16.mxu0 0
    %2718 = vmatpush1.bf16.msra.mxu0 0
    %2719 = vmatprep.mubr.bf16.mxu0 0
    %2720 = vmatmul.mubr.bf16.gmra.mrb[0].mxu0 %v2685
    %v2721 = vpop.f32.mrb[0].mxu0
    %v2722 = vadd.f32 0.0, %v2721
    %v2723 = vpop.f32.mrb[0].mxu0
    %v2724 = vpop.f32.mrb[0].mxu0
    %v2725 = vadd.f32 0.0, %v2724
    %v2726 = vpop.f32.mrb[0].mxu0
    %2727 = vdwg.mxu0
    %v2729 = vsel %vm891, %v2681, 0
    %2731 = vmatprep.subr.bf16.mxu0 0
    %2732 = vmatpush1.bf16.msra.mxu0 %v2683
    %2733 = vmatprep.subr.bf16.mxu0 0
    %2734 = vmatpush1.bf16.msra.mxu0 0
    %2735 = vmatprep.subr.bf16.mxu0 0
    %2736 = vmatpush1.bf16.msra.mxu0 0
    %2737 = vmatprep.subr.bf16.mxu0 0
    %2738 = vmatpush1.bf16.msra.mxu0 0
    %2739 = vmatprep.subr.bf16.mxu0 0
    %2740 = vmatpush1.bf16.msra.mxu0 0
    %2741 = vmatprep.subr.bf16.mxu0 0
    %2742 = vmatpush1.bf16.msra.mxu0 0
    %2743 = vmatprep.subr.bf16.mxu0 0
    %2744 = vmatpush1.bf16.msra.mxu0 0
    %2745 = vmatprep.subr.bf16.mxu0 0
    %2746 = vmatpush1.bf16.msra.mxu0 0
    %2747 = vmatprep.subr.bf16.mxu0 0
    %2748 = vmatpush1.bf16.msra.mxu0 0
    %2749 = vmatprep.subr.bf16.mxu0 0
    %2750 = vmatpush1.bf16.msra.mxu0 0
    %2751 = vmatprep.subr.bf16.mxu0 0
    %2752 = vmatpush1.bf16.msra.mxu0 0
    %2753 = vmatprep.subr.bf16.mxu0 0
    %2754 = vmatpush1.bf16.msra.mxu0 0
    %2755 = vmatprep.subr.bf16.mxu0 0
    %2756 = vmatpush1.bf16.msra.mxu0 0
    %2757 = vmatprep.subr.bf16.mxu0 0
    %2758 = vmatpush1.bf16.msra.mxu0 0
    %2759 = vmatprep.subr.bf16.mxu0 0
    %2760 = vmatpush1.bf16.msra.mxu0 0
    %2761 = vmatprep.subr.bf16.mxu0 0
    %2762 = vmatpush1.bf16.msra.mxu0 0
    %2763 = vmatprep.mubr.bf16.mxu0 0
    %2764 = vmatmul.mubr.bf16.gmra.mrb[0].mxu0 %v2729
    %v2765 = vpop.f32.mrb[0].mxu0
    %v2766 = vadd.f32 0.0, %v2765
    %v2767 = vpop.f32.mrb[0].mxu0
    %v2768 = vpop.f32.mrb[0].mxu0
    %v2769 = vadd.f32 0.0, %v2768
    %v2770 = vpop.f32.mrb[0].mxu0
    %2771 = vdwg.mxu0
    %s2772 = scalar_lea.vmem [#allocation5], 128
    %v2773 = vld [vmem:[%s2772] sm:$0xf]
    %v2774 = vld [vmem:[%s2772 + $0x4] sm:$0xf]
    %v2775 = vld [vmem:[%s2772 + $0x8] sm:$0xf]
    %v2776 = vld [vmem:[%s2772 + $0xc] sm:$0xf]
    %v2777 = vld [vmem:[%s2772 + $0x10] sm:$0xf]
    %v2778 = vld [vmem:[%s2772 + $0x14] sm:$0xf]
    %v2779 = vld [vmem:[%s2772 + $0x18] sm:$0xf]
    %v2780 = vld [vmem:[%s2772 + $0x1c] sm:$0xf]
    %v2781 = vld [vmem:[%s2772 + $0x20] sm:$0xf]
    %v2782 = vld [vmem:[%s2772 + $0x24] sm:$0xf]
    %v2783 = vld [vmem:[%s2772 + $0x28] sm:$0xf]
    %v2784 = vld [vmem:[%s2772 + $0x2c] sm:$0xf]
    %v2785 = vld [vmem:[%s2772 + $0x30] sm:$0xf]
    %v2786 = vld [vmem:[%s2772 + $0x34] sm:$0xf]
    %v2787 = vld [vmem:[%s2772 + $0x38] sm:$0xf]
    %v2788 = vld [vmem:[%s2772 + $0x3c] sm:$0xf]
    %v2789 = vld [vmem:[%s2772 + $0x40] sm:$0xf]
    %v2790 = vld [vmem:[%s2772 + $0x44] sm:$0xf]
    %v2791 = vld [vmem:[%s2772 + $0x48] sm:$0xf]
    %v2792 = vld [vmem:[%s2772 + $0x4c] sm:$0xf]
    %v2793 = vld [vmem:[%s2772 + $0x50] sm:$0xf]
    %v2794 = vld [vmem:[%s2772 + $0x54] sm:$0xf]
    %v2795 = vld [vmem:[%s2772 + $0x58] sm:$0xf]
    %v2796 = vld [vmem:[%s2772 + $0x5c] sm:$0xf]
    %v2797 = vld [vmem:[%s2772 + $0x60] sm:$0xf]
    %v2798 = vld [vmem:[%s2772 + $0x64] sm:$0xf]
    %v2799 = vld [vmem:[%s2772 + $0x68] sm:$0xf]
    %v2800 = vld [vmem:[%s2772 + $0x6c] sm:$0xf]
    %v2801 = vld [vmem:[%s2772 + $0x70] sm:$0xf]
    %v2802 = vld [vmem:[%s2772 + $0x74] sm:$0xf]
    %v2803 = vld [vmem:[%s2772 + $0x78] sm:$0xf]
    %v2804 = vld [vmem:[%s2772 + $0x7c] sm:$0xf]
    %v2805 = vpack.c.bf16 %v2499, %v2496
    %v2806 = vpack.c.bf16 %v2725, %v2722
    %v2807 = vpack.c.bf16 %v2543, %v2540
    %v2808 = vpack.c.bf16 %v2769, %v2766
    %v2841 = vunpack.c.l.b16 %v2773
    %v2842 = vunpack.c.l.b16 %v2774
    %v2843 = vunpack.c.l.b16 %v2775
    %v2844 = vunpack.c.l.b16 %v2776
    %v2845 = vunpack.c.l.b16 %v2777
    %v2846 = vunpack.c.l.b16 %v2778
    %v2847 = vunpack.c.l.b16 %v2779
    %v2848 = vunpack.c.l.b16 %v2780
    %v2849 = vunpack.c.l.b16 %v2781
    %v2850 = vunpack.c.l.b16 %v2782
    %v2851 = vunpack.c.l.b16 %v2783
    %v2852 = vunpack.c.l.b16 %v2784
    %v2853 = vunpack.c.l.b16 %v2785
    %v2854 = vunpack.c.l.b16 %v2786
    %v2855 = vunpack.c.l.b16 %v2787
    %v2856 = vunpack.c.l.b16 %v2788
    %v2857 = vunpack.c.l.b16 %v2789
    %v2858 = vunpack.c.l.b16 %v2790
    %v2859 = vunpack.c.l.b16 %v2791
    %v2860 = vunpack.c.l.b16 %v2792
    %v2861 = vunpack.c.l.b16 %v2793
    %v2862 = vunpack.c.l.b16 %v2794
    %v2863 = vunpack.c.l.b16 %v2795
    %v2864 = vunpack.c.l.b16 %v2796
    %v2865 = vunpack.c.l.b16 %v2797
    %v2866 = vunpack.c.l.b16 %v2798
    %v2867 = vunpack.c.l.b16 %v2799
    %v2868 = vunpack.c.l.b16 %v2800
    %v2869 = vunpack.c.l.b16 %v2801
    %v2870 = vunpack.c.l.b16 %v2802
    %v2871 = vunpack.c.l.b16 %v2803
    %v2872 = vunpack.c.l.b16 %v2804
    %v2873 = vpack.c.b16 %v2842, %v2841
    %v2874 = vpack.c.b16 %v2844, %v2843
    %v2875 = vpack.c.b16 %v2846, %v2845
    %v2876 = vpack.c.b16 %v2848, %v2847
    %v2877 = vpack.c.b16 %v2850, %v2849
    %v2878 = vpack.c.b16 %v2852, %v2851
    %v2879 = vpack.c.b16 %v2854, %v2853
    %v2880 = vpack.c.b16 %v2856, %v2855
    %v2881 = vpack.c.b16 %v2858, %v2857
    %v2882 = vpack.c.b16 %v2860, %v2859
    %v2883 = vpack.c.b16 %v2862, %v2861
    %v2884 = vpack.c.b16 %v2864, %v2863
    %v2885 = vpack.c.b16 %v2866, %v2865
    %v2886 = vpack.c.b16 %v2868, %v2867
    %v2887 = vpack.c.b16 %v2870, %v2869
    %v2888 = vpack.c.b16 %v2872, %v2871
    %2905 = vmatprep.subr.bf16.mxu0 0
    %2906 = vmatpush1.bf16.msra.mxu0 %v2873
    %2907 = vmatprep.subr.bf16.mxu0 0
    %2908 = vmatpush1.bf16.msra.mxu0 %v2874
    %2909 = vmatprep.subr.bf16.mxu0 0
    %2910 = vmatpush1.bf16.msra.mxu0 %v2875
    %2911 = vmatprep.subr.bf16.mxu0 0
    %2912 = vmatpush1.bf16.msra.mxu0 %v2876
    %2913 = vmatprep.subr.bf16.mxu0 0
    %2914 = vmatpush1.bf16.msra.mxu0 %v2877
    %2915 = vmatprep.subr.bf16.mxu0 0
    %2916 = vmatpush1.bf16.msra.mxu0 %v2878
    %2917 = vmatprep.subr.bf16.mxu0 0
    %2918 = vmatpush1.bf16.msra.mxu0 %v2879
    %2919 = vmatprep.subr.bf16.mxu0 0
    %2920 = vmatpush1.bf16.msra.mxu0 %v2880
    %2921 = vmatprep.subr.bf16.mxu0 0
    %2922 = vmatpush1.bf16.msra.mxu0 %v2881
    %2923 = vmatprep.subr.bf16.mxu0 0
    %2924 = vmatpush1.bf16.msra.mxu0 %v2882
    %2925 = vmatprep.subr.bf16.mxu0 0
    %2926 = vmatpush1.bf16.msra.mxu0 %v2883
    %2927 = vmatprep.subr.bf16.mxu0 0
    %2928 = vmatpush1.bf16.msra.mxu0 %v2884
    %2929 = vmatprep.subr.bf16.mxu0 0
    %2930 = vmatpush1.bf16.msra.mxu0 %v2885
    %2931 = vmatprep.subr.bf16.mxu0 0
    %2932 = vmatpush1.bf16.msra.mxu0 %v2886
    %2933 = vmatprep.subr.bf16.mxu0 0
    %2934 = vmatpush1.bf16.msra.mxu0 %v2887
    %2935 = vmatprep.subr.bf16.mxu0 0
    %2936 = vmatpush1.bf16.msra.mxu0 %v2888
    %2937 = vmatprep.mubr.bf16.mxu0 %v2806
    %2938 = vmatmul.mubr.bf16.gmra.mrb[0].mxu0 %v2805
    %v2939 = vpop.f32.mrb[0].mxu0
    %v2940 = vadd.f32 0.0, %v2939
    %v2941 = vpop.f32.mrb[0].mxu0
    %v2942 = vpop.f32.mrb[0].mxu0
    %v2943 = vadd.f32 0.0, %v2942
    %v2944 = vpop.f32.mrb[0].mxu0
    %2945 = vmatprep.mubr.bf16.mxu0 %v2808
    %2946 = vmatmul.mubr.bf16.gmra.mrb[0].mxu0 %v2807
    %v2947 = vpop.f32.mrb[0].mxu0
    %v2948 = vadd.f32 0.0, %v2947
    %v2949 = vpop.f32.mrb[0].mxu0
    %v2950 = vpop.f32.mrb[0].mxu0
    %v2951 = vadd.f32 0.0, %v2950
    %v2952 = vpop.f32.mrb[0].mxu0
    %2953 = vdwg.mxu0
    %v2954 = vadd.f32 %v1767, %v2940
    %v2955 = vadd.f32 %v1768, %v2943
    %v2956 = vadd.f32 %v1769, %v2948
    %v2957 = vadd.f32 %v1770, %v2951
    %s2958 = scalar_lea.vmem %s7, 1
    %v2959 = vld [vmem:[%s2958] sm:$0x1]
    %v2961 = vlaneseq
    %v2962 = vshrl.u32 %v2961, 7
    %v2963 = vsub.s32 0, %v2962
    %v2964 = vrot.slane %v2959, %v2963
    %v2966 = vadd.f32 %v2954, %v2964
    %v2967 = vadd.f32 %v2955, %v2964
    %v2968 = vadd.f32 %v2956, %v2964
    %v2969 = vadd.f32 %v2957, %v2964
    %s2970 = scalar_lea.vmem %s8, 2
    %v2971 = vld [vmem:[%s2970] sm:$0x3]
    %2972 = vadd.xlane.f32.xlu0 %v2966
    %v2973 = vpop.xlane.xlu0 %2972
    %2974 = vadd.xlane.f32.xlu0 %v2967
    %v2975 = vpop.xlane.xlu0 %2974
    %2976 = vadd.xlane.f32.xlu0 %v2968
    %v2977 = vpop.xlane.xlu0 %2976
    %2978 = vadd.xlane.f32.xlu0 %v2969
    %v2979 = vpop.xlane.xlu0 %2978
    %v2980 = vmul.f32 %v2973, 0.03125
    %v2981 = vmul.f32 %v2975, 0.03125
    %v2982 = vmul.f32 %v2977, 0.03125
    %v2983 = vmul.f32 %v2979, 0.03125
    %v2984 = vsub.f32 %v2966, %v2980
    %v2985 = vsub.f32 %v2967, %v2981
    %v2986 = vsub.f32 %v2968, %v2982
    %v2987 = vsub.f32 %v2969, %v2983
    %v2988 = vmul.f32 %v2984, %v2984
    %v2989 = vmul.f32 %v2985, %v2985
    %v2990 = vmul.f32 %v2986, %v2986
    %v2991 = vmul.f32 %v2987, %v2987
    %v2992 = vmul.f32 %v2988, %v114
    %v2993 = vmul.f32 %v2989, %v114
    %v2994 = vmul.f32 %v2990, %v114
    %v2995 = vmul.f32 %v2991, %v114
    %2996 = vadd.xlane.f32.xlu0 %v2992
    %v2997 = vpop.xlane.xlu0 %2996
    %2998 = vadd.xlane.f32.xlu0 %v2993
    %v2999 = vpop.xlane.xlu0 %2998
    %3000 = vadd.xlane.f32.xlu0 %v2994
    %v3001 = vpop.xlane.xlu0 %3000
    %3002 = vadd.xlane.f32.xlu0 %v2995
    %v3003 = vpop.xlane.xlu0 %3002
    %v3004 = vmul.f32 %v2997, 0.03125
    %v3005 = vmul.f32 %v2999, 0.03125
    %v3006 = vmul.f32 %v3001, 0.03125
    %v3007 = vmul.f32 %v3003, 0.03125
    %v3008 = vadd.f32 %v3004, 1e-05
    %v3009 = vadd.f32 %v3005, 1e-05
    %v3010 = vadd.f32 %v3006, 1e-05
    %v3011 = vadd.f32 %v3007, 1e-05
    %v3012 = vrsqrt.pop %v3008
    %v3013 = vrsqrt.pop %v3009
    %v3014 = vrsqrt.pop %v3010
    %v3015 = vrsqrt.pop %v3011
    %v3016 = vmul.f32 %v2984, %v3012
    %v3017 = vmul.f32 %v2985, %v3013
    %v3018 = vmul.f32 %v2986, %v3014
    %v3019 = vmul.f32 %v2987, %v3015
    %v3020 = vlaneseq
    %v3021 = vshrl.u32 %v3020, 7
    %v3022 = vsub.s32 0, %v3021
    %v3023 = vrot.slane %v2971, %v3022
    %v3024 = vmul.f32 %v3016, %v3023
    %v3025 = vmul.f32 %v3017, %v3023
    %v3026 = vmul.f32 %v3018, %v3023
    %v3027 = vmul.f32 %v3019, %v3023
    %v3028 = vlaneseq
    %v3029 = vshrl.u32 %v3028, 7
    %v3030 = vsub.s32 1, %v3029
    %v3031 = vrot.slane %v2971, %v3030
    %v3032 = vadd.f32 %v3024, %v3031
    %v3033 = vadd.f32 %v3025, %v3031
    %v3034 = vadd.f32 %v3026, %v3031
    %v3035 = vadd.f32 %v3027, %v3031
    %s3036 = scalar_lea.vmem %s9, 64
    %v3037 = vld [vmem:[%s3036] sm:$0xf]
    %v3038 = vld [vmem:[%s3036 + $0x4] sm:$0xf]
    %v3039 = vld [vmem:[%s3036 + $0x8] sm:$0xf]
    %v3040 = vld [vmem:[%s3036 + $0xc] sm:$0xf]
    %v3041 = vld [vmem:[%s3036 + $0x10] sm:$0xf]
    %v3042 = vld [vmem:[%s3036 + $0x14] sm:$0xf]
    %v3043 = vld [vmem:[%s3036 + $0x18] sm:$0xf]
    %v3044 = vld [vmem:[%s3036 + $0x1c] sm:$0xf]
    %v3045 = vld [vmem:[%s3036 + $0x20] sm:$0xf]
    %v3046 = vld [vmem:[%s3036 + $0x24] sm:$0xf]
    %v3047 = vld [vmem:[%s3036 + $0x28] sm:$0xf]
    %v3048 = vld [vmem:[%s3036 + $0x2c] sm:$0xf]
    %v3049 = vld [vmem:[%s3036 + $0x30] sm:$0xf]
    %v3050 = vld [vmem:[%s3036 + $0x34] sm:$0xf]
    %v3051 = vld [vmem:[%s3036 + $0x38] sm:$0xf]
    %v3052 = vld [vmem:[%s3036 + $0x3c] sm:$0xf]
    %v3053 = vpack.c.bf16 %v3033, %v3032
    %v3054 = vpack.c.bf16 %v3035, %v3034
    %s3055 = scalar_lea.vmem %s10, 1
    %v3056 = vld [vmem:[%s3055] sm:$0x1]
    %v3058 = vlaneseq
    %v3059 = vshrl.u32 %v3058, 7
    %v3060 = vsub.s32 0, %v3059
    %v3061 = vrot.slane %v3056, %v3060
    %v3079 = vunpack.c.l.b16 %v3037
    %v3080 = vunpack.c.l.b16 %v3038
    %v3081 = vunpack.c.l.b16 %v3039
    %v3082 = vunpack.c.l.b16 %v3040
    %v3083 = vunpack.c.l.b16 %v3041
    %v3084 = vunpack.c.l.b16 %v3042
    %v3085 = vunpack.c.l.b16 %v3043
    %v3086 = vunpack.c.l.b16 %v3044
    %v3087 = vunpack.c.l.b16 %v3045
    %v3088 = vunpack.c.l.b16 %v3046
    %v3089 = vunpack.c.l.b16 %v3047
    %v3090 = vunpack.c.l.b16 %v3048
    %v3091 = vunpack.c.l.b16 %v3049
    %v3092 = vunpack.c.l.b16 %v3050
    %v3093 = vunpack.c.l.b16 %v3051
    %v3094 = vunpack.c.l.b16 %v3052
    %v3095 = vpack.c.b16 %v3080, %v3079
    %v3096 = vpack.c.b16 %v3082, %v3081
    %v3097 = vpack.c.b16 %v3084, %v3083
    %v3098 = vpack.c.b16 %v3086, %v3085
    %v3099 = vpack.c.b16 %v3088, %v3087
    %v3100 = vpack.c.b16 %v3090, %v3089
    %v3101 = vpack.c.b16 %v3092, %v3091
    %v3102 = vpack.c.b16 %v3094, %v3093
    %3111 = vmatprep.subr.bf16.mxu0 0
    %3112 = vmatpush1.bf16.msra.mxu0 %v3095
    %3113 = vmatprep.subr.bf16.mxu0 0
    %3114 = vmatpush1.bf16.msra.mxu0 %v3096
    %3115 = vmatprep.subr.bf16.mxu0 0
    %3116 = vmatpush1.bf16.msra.mxu0 %v3097
    %3117 = vmatprep.subr.bf16.mxu0 0
    %3118 = vmatpush1.bf16.msra.mxu0 %v3098
    %3119 = vmatprep.subr.bf16.mxu0 0
    %3120 = vmatpush1.bf16.msra.mxu0 %v3099
    %3121 = vmatprep.subr.bf16.mxu0 0
    %3122 = vmatpush1.bf16.msra.mxu0 %v3100
    %3123 = vmatprep.subr.bf16.mxu0 0
    %3124 = vmatpush1.bf16.msra.mxu0 %v3101
    %3125 = vmatprep.subr.bf16.mxu0 0
    %3126 = vmatpush1.bf16.msra.mxu0 %v3102
    %3127 = vmatprep.subr.bf16.mxu0 0
    %3128 = vmatpush1.bf16.msra.mxu0 0
    %3129 = vmatprep.subr.bf16.mxu0 0
    %3130 = vmatpush1.bf16.msra.mxu0 0
    %3131 = vmatprep.subr.bf16.mxu0 0
    %3132 = vmatpush1.bf16.msra.mxu0 0
    %3133 = vmatprep.subr.bf16.mxu0 0
    %3134 = vmatpush1.bf16.msra.mxu0 0
    %3135 = vmatprep.subr.bf16.mxu0 0
    %3136 = vmatpush1.bf16.msra.mxu0 0
    %3137 = vmatprep.subr.bf16.mxu0 0
    %3138 = vmatpush1.bf16.msra.mxu0 0
    %3139 = vmatprep.subr.bf16.mxu0 0
    %3140 = vmatpush1.bf16.msra.mxu0 0
    %3141 = vmatprep.subr.bf16.mxu0 0
    %3142 = vmatpush1.bf16.msra.mxu0 0
    %3143 = vmatprep.mubr.bf16.mxu0 0
    %3144 = vmatmul.mubr.bf16.gmra.mrb[0].mxu0 %v3053
    %v3145 = vpop.f32.mrb[0].mxu0
    %v3146 = vadd.f32 %v3061, %v3145
    %v3147 = vpop.f32.mrb[0].mxu0
    %v3148 = vpop.f32.mrb[0].mxu0
    %v3149 = vadd.f32 %v3061, %v3148
    %v3150 = vpop.f32.mrb[0].mxu0
    %3151 = vmatprep.mubr.bf16.mxu0 0
    %3152 = vmatmul.mubr.bf16.gmra.mrb[0].mxu0 %v3054
    %v3153 = vpop.f32.mrb[0].mxu0
    %v3154 = vadd.f32 %v3061, %v3153
    %v3155 = vpop.f32.mrb[0].mxu0
    %v3156 = vpop.f32.mrb[0].mxu0
    %v3157 = vadd.f32 %v3061, %v3156
    %v3158 = vpop.f32.mrb[0].mxu0
    %3159 = vdwg.mxu0
    %v3160 = vmax.f32 %v3146, 0.0
    %v3161 = vmax.f32 %v3149, 0.0
    %v3162 = vmax.f32 %v3154, 0.0
    %v3163 = vmax.f32 %v3157, 0.0
    %s3164 = scalar_lea.vmem [#allocation7], 64
    %v3165 = vld [vmem:[%s3164] sm:$0xf]
    %v3166 = vld [vmem:[%s3164 + $0x4] sm:$0xf]
    %v3167 = vld [vmem:[%s3164 + $0x8] sm:$0xf]
    %v3168 = vld [vmem:[%s3164 + $0xc] sm:$0xf]
    %v3169 = vld [vmem:[%s3164 + $0x10] sm:$0xf]
    %v3170 = vld [vmem:[%s3164 + $0x14] sm:$0xf]
    %v3171 = vld [vmem:[%s3164 + $0x18] sm:$0xf]
    %v3172 = vld [vmem:[%s3164 + $0x1c] sm:$0xf]
    %v3173 = vld [vmem:[%s3164 + $0x20] sm:$0xf]
    %v3174 = vld [vmem:[%s3164 + $0x24] sm:$0xf]
    %v3175 = vld [vmem:[%s3164 + $0x28] sm:$0xf]
    %v3176 = vld [vmem:[%s3164 + $0x2c] sm:$0xf]
    %v3177 = vld [vmem:[%s3164 + $0x30] sm:$0xf]
    %v3178 = vld [vmem:[%s3164 + $0x34] sm:$0xf]
    %v3179 = vld [vmem:[%s3164 + $0x38] sm:$0xf]
    %v3180 = vld [vmem:[%s3164 + $0x3c] sm:$0xf]
    %v3181 = vpack.c.bf16 %v3161, %v3160
    %v3182 = vpack.c.bf16 %v3163, %v3162
    %v3199 = vunpack.c.l.b16 %v3165
    %v3200 = vunpack.c.l.b16 %v3166
    %v3201 = vunpack.c.l.b16 %v3167
    %v3202 = vunpack.c.l.b16 %v3168
    %v3203 = vunpack.c.l.b16 %v3169
    %v3204 = vunpack.c.l.b16 %v3170
    %v3205 = vunpack.c.l.b16 %v3171
    %v3206 = vunpack.c.l.b16 %v3172
    %v3207 = vunpack.c.l.b16 %v3173
    %v3208 = vunpack.c.l.b16 %v3174
    %v3209 = vunpack.c.l.b16 %v3175
    %v3210 = vunpack.c.l.b16 %v3176
    %v3211 = vunpack.c.l.b16 %v3177
    %v3212 = vunpack.c.l.b16 %v3178
    %v3213 = vunpack.c.l.b16 %v3179
    %v3214 = vunpack.c.l.b16 %v3180
    %v3215 = vpack.c.b16 %v3200, %v3199
    %v3216 = vpack.c.b16 %v3202, %v3201
    %v3217 = vpack.c.b16 %v3204, %v3203
    %v3218 = vpack.c.b16 %v3206, %v3205
    %v3219 = vpack.c.b16 %v3208, %v3207
    %v3220 = vpack.c.b16 %v3210, %v3209
    %v3221 = vpack.c.b16 %v3212, %v3211
    %v3222 = vpack.c.b16 %v3214, %v3213
    %3231 = vmatprep.subr.bf16.mxu0 0
    %3232 = vmatpush1.bf16.msra.mxu0 %v3215
    %3233 = vmatprep.subr.bf16.mxu0 0
    %3234 = vmatpush1.bf16.msra.mxu0 %v3216
    %3235 = vmatprep.subr.bf16.mxu0 0
    %3236 = vmatpush1.bf16.msra.mxu0 %v3217
    %3237 = vmatprep.subr.bf16.mxu0 0
    %3238 = vmatpush1.bf16.msra.mxu0 %v3218
    %3239 = vmatprep.subr.bf16.mxu0 0
    %3240 = vmatpush1.bf16.msra.mxu0 %v3219
    %3241 = vmatprep.subr.bf16.mxu0 0
    %3242 = vmatpush1.bf16.msra.mxu0 %v3220
    %3243 = vmatprep.subr.bf16.mxu0 0
    %3244 = vmatpush1.bf16.msra.mxu0 %v3221
    %3245 = vmatprep.subr.bf16.mxu0 0
    %3246 = vmatpush1.bf16.msra.mxu0 %v3222
    %3247 = vmatprep.subr.bf16.mxu0 0
    %3248 = vmatpush1.bf16.msra.mxu0 0
    %3249 = vmatprep.subr.bf16.mxu0 0
    %3250 = vmatpush1.bf16.msra.mxu0 0
    %3251 = vmatprep.subr.bf16.mxu0 0
    %3252 = vmatpush1.bf16.msra.mxu0 0
    %3253 = vmatprep.subr.bf16.mxu0 0
    %3254 = vmatpush1.bf16.msra.mxu0 0
    %3255 = vmatprep.subr.bf16.mxu0 0
    %3256 = vmatpush1.bf16.msra.mxu0 0
    %3257 = vmatprep.subr.bf16.mxu0 0
    %3258 = vmatpush1.bf16.msra.mxu0 0
    %3259 = vmatprep.subr.bf16.mxu0 0
    %3260 = vmatpush1.bf16.msra.mxu0 0
    %3261 = vmatprep.subr.bf16.mxu0 0
    %3262 = vmatpush1.bf16.msra.mxu0 0
    %3263 = vmatprep.mubr.bf16.mxu0 0
    %3264 = vmatmul.mubr.bf16.gmra.mrb[0].mxu0 %v3181
    %v3265 = vpop.f32.mrb[0].mxu0
    %v3266 = vadd.f32 0.0, %v3265
    %v3267 = vpop.f32.mrb[0].mxu0
    %v3268 = vpop.f32.mrb[0].mxu0
    %v3269 = vadd.f32 0.0, %v3268
    %v3270 = vpop.f32.mrb[0].mxu0
    %3271 = vmatprep.mubr.bf16.mxu0 0
    %3272 = vmatmul.mubr.bf16.gmra.mrb[0].mxu0 %v3182
    %v3273 = vpop.f32.mrb[0].mxu0
    %v3274 = vadd.f32 0.0, %v3273
    %v3275 = vpop.f32.mrb[0].mxu0
    %v3276 = vpop.f32.mrb[0].mxu0
    %v3277 = vadd.f32 0.0, %v3276
    %v3278 = vpop.f32.mrb[0].mxu0
    %3279 = vdwg.mxu0
    %v3280 = vadd.f32 %v2966, %v3266
    %v3281 = vadd.f32 %v2967, %v3269
    %v3282 = vadd.f32 %v2968, %v3274
    %v3283 = vadd.f32 %v2969, %v3277
    %s3284 = scalar_lea.vmem %s12, 1
    %v3285 = vld [vmem:[%s3284] sm:$0x1]
    %v3287 = vlaneseq
    %v3288 = vshrl.u32 %v3287, 7
    %v3289 = vsub.s32 0, %v3288
    %v3290 = vrot.slane %v3285, %v3289
    %v3292 = vadd.f32 %v3280, %v3290
    %v3293 = vadd.f32 %v3281, %v3290
    %v3294 = vadd.f32 %v3282, %v3290
    %v3295 = vadd.f32 %v3283, %v3290
    %v3296 = vadd.f32 %v3292, %v3293
    %v3297 = vrot.slane %v3296, 4
    %v3298 = vadd.f32 %v3296, %v3297
    %v3299 = vrot.slane %v3298, 2
    %v3300 = vadd.f32 %v3298, %v3299
    %v3301 = vrot.slane %v3300, 1
    %v3302 = vadd.f32 %v3300, %v3301
    %v3303 = vadd.f32 %v3294, %v3295
    %v3304 = vrot.slane %v3303, 4
    %v3305 = vadd.f32 %v3303, %v3304
    %v3306 = vrot.slane %v3305, 2
    %v3307 = vadd.f32 %v3305, %v3306
    %v3308 = vrot.slane %v3307, 1
    %v3309 = vadd.f32 %v3307, %v3308
    %v3310 = vrcp.pop 16.0
    %v3311 = vmul.f32 %v3302, %v3310
    %v3312 = vmul.f32 %v3309, %v3310
    %vm3315 = vcmask 1041409
    %v3316 = vsel %vm3315, %v3312, %v3311
    %3318 = vst [vmem:[#allocation10] sm:$0x3] %v3316
    %v3319 = vld [vmem:[#allocation8] sm:$0xf]
    %v3320 = vld [vmem:[#allocation8 + $0x4] sm:$0xf]
    %v3321 = vld [vmem:[#allocation8 + $0x8] sm:$0xf]
    %v3322 = vld [vmem:[#allocation8 + $0xc] sm:$0xf]
    %v3323 = vld [vmem:[#allocation8 + $0x10] sm:$0xf]
    %v3324 = vld [vmem:[#allocation8 + $0x14] sm:$0xf]
    %v3325 = vld [vmem:[#allocation8 + $0x18] sm:$0xf]
    %v3326 = vld [vmem:[#allocation8 + $0x1c] sm:$0xf]
    %v3327 = vld [vmem:[#allocation8 + $0x20] sm:$0xf]
    %v3328 = vld [vmem:[#allocation8 + $0x24] sm:$0xf]
    %v3329 = vld [vmem:[#allocation8 + $0x28] sm:$0xf]
    %v3330 = vld [vmem:[#allocation8 + $0x2c] sm:$0xf]
    %v3331 = vld [vmem:[#allocation8 + $0x30] sm:$0xf]
    %v3332 = vld [vmem:[#allocation8 + $0x34] sm:$0xf]
    %v3333 = vld [vmem:[#allocation8 + $0x38] sm:$0xf]
    %v3334 = vld [vmem:[#allocation8 + $0x3c] sm:$0xf]
    %v3335 = vpack.c.bf16 %v3311, %v3311
    %v3336 = vpack.c.bf16 %v3312, %v3312
    %v3337 = vld [vmem:[%s14] sm:$0x1]
    %v3339 = vlaneseq
    %v3340 = vshrl.u32 %v3339, 7
    %v3341 = vsub.s32 0, %v3340
    %v3342 = vrot.slane %v3337, %v3341
    %v3346 = vunpack.c.l.b16 %v3335
    %v3347 = vunpack.c.l.b16 %v3336
    %v3348 = vsel %vm3315, %v3347, %v3346
    %v3349 = vpack.c.b16 %v3348, %v3348
    %v3367 = vunpack.c.l.b16 %v3319
    %v3368 = vunpack.c.l.b16 %v3320
    %v3369 = vunpack.c.l.b16 %v3321
    %v3370 = vunpack.c.l.b16 %v3322
    %v3371 = vunpack.c.l.b16 %v3323
    %v3372 = vunpack.c.l.b16 %v3324
    %v3373 = vunpack.c.l.b16 %v3325
    %v3374 = vunpack.c.l.b16 %v3326
    %v3375 = vunpack.c.l.b16 %v3327
    %v3376 = vunpack.c.l.b16 %v3328
    %v3377 = vunpack.c.l.b16 %v3329
    %v3378 = vunpack.c.l.b16 %v3330
    %v3379 = vunpack.c.l.b16 %v3331
    %v3380 = vunpack.c.l.b16 %v3332
    %v3381 = vunpack.c.l.b16 %v3333
    %v3382 = vunpack.c.l.b16 %v3334
    %v3383 = vpack.c.b16 %v3368, %v3367
    %v3384 = vpack.c.b16 %v3370, %v3369
    %v3385 = vpack.c.b16 %v3372, %v3371
    %v3386 = vpack.c.b16 %v3374, %v3373
    %v3387 = vpack.c.b16 %v3376, %v3375
    %v3388 = vpack.c.b16 %v3378, %v3377
    %v3389 = vpack.c.b16 %v3380, %v3379
    %v3390 = vpack.c.b16 %v3382, %v3381
    %3399 = vmatprep.subr.bf16.mxu0 0
    %3400 = vmatpush1.bf16.msra.mxu0 %v3383
    %3401 = vmatprep.subr.bf16.mxu0 0
    %3402 = vmatpush1.bf16.msra.mxu0 %v3384
    %3403 = vmatprep.subr.bf16.mxu0 0
    %3404 = vmatpush1.bf16.msra.mxu0 %v3385
    %3405 = vmatprep.subr.bf16.mxu0 0
    %3406 = vmatpush1.bf16.msra.mxu0 %v3386
    %3407 = vmatprep.subr.bf16.mxu0 0
    %3408 = vmatpush1.bf16.msra.mxu0 %v3387
    %3409 = vmatprep.subr.bf16.mxu0 0
    %3410 = vmatpush1.bf16.msra.mxu0 %v3388
    %3411 = vmatprep.subr.bf16.mxu0 0
    %3412 = vmatpush1.bf16.msra.mxu0 %v3389
    %3413 = vmatprep.subr.bf16.mxu0 0
    %3414 = vmatpush1.bf16.msra.mxu0 %v3390
    %3415 = vmatprep.subr.bf16.mxu0 0
    %3416 = vmatpush1.bf16.msra.mxu0 0
    %3417 = vmatprep.subr.bf16.mxu0 0
    %3418 = vmatpush1.bf16.msra.mxu0 0
    %3419 = vmatprep.subr.bf16.mxu0 0
    %3420 = vmatpush1.bf16.msra.mxu0 0
    %3421 = vmatprep.subr.bf16.mxu0 0
    %3422 = vmatpush1.bf16.msra.mxu0 0
    %3423 = vmatprep.subr.bf16.mxu0 0
    %3424 = vmatpush1.bf16.msra.mxu0 0
    %3425 = vmatprep.subr.bf16.mxu0 0
    %3426 = vmatpush1.bf16.msra.mxu0 0
    %3427 = vmatprep.subr.bf16.mxu0 0
    %3428 = vmatpush1.bf16.msra.mxu0 0
    %3429 = vmatprep.subr.bf16.mxu0 0
    %3430 = vmatpush1.bf16.msra.mxu0 0
    %3431 = vmatprep.mubr.bf16.mxu0 0
    %3432 = vmatmul.mubr.bf16.gmra.mrb[0].mxu0 %v3349
    %v3433 = vpop.f32.mrb[0].mxu0
    %v3434 = vadd.f32 %v3342, %v3433
    %v3435 = vpop.f32.mrb[0].mxu0
    %v3436 = vpop.f32.mrb[0].mxu0
    %v3437 = vpop.f32.mrb[0].mxu0
    %3438 = vdwg.mxu0
    %3439 = vst [vmem:[#allocation11] sm:$0x3] %v3434
    // Predicated region
    $region78: #{network_forward.1} parent=1 // pred_check
      _
    $region79: #{network_forward.1} parent=1 // pred_check_branch
      %3441 = sbr.rel (0) target = $region81
    $region80: #{network_forward.1} parent=1 // pred_region
      %s3443 = ssub.s32 32, 32
      %3444 = vsyncadd [#allocation4], %s3443
      %s3446 = sshll.u32 [#allocation10], 4
      %s3447 = int_to_ptr.vmem [resolvable:$true] %s3446
      %3449 = dma.vmem_to_hbm [thread:$0]  %s3447, 32, %s15, [#allocation4]
    $region81: #{network_forward.1} parent=1 // pred_fallthru
      _
    // Predicated region
    $region82: #{network_forward.1} parent=1 // pred_check
      _
    $region83: #{network_forward.1} parent=1 // pred_check_branch
      %3451 = sbr.rel (0) target = $region85
    $region84: #{network_forward.1} parent=1 // pred_region
      %s3453 = ssub.s32 32, 32
      %3454 = vsyncadd [#allocation12], %s3453
      %s3456 = sshll.u32 [#allocation11], 4
      %s3457 = int_to_ptr.vmem [resolvable:$true] %s3456
      %3459 = dma.vmem_to_hbm [thread:$0]  %s3457, 32, %s16, [#allocation12]
    $region85: #{network_forward.1} parent=1 // pred_fallthru
      _
    // Predicated region
    $region86: #{network_forward.1} parent=1 // pred_check
      _
    $region87: #{network_forward.1} parent=1 // pred_check_branch
      %3461 = sbr.rel (0) target = $region89
    $region88: #{network_forward.1} parent=1 // pred_region
      %3462 = dma.done [#allocation4], 32
    $region89: #{network_forward.1} parent=1 // pred_fallthru
      _
    // Predicated region
    $region90: #{network_forward.1} parent=1 // pred_check
      _
    $region91: #{network_forward.1} parent=1 // pred_check_branch
      %3464 = sbr.rel (0) target = $region93
    $region92: #{network_forward.1} parent=1 // pred_region
      %3465 = dma.done [#allocation12], 32
    $region93: #{network_forward.1} parent=1 // pred_fallthru
      _
    %3466 = vsyncpa [#allocation3], 1
    %3467 = vsyncpa [#allocation6], 1
    %3468 = vsyncpa [#allocation9], 1
    %3469 = vsyncpa [#allocation4], 1
    %3470 = vsyncpa [#allocation12], 1

</llo_original>
